<compile_context>
chip_gen: v7x
topology: tpu7x:2x2x1
jax: 0.10.0
libtpu: 0.0.40
codegen_flags: <defaults>
</compile_context>

<pallas_src>
import math
from functools import partial

import jax
import jax.numpy as jnp
from jax import lax
from jax.experimental import pallas as pl
from jax.experimental.pallas import tpu as pltpu

NEG_INF = -1e9
LN_EPS = 1e-5


def _round_up(x, m):
    return (x + m - 1) // m * m


# ---------------------------------------------------------------------------
# Pallas kernels
# ---------------------------------------------------------------------------

def _linear_kernel(x_ref, w_ref, b_ref, o_ref, acc_ref, *, relu):
    """Tiled  out = x @ w + b  (optionally ReLU).  bf16 MXU, f32 accumulate."""
    @pl.when(pl.program_id(2) == 0)
    def _():
        acc_ref[...] = jnp.zeros_like(acc_ref)

    acc_ref[...] += jnp.dot(x_ref[...].astype(jnp.bfloat16), w_ref[...],
                            preferred_element_type=jnp.float32)

    @pl.when(pl.program_id(2) == pl.num_programs(2) - 1)
    def _():
        out = acc_ref[...] + b_ref[...]
        if relu:
            out = jnp.maximum(out, 0.0)
        o_ref[...] = out.astype(o_ref.dtype)


def _add_ln_kernel(x_ref, y_ref, g_ref, b_ref, o_ref):
    """out = LayerNorm(x + y) * gamma + beta   (residual add fused in)."""
    x = x_ref[...] + y_ref[...]
    mean = jnp.mean(x, axis=-1, keepdims=True)
    var = jnp.mean((x - mean) ** 2, axis=-1, keepdims=True)
    xn = (x - mean) * lax.rsqrt(var + LN_EPS)
    o_ref[...] = (xn * g_ref[...] + b_ref[...]).astype(o_ref.dtype)


def _ffn_kernel(x_ref, w1_ref, b1_ref, w2_ref, b2_ref, o_ref):
    """Fused FFN: out = relu(x@w1+b1)@w2 + b2, hidden stays in VMEM."""
    # TODO(synk): for very large E / 4E the weight operands should be K/N tiled
    #             instead of loaded as single resident blocks.
    x = x_ref[...].astype(jnp.bfloat16)
    h = jnp.dot(x, w1_ref[...], preferred_element_type=jnp.float32) + b1_ref[...]
    h = jnp.maximum(h, 0.0).astype(jnp.bfloat16)
    o = jnp.dot(h, w2_ref[...], preferred_element_type=jnp.float32) + b2_ref[...]
    o_ref[...] = o.astype(o_ref.dtype)


def _attn_core(q, k, v, kmask, o_ref, H, Dh, scale, causal):
    """q:(Sq,E) k,v:(Sk,E) f32; kmask:(1,Sk) additive.  Heads via static slices."""
    Sq, Sk = q.shape[0], k.shape[0]
    if causal:
        row = lax.broadcasted_iota(jnp.int32, (Sq, Sk), 0)
        col = lax.broadcasted_iota(jnp.int32, (Sq, Sk), 1)
        causal_add = jnp.where(col <= row, 0.0, NEG_INF).astype(jnp.float32)
    heads = []
    for h in range(H):
        sl = slice(h * Dh, (h + 1) * Dh)
        qh = q[:, sl].astype(jnp.bfloat16)
        kh = k[:, sl].astype(jnp.bfloat16)
        vh = v[:, sl].astype(jnp.bfloat16)
        s = lax.dot_general(qh, kh, (((1,), (1,)), ((), ())),
                            preferred_element_type=jnp.float32) * scale
        s = s + kmask                       # (Sq,Sk) + (1,Sk) broadcast
        if causal:
            s = s + causal_add
        s = s - jnp.max(s, axis=-1, keepdims=True)
        p = jnp.exp(s)
        inv = pl.reciprocal(jnp.sum(p, axis=-1, keepdims=True), approx=True)
        p = (p * inv).astype(jnp.bfloat16)
        heads.append(jnp.dot(p, vh, preferred_element_type=jnp.float32))
    # single lane-dense store of the full (Sq, E) tile
    o_ref[0] = jnp.concatenate(heads, axis=-1).astype(o_ref.dtype)


def _self_attn_kernel(qkv_ref, kmask_ref, o_ref, *, H, Dh, scale, causal):
    E = H * Dh
    qkv = qkv_ref[0]                        # (S, 3E)
    _attn_core(qkv[:, :E], qkv[:, E:2 * E], qkv[:, 2 * E:],
               kmask_ref[0], o_ref, H, Dh, scale, causal)


def _cross_attn_kernel(q_ref, kv_ref, kmask_ref, o_ref, *, H, Dh, scale):
    E = H * Dh
    kv = kv_ref[0]                          # (Sk, 2E)
    _attn_core(q_ref[0], kv[:, :E], kv[:, E:],
               kmask_ref[0], o_ref, H, Dh, scale, False)


# ---------------------------------------------------------------------------
# Pallas-backed ops (wrappers)
# ---------------------------------------------------------------------------

def linear(x2d, w, b, relu=False):
    """x2d:(M,K) f32, w:(K,N) bf16, b:(N,) f32 -> (M,N) f32. Tiled + pipelined."""
    M, K = x2d.shape
    N = w.shape[1]

    # M tiles (sublane axis)
    if M <= 256:
        tm, Mp = M, M
    else:
        tm, Mp = 256, _round_up(M, 256)
    # N padded to a 128 multiple -> lane-dense output stores
    Np = _round_up(N, 128)
    tn = 256 if (Np > 128 and Np % 256 == 0) else 128
    # K tiles
    if K <= 512:
        tk, Kp = K, K
    else:
        tk, Kp = 512, _round_up(K, 512)

    xp = x2d if (Mp == M and Kp == K) else jnp.pad(x2d, ((0, Mp - M), (0, Kp - K)))
    wp = w if (Kp == K and Np == N) else jnp.pad(w, ((0, Kp - K), (0, Np - N)))
    bp = (b if Np == N else jnp.pad(b, (0, Np - N))).reshape(1, Np)

    out = pl.pallas_call(
        partial(_linear_kernel, relu=relu),
        out_shape=jax.ShapeDtypeStruct((Mp, Np), jnp.float32),
        grid=(Mp // tm, Np // tn, Kp // tk),
        in_specs=[
            pl.BlockSpec((tm, tk), lambda i, j, k: (i, k)),
            pl.BlockSpec((tk, tn), lambda i, j, k: (k, j)),
            pl.BlockSpec((1, tn), lambda i, j, k: (0, j)),
        ],
        out_specs=pl.BlockSpec((tm, tn), lambda i, j, k: (i, j)),
        scratch_shapes=[pltpu.VMEM((tm, tn), jnp.float32)],
        compiler_params=pltpu.CompilerParams(
            dimension_semantics=("parallel", "parallel", "arbitrary")),
    )(xp, wp, bp)
    if Mp != M or Np != N:
        out = out[:M, :N]
    return out


def add_layernorm(x2d, y2d, gamma, beta):
    """LayerNorm(x + y) over last dim; residual add fused into the kernel."""
    M, E = x2d.shape
    if M <= 512:
        tm, Mp = M, M
    else:
        tm, Mp = 512, _round_up(M, 512)
    if Mp != M:
        x2d = jnp.pad(x2d, ((0, Mp - M), (0, 0)))
        y2d = jnp.pad(y2d, ((0, Mp - M), (0, 0)))
    out = pl.pallas_call(
        _add_ln_kernel,
        out_shape=jax.ShapeDtypeStruct((Mp, E), jnp.float32),
        grid=(Mp // tm,),
        in_specs=[
            pl.BlockSpec((tm, E), lambda i: (i, 0)),
            pl.BlockSpec((tm, E), lambda i: (i, 0)),
            pl.BlockSpec((1, E), lambda i: (0, 0)),
            pl.BlockSpec((1, E), lambda i: (0, 0)),
        ],
        out_specs=pl.BlockSpec((tm, E), lambda i: (i, 0)),
        compiler_params=pltpu.CompilerParams(dimension_semantics=("parallel",)),
    )(x2d, y2d, gamma.reshape(1, E), beta.reshape(1, E))
    return out if Mp == M else out[:M]


def ffn(x2d, w1, b1, w2, b2):
    """Fused feed-forward: relu(x@w1+b1)@w2+b2, hidden kept in VMEM."""
    M, E = x2d.shape
    F = w1.shape[1]
    if M <= 256:
        tm, Mp = M, M
    else:
        tm, Mp = 256, _round_up(M, 256)
    xp = x2d if Mp == M else jnp.pad(x2d, ((0, Mp - M), (0, 0)))
    out = pl.pallas_call(
        _ffn_kernel,
        out_shape=jax.ShapeDtypeStruct((Mp, E), jnp.float32),
        grid=(Mp // tm,),
        in_specs=[
            pl.BlockSpec((tm, E), lambda i: (i, 0)),
            pl.BlockSpec((E, F), lambda i: (0, 0)),
            pl.BlockSpec((1, F), lambda i: (0, 0)),
            pl.BlockSpec((F, E), lambda i: (0, 0)),
            pl.BlockSpec((1, E), lambda i: (0, 0)),
        ],
        out_specs=pl.BlockSpec((tm, E), lambda i: (i, 0)),
        compiler_params=pltpu.CompilerParams(dimension_semantics=("parallel",)),
    )(xp, w1, b1.reshape(1, F), w2, b2.reshape(1, E))
    return out if Mp == M else out[:M]


def self_attention(x, key_mask, p, num_head, causal):
    """x:(B,S,E), key_mask:(B,1,S) additive. Fused QKV projection + attention."""
    B, S, E = x.shape
    Dh = E // num_head
    scale = 1.0 / math.sqrt(Dh)
    qkv = linear(x.reshape(B * S, E), p["w_qkv"], p["b_qkv"]).reshape(B, S, 3 * E)
    attn = pl.pallas_call(
        partial(_self_attn_kernel, H=num_head, Dh=Dh, scale=scale, causal=causal),
        out_shape=jax.ShapeDtypeStruct((B, S, E), jnp.float32),
        grid=(B,),
        in_specs=[
            pl.BlockSpec((1, S, 3 * E), lambda b: (b, 0, 0)),
            pl.BlockSpec((1, 1, S), lambda b: (b, 0, 0)),
        ],
        out_specs=pl.BlockSpec((1, S, E), lambda b: (b, 0, 0)),
        compiler_params=pltpu.CompilerParams(dimension_semantics=("parallel",)),
    )(qkv, key_mask)
    return linear(attn.reshape(B * S, E), p["w_o"], p["b_o"]).reshape(B, S, E)


def cross_attention(x_q, x_kv, key_mask, p, num_head):
    """x_q:(B,Sq,E) queries, x_kv:(B,Sk,E) keys/values, key_mask:(B,1,Sk)."""
    B, Sq, E = x_q.shape
    Sk = x_kv.shape[1]
    Dh = E // num_head
    scale = 1.0 / math.sqrt(Dh)
    q = linear(x_q.reshape(B * Sq, E), p["w_q"], p["b_q"]).reshape(B, Sq, E)
    kv = linear(x_kv.reshape(B * Sk, E), p["w_kv"], p["b_kv"]).reshape(B, Sk, 2 * E)
    attn = pl.pallas_call(
        partial(_cross_attn_kernel, H=num_head, Dh=Dh, scale=scale),
        out_shape=jax.ShapeDtypeStruct((B, Sq, E), jnp.float32),
        grid=(B,),
        in_specs=[
            pl.BlockSpec((1, Sq, E), lambda b: (b, 0, 0)),
            pl.BlockSpec((1, Sk, 2 * E), lambda b: (b, 0, 0)),
            pl.BlockSpec((1, 1, Sk), lambda b: (b, 0, 0)),
        ],
        out_specs=pl.BlockSpec((1, Sq, E), lambda b: (b, 0, 0)),
        compiler_params=pltpu.CompilerParams(dimension_semantics=("parallel",)),
    )(q, kv, key_mask)
    return linear(attn.reshape(B * Sq, E), p["w_o"], p["b_o"]).reshape(B, Sq, E)


# ---------------------------------------------------------------------------
# Transformer layers
# ---------------------------------------------------------------------------

def encoder_layer(x, enc_key_mask, p, num_head):
    B, S, E = x.shape
    a = self_attention(x, enc_key_mask, p["self_attn"], num_head, causal=False)
    x2 = add_layernorm(x.reshape(B * S, E), a.reshape(B * S, E),
                       p["ln1_g"], p["ln1_b"])
    h = ffn(x2, p["ffn_w1"], p["ffn_b1"], p["ffn_w2"], p["ffn_b2"])
    x3 = add_layernorm(x2, h, p["ln2_g"], p["ln2_b"])
    return x3.reshape(B, S, E)


def decoder_layer(enc_out, enc_key_mask, y, dec_key_mask, p, num_head):
    B, S, E = y.shape
    a = self_attention(y, dec_key_mask, p["self_attn"], num_head, causal=True)
    y2 = add_layernorm(y.reshape(B * S, E), a.reshape(B * S, E),
                       p["ln1_g"], p["ln1_b"])
    c = cross_attention(y2.reshape(B, S, E), enc_out, enc_key_mask,
                        p["cross_attn"], num_head)
    y3 = add_layernorm(y2, c.reshape(B * S, E), p["ln2_g"], p["ln2_b"])
    h = ffn(y3, p["ffn_w1"], p["ffn_b1"], p["ffn_w2"], p["ffn_b2"])
    y4 = add_layernorm(y3, h, p["ln3_g"], p["ln3_b"])
    return y4.reshape(B, S, E)


def transformer_forward(params, enc_ids, dec_ids, cfg):
    B, S = enc_ids.shape
    E = cfg["embedding_dim"]
    pad = cfg["padding_idx"]
    H = cfg["num_head"]
    assert S == cfg["max_length"]

    # Additive key padding masks, only (B, 1, S): broadcast over queries happens
    # inside the attention kernel; the causal mask is built in-kernel via iota.
    enc_key_mask = jnp.where(enc_ids == pad, NEG_INF, 0.0).astype(jnp.float32)[:, None, :]
    dec_key_mask = jnp.where(dec_ids == pad, NEG_INF, 0.0).astype(jnp.float32)[:, None, :]
    # TODO(synk): TransformerEncoder/TransformerDecoder source not provided;
    #             standard post-LN sublayers with a causal decoder mask assumed.

    pos = params["pos_emb"][None, :S, :]            # (1, S, E)
    x = jnp.take(params["enc_emb"], enc_ids, axis=0) + pos
    # dropout(p=0.1) treated as identity (eval mode)
    for lp in params["enc_layers"]:
        x = encoder_layer(x, enc_key_mask, lp, H)
    enc_out = x

    y = jnp.take(params["dec_emb"], dec_ids, axis=0) + pos
    for lp in params["dec_layers"]:
        y = decoder_layer(enc_out, enc_key_mask, y, dec_key_mask, lp, H)

    logits = linear(y.reshape(B * S, E), params["out_w"], params["out_b"])
    return logits.reshape(B, S, cfg["decoder_vocab_size"])


# ---------------------------------------------------------------------------
# Deterministic parameter initialization
# ---------------------------------------------------------------------------

def init_params(key, cfg):
    E = cfg["embedding_dim"]
    F = 4 * E
    pad = cfg["padding_idx"]
    keys = iter(jax.random.split(key, 128))

    def lin(in_d, out_d):
        w = (jax.random.normal(next(keys), (in_d, out_d), jnp.float32)
             / math.sqrt(in_d)).astype(jnp.bfloat16)   # bf16 MXU weights
        b = jnp.zeros((out_d,), jnp.float32)
        return w, b

    def self_attn_block():
        w_qkv, b_qkv = lin(E, 3 * E)                   # fused Q|K|V
        w_o, b_o = lin(E, E)
        return dict(w_qkv=w_qkv, b_qkv=b_qkv, w_o=w_o, b_o=b_o)

    def cross_attn_block():
        w_q, b_q = lin(E, E)
        w_kv, b_kv = lin(E, 2 * E)                     # fused K|V
        w_o, b_o = lin(E, E)
        return dict(w_q=w_q, b_q=b_q, w_kv=w_kv, b_kv=b_kv, w_o=w_o, b_o=b_o)

    def enc_layer():
        w1, b1 = lin(E, F)
        w2, b2 = lin(F, E)
        return dict(self_attn=self_attn_block(),
                    ln1_g=jnp.ones((E,), jnp.float32), ln1_b=jnp.zeros((E,), jnp.float32),
                    ffn_w1=w1, ffn_b1=b1, ffn_w2=w2, ffn_b2=b2,
                    ln2_g=jnp.ones((E,), jnp.float32), ln2_b=jnp.zeros((E,), jnp.float32))

    def dec_layer():
        w1, b1 = lin(E, F)
        w2, b2 = lin(F, E)
        return dict(self_attn=self_attn_block(), cross_attn=cross_attn_block(),
                    ln1_g=jnp.ones((E,), jnp.float32), ln1_b=jnp.zeros((E,), jnp.float32),
                    ln2_g=jnp.ones((E,), jnp.float32), ln2_b=jnp.zeros((E,), jnp.float32),
                    ffn_w1=w1, ffn_b1=b1, ffn_w2=w2, ffn_b2=b2,
                    ln3_g=jnp.ones((E,), jnp.float32), ln3_b=jnp.zeros((E,), jnp.float32))

    enc_emb = jax.random.normal(next(keys), (cfg["encoder_vocab_size"], E), jnp.float32)
    enc_emb = enc_emb.at[pad].set(0.0)      # padding_idx row is zero
    dec_emb = jax.random.normal(next(keys), (cfg["decoder_vocab_size"], E), jnp.float32)
    dec_emb = dec_emb.at[pad].set(0.0)
    pos_emb = jax.random.normal(next(keys), (cfg["max_length"], E), jnp.float32)

    out_w, out_b = lin(E, cfg["decoder_vocab_size"])

    return dict(
        enc_emb=enc_emb, dec_emb=dec_emb, pos_emb=pos_emb,
        enc_layers=[enc_layer() for _ in range(cfg["num_layer"])],
        dec_layers=[dec_layer() for _ in range(cfg["num_layer"])],
        out_w=out_w, out_b=out_b,
    )


# ---------------------------------------------------------------------------

if __name__ == "__main__":
    cfg = dict(
        encoder_vocab_size=11,
        decoder_vocab_size=13,
        max_length=8,
        num_head=4,
        embedding_dim=32,
        num_layer=2,
        padding_idx=0,
    )
    root = jax.random.PRNGKey(0)
    pkey, ekey, dkey = jax.random.split(root, 3)
    params = init_params(pkey, cfg)

    B, S = 2, cfg["max_length"]
    enc_ids = jax.random.randint(ekey, (B, S), 1, cfg["encoder_vocab_size"], dtype=jnp.int32)
    dec_ids = jax.random.randint(dkey, (B, S), 1, cfg["decoder_vocab_size"], dtype=jnp.int32)
    # introduce some padding tokens
    enc_ids = enc_ids.at[:, -2:].set(cfg["padding_idx"])
    dec_ids = dec_ids.at[:, -1:].set(cfg["padding_idx"])

    fwd = jax.jit(lambda p, e, d: transformer_forward(p, e, d, cfg))
    out = fwd(params, enc_ids, dec_ids)
    jax.block_until_ready(out)
    assert out.shape == (B, S, cfg["decoder_vocab_size"])
    assert bool(jnp.all(jnp.isfinite(out)))
    print("KERNEL_OK")
</pallas_src>

<mosaic_0001>
module attributes {stable_mosaic.version = 11 : i64} {
  func.func @_linear_kernel(%arg0: i32, %arg1: i32, %arg2: i32, %arg3: memref<16x32xf32, #tpu.memory_space<vmem>>, %arg4: memref<32x128xbf16, #tpu.memory_space<vmem>>, %arg5: memref<1x128xf32, #tpu.memory_space<vmem>>, %arg6: memref<16x128xf32, #tpu.memory_space<vmem>>, %arg7: memref<16x128xf32, #tpu.memory_space<vmem>>) attributes {dimension_semantics = [#tpu.dimension_semantics<parallel>, #tpu.dimension_semantics<parallel>, #tpu.dimension_semantics<arbitrary>], iteration_bounds = array<i64: 1, 1, 1>, scalar_prefetch = 0 : i64, scratch_operands = 1 : i64, tpu.core_type = #tpu.core_type<tc>, window_params = [{transform_indices = @transform_0, window_bounds = array<i64: 16, 32>}, {transform_indices = @transform_1, window_bounds = array<i64: 32, 128>}, {transform_indices = @transform_2, window_bounds = array<i64: 1, 128>}, {transform_indices = @transform_3, window_bounds = array<i64: 16, 128>}]} {
    %c0_i32 = arith.constant 0 : i32
    %0 = arith.cmpi eq, %arg2, %c0_i32 : i32
    %1 = arith.extui %0 : i1 to i32
    %c0_i32_0 = arith.constant 0 : i32
    %2 = arith.cmpi ne, %1, %c0_i32_0 : i32
    scf.if %2 {
      %cst_10 = arith.constant 0.000000e+00 : f32
      %13 = vector.broadcast %cst_10 : f32 to vector<16x128xf32>
      %c0_11 = arith.constant 0 : index
      %c0_12 = arith.constant 0 : index
      %14 = vector.load %arg7[%c0_11, %c0_12] : memref<16x128xf32, #tpu.memory_space<vmem>>, vector<16x128xf32>
      tpu.vector_store %arg7[%c0_11, %c0_12], %13 {strides = array<i32>} : memref<16x128xf32, #tpu.memory_space<vmem>>, vector<16x128xf32>,
    } else {
    }
    %c0 = arith.constant 0 : index
    %c0_1 = arith.constant 0 : index
    %3 = vector.load %arg7[%c0, %c0_1] : memref<16x128xf32, #tpu.memory_space<vmem>>, vector<16x128xf32>
    %c0_2 = arith.constant 0 : index
    %c0_3 = arith.constant 0 : index
    %4 = vector.load %arg3[%c0_2, %c0_3] : memref<16x32xf32, #tpu.memory_space<vmem>>, vector<16x32xf32>
    %5 = arith.truncf %4 : vector<16x32xf32> to vector<16x32xbf16>
    %c0_4 = arith.constant 0 : index
    %c0_5 = arith.constant 0 : index
    %6 = vector.load %arg4[%c0_4, %c0_5] : memref<32x128xbf16, #tpu.memory_space<vmem>>, vector<32x128xbf16>
    %cst = arith.constant dense<0.000000e+00> : vector<16x128xf32>
    %7 = tpu.matmul %5, %6, %cst {dimension_numbers = #tpu.dot_dimension_numbers<[1], [0], [0], [1], [0, 0, 1, 1], [], []>} : vector<16x32xbf16>, vector<32x128xbf16>, vector<16x128xf32> -> vector<16x128xf32>
    %8 = arith.addf %3, %7 : vector<16x128xf32>
    %c0_6 = arith.constant 0 : index
    %c0_7 = arith.constant 0 : index
    %9 = vector.load %arg7[%c0_6, %c0_7] : memref<16x128xf32, #tpu.memory_space<vmem>>, vector<16x128xf32>
    tpu.vector_store %arg7[%c0_6, %c0_7], %8 {strides = array<i32>} : memref<16x128xf32, #tpu.memory_space<vmem>>, vector<16x128xf32>,
    %c0_i32_8 = arith.constant 0 : i32
    %10 = arith.cmpi eq, %arg2, %c0_i32_8 : i32
    %11 = arith.extui %10 : i1 to i32
    %c0_i32_9 = arith.constant 0 : i32
    %12 = arith.cmpi ne, %11, %c0_i32_9 : i32
    scf.if %12 {
      %c0_10 = arith.constant 0 : index
      %c0_11 = arith.constant 0 : index
      %13 = vector.load %arg7[%c0_10, %c0_11] : memref<16x128xf32, #tpu.memory_space<vmem>>, vector<16x128xf32>
      %c0_12 = arith.constant 0 : index
      %c0_13 = arith.constant 0 : index
      %14 = vector.load %arg5[%c0_12, %c0_13] : memref<1x128xf32, #tpu.memory_space<vmem>>, vector<1x128xf32>
      %15 = vector.broadcast %14 : vector<1x128xf32> to vector<16x128xf32>
      %16 = arith.addf %13, %15 : vector<16x128xf32>
      %c0_14 = arith.constant 0 : index
      %c0_15 = arith.constant 0 : index
      %17 = vector.load %arg6[%c0_14, %c0_15] : memref<16x128xf32, #tpu.memory_space<vmem>>, vector<16x128xf32>
      tpu.vector_store %arg6[%c0_14, %c0_15], %16 {strides = array<i32>} : memref<16x128xf32, #tpu.memory_space<vmem>>, vector<16x128xf32>,
    } else {
    }
    return
  }
  func.func @transform_0(%arg0: i32, %arg1: i32, %arg2: i32) -> (i32, i32) {
    %c0_i32 = arith.constant 0 : i32
    return %arg0, %arg2 : i32, i32
  }
  func.func @transform_1(%arg0: i32, %arg1: i32, %arg2: i32) -> (i32, i32) {
    %c0_i32 = arith.constant 0 : i32
    return %arg2, %arg1 : i32, i32
  }
  func.func @transform_2(%arg0: i32, %arg1: i32, %arg2: i32) -> (i32, i32) {
    %c0_i32 = arith.constant 0 : i32
    %c0_i32_0 = arith.constant 0 : i32
    return %c0_i32, %arg1 : i32, i32
  }
  func.func @transform_3(%arg0: i32, %arg1: i32, %arg2: i32) -> (i32, i32) {
    %c0_i32 = arith.constant 0 : i32
    return %arg0, %arg1 : i32, i32
  }
}

module attributes {stable_mosaic.version = 11 : i64} {
  func.func @_ffn_kernel(%arg0: i32, %arg1: memref<16x32xf32, #tpu.memory_space<vmem>>, %arg2: memref<32x128xbf16, #tpu.memory_space<vmem>>, %arg3: memref<1x128xf32, #tpu.memory_space<vmem>>, %arg4: memref<128x32xbf16, #tpu.memory_space<vmem>>, %arg5: memref<1x32xf32, #tpu.memory_space<vmem>>, %arg6: memref<16x32xf32, #tpu.memory_space<vmem>>) attributes {dimension_semantics = [#tpu.dimension_semantics<parallel>], iteration_bounds = array<i64: 1>, scalar_prefetch = 0 : i64, scratch_operands = 0 : i64, tpu.core_type = #tpu.core_type<tc>, window_params = [{transform_indices = @transform_0, window_bounds = array<i64: 16, 32>}, {pipeline_mode = #tpu.pipeline_mode<synchronous>, transform_indices = @transform_1, window_bounds = array<i64: 32, 128>}, {pipeline_mode = #tpu.pipeline_mode<synchronous>, transform_indices = @transform_2, window_bounds = array<i64: 1, 128>}, {pipeline_mode = #tpu.pipeline_mode<synchronous>, transform_indices = @transform_3, window_bounds = array<i64: 128, 32>}, {pipeline_mode = #tpu.pipeline_mode<synchronous>, transform_indices = @transform_4, window_bounds = array<i64: 1, 32>}, {transform_indices = @transform_5, window_bounds = array<i64: 16, 32>}]} {
    %c0 = arith.constant 0 : index
    %c0_0 = arith.constant 0 : index
    %0 = vector.load %arg1[%c0, %c0_0] : memref<16x32xf32, #tpu.memory_space<vmem>>, vector<16x32xf32>
    %1 = arith.truncf %0 : vector<16x32xf32> to vector<16x32xbf16>
    %c0_1 = arith.constant 0 : index
    %c0_2 = arith.constant 0 : index
    %2 = vector.load %arg2[%c0_1, %c0_2] : memref<32x128xbf16, #tpu.memory_space<vmem>>, vector<32x128xbf16>
    %cst = arith.constant dense<0.000000e+00> : vector<16x128xf32>
    %3 = tpu.matmul %1, %2, %cst {dimension_numbers = #tpu.dot_dimension_numbers<[1], [0], [0], [1], [0, 0, 1, 1], [], []>} : vector<16x32xbf16>, vector<32x128xbf16>, vector<16x128xf32> -> vector<16x128xf32>
    %c0_3 = arith.constant 0 : index
    %c0_4 = arith.constant 0 : index
    %4 = vector.load %arg3[%c0_3, %c0_4] : memref<1x128xf32, #tpu.memory_space<vmem>>, vector<1x128xf32>
    %5 = vector.broadcast %4 : vector<1x128xf32> to vector<16x128xf32>
    %6 = arith.addf %3, %5 : vector<16x128xf32>
    %cst_5 = arith.constant 0.000000e+00 : f32
    %7 = vector.broadcast %cst_5 : f32 to vector<16x128xf32>
    %8 = arith.maximumf %6, %7 : vector<16x128xf32>
    %9 = arith.truncf %8 : vector<16x128xf32> to vector<16x128xbf16>
    %c0_6 = arith.constant 0 : index
    %c0_7 = arith.constant 0 : index
    %10 = vector.load %arg4[%c0_6, %c0_7] : memref<128x32xbf16, #tpu.memory_space<vmem>>, vector<128x32xbf16>
    %cst_8 = arith.constant dense<0.000000e+00> : vector<16x32xf32>
    %11 = tpu.matmul %9, %10, %cst_8 {dimension_numbers = #tpu.dot_dimension_numbers<[1], [0], [0], [1], [0, 0, 1, 1], [], []>} : vector<16x128xbf16>, vector<128x32xbf16>, vector<16x32xf32> -> vector<16x32xf32>
    %c0_9 = arith.constant 0 : index
    %c0_10 = arith.constant 0 : index
    %12 = vector.load %arg5[%c0_9, %c0_10] : memref<1x32xf32, #tpu.memory_space<vmem>>, vector<1x32xf32>
    %13 = vector.broadcast %12 : vector<1x32xf32> to vector<16x32xf32>
    %14 = arith.addf %11, %13 : vector<16x32xf32>
    %c0_11 = arith.constant 0 : index
    %c0_12 = arith.constant 0 : index
    %15 = vector.load %arg6[%c0_11, %c0_12] : memref<16x32xf32, #tpu.memory_space<vmem>>, vector<16x32xf32>
    tpu.vector_store %arg6[%c0_11, %c0_12], %14 {strides = array<i32>} : memref<16x32xf32, #tpu.memory_space<vmem>>, vector<16x32xf32>,
    return
  }
  func.func @transform_0(%arg0: i32) -> (i32, i32) {
    %c0_i32 = arith.constant 0 : i32
    %c0_i32_0 = arith.constant 0 : i32
    return %arg0, %c0_i32 : i32, i32
  }
  func.func @transform_1(%arg0: i32) -> (i32, i32) {
    %c0_i32 = arith.constant 0 : i32
    %c0_i32_0 = arith.constant 0 : i32
    %c0_i32_1 = arith.constant 0 : i32
    return %c0_i32, %c0_i32_0 : i32, i32
  }
  func.func @transform_2(%arg0: i32) -> (i32, i32) {
    %c0_i32 = arith.constant 0 : i32
    %c0_i32_0 = arith.constant 0 : i32
    %c0_i32_1 = arith.constant 0 : i32
    return %c0_i32, %c0_i32_0 : i32, i32
  }
  func.func @transform_3(%arg0: i32) -> (i32, i32) {
    %c0_i32 = arith.constant 0 : i32
    %c0_i32_0 = arith.constant 0 : i32
    %c0_i32_1 = arith.constant 0 : i32
    return %c0_i32, %c0_i32_0 : i32, i32
  }
  func.func @transform_4(%arg0: i32) -> (i32, i32) {
    %c0_i32 = arith.constant 0 : i32
    %c0_i32_0 = arith.constant 0 : i32
    %c0_i32_1 = arith.constant 0 : i32
    return %c0_i32, %c0_i32_0 : i32, i32
  }
  func.func @transform_5(%arg0: i32) -> (i32, i32) {
    %c0_i32 = arith.constant 0 : i32
    %c0_i32_0 = arith.constant 0 : i32
    return %arg0, %c0_i32 : i32, i32
  }
}

module attributes {stable_mosaic.version = 11 : i64} {
  func.func @_add_ln_kernel(%arg0: i32, %arg1: memref<16x32xf32, #tpu.memory_space<vmem>>, %arg2: memref<16x32xf32, #tpu.memory_space<vmem>>, %arg3: memref<1x32xf32, #tpu.memory_space<vmem>>, %arg4: memref<1x32xf32, #tpu.memory_space<vmem>>, %arg5: memref<16x32xf32, #tpu.memory_space<vmem>>) attributes {dimension_semantics = [#tpu.dimension_semantics<parallel>], iteration_bounds = array<i64: 1>, scalar_prefetch = 0 : i64, scratch_operands = 0 : i64, tpu.core_type = #tpu.core_type<tc>, window_params = [{transform_indices = @transform_0, window_bounds = array<i64: 16, 32>}, {transform_indices = @transform_1, window_bounds = array<i64: 16, 32>}, {pipeline_mode = #tpu.pipeline_mode<synchronous>, transform_indices = @transform_2, window_bounds = array<i64: 1, 32>}, {pipeline_mode = #tpu.pipeline_mode<synchronous>, transform_indices = @transform_3, window_bounds = array<i64: 1, 32>}, {transform_indices = @transform_4, window_bounds = array<i64: 16, 32>}]} {
    %c0 = arith.constant 0 : index
    %c0_0 = arith.constant 0 : index
    %0 = vector.load %arg1[%c0, %c0_0] : memref<16x32xf32, #tpu.memory_space<vmem>>, vector<16x32xf32>
    %c0_1 = arith.constant 0 : index
    %c0_2 = arith.constant 0 : index
    %1 = vector.load %arg2[%c0_1, %c0_2] : memref<16x32xf32, #tpu.memory_space<vmem>>, vector<16x32xf32>
    %2 = arith.addf %0, %1 : vector<16x32xf32>
    %cst = arith.constant dense<0.000000e+00> : vector<16xf32>
    %3 = vector.multi_reduction <add>, %2, %cst [1] : vector<16x32xf32> to vector<16xf32>
    %4 = vector.shape_cast %3 : vector<16xf32> to vector<16x1xf32>
    %cst_3 = arith.constant 3.200000e+01 : f32
    %5 = vector.broadcast %cst_3 : f32 to vector<16x1xf32>
    %6 = arith.divf %4, %5 : vector<16x1xf32>
    %7 = vector.broadcast %6 : vector<16x1xf32> to vector<16x32xf32>
    %8 = arith.subf %2, %7 : vector<16x32xf32>
    %9 = arith.mulf %8, %8 : vector<16x32xf32>
    %cst_4 = arith.constant dense<0.000000e+00> : vector<16xf32>
    %10 = vector.multi_reduction <add>, %9, %cst_4 [1] : vector<16x32xf32> to vector<16xf32>
    %11 = vector.shape_cast %10 : vector<16xf32> to vector<16x1xf32>
    %cst_5 = arith.constant 3.200000e+01 : f32
    %12 = vector.broadcast %cst_5 : f32 to vector<16x1xf32>
    %13 = arith.divf %11, %12 : vector<16x1xf32>
    %14 = vector.broadcast %6 : vector<16x1xf32> to vector<16x32xf32>
    %15 = arith.subf %2, %14 : vector<16x32xf32>
    %cst_6 = arith.constant 9.99999974E-6 : f32
    %16 = vector.broadcast %cst_6 : f32 to vector<16x1xf32>
    %17 = arith.addf %13, %16 : vector<16x1xf32>
    %18 = math.rsqrt %17 : vector<16x1xf32>
    %19 = vector.broadcast %18 : vector<16x1xf32> to vector<16x32xf32>
    %20 = arith.mulf %15, %19 : vector<16x32xf32>
    %c0_7 = arith.constant 0 : index
    %c0_8 = arith.constant 0 : index
    %21 = vector.load %arg3[%c0_7, %c0_8] : memref<1x32xf32, #tpu.memory_space<vmem>>, vector<1x32xf32>
    %22 = vector.broadcast %21 : vector<1x32xf32> to vector<16x32xf32>
    %23 = arith.mulf %20, %22 : vector<16x32xf32>
    %c0_9 = arith.constant 0 : index
    %c0_10 = arith.constant 0 : index
    %24 = vector.load %arg4[%c0_9, %c0_10] : memref<1x32xf32, #tpu.memory_space<vmem>>, vector<1x32xf32>
    %25 = vector.broadcast %24 : vector<1x32xf32> to vector<16x32xf32>
    %26 = arith.addf %23, %25 : vector<16x32xf32>
    %c0_11 = arith.constant 0 : index
    %c0_12 = arith.constant 0 : index
    %27 = vector.load %arg5[%c0_11, %c0_12] : memref<16x32xf32, #tpu.memory_space<vmem>>, vector<16x32xf32>
    tpu.vector_store %arg5[%c0_11, %c0_12], %26 {strides = array<i32>} : memref<16x32xf32, #tpu.memory_space<vmem>>, vector<16x32xf32>,
    return
  }
  func.func @transform_0(%arg0: i32) -> (i32, i32) {
    %c0_i32 = arith.constant 0 : i32
    %c0_i32_0 = arith.constant 0 : i32
    return %arg0, %c0_i32 : i32, i32
  }
  func.func @transform_1(%arg0: i32) -> (i32, i32) {
    %c0_i32 = arith.constant 0 : i32
    %c0_i32_0 = arith.constant 0 : i32
    return %arg0, %c0_i32 : i32, i32
  }
  func.func @transform_2(%arg0: i32) -> (i32, i32) {
    %c0_i32 = arith.constant 0 : i32
    %c0_i32_0 = arith.constant 0 : i32
    %c0_i32_1 = arith.constant 0 : i32
    return %c0_i32, %c0_i32_0 : i32, i32
  }
  func.func @transform_3(%arg0: i32) -> (i32, i32) {
    %c0_i32 = arith.constant 0 : i32
    %c0_i32_0 = arith.constant 0 : i32
    %c0_i32_1 = arith.constant 0 : i32
    return %c0_i32, %c0_i32_0 : i32, i32
  }
  func.func @transform_4(%arg0: i32) -> (i32, i32) {
    %c0_i32 = arith.constant 0 : i32
    %c0_i32_0 = arith.constant 0 : i32
    return %arg0, %c0_i32 : i32, i32
  }
}

module attributes {stable_mosaic.version = 11 : i64} {
  func.func @_self_attn_kernel(%arg0: i32, %arg1: memref<1x8x96xf32, #tpu.memory_space<vmem>>, %arg2: memref<1x1x8xf32, #tpu.memory_space<vmem>>, %arg3: memref<1x8x32xf32, #tpu.memory_space<vmem>>) attributes {dimension_semantics = [#tpu.dimension_semantics<parallel>], iteration_bounds = array<i64: 2>, scalar_prefetch = 0 : i64, scratch_operands = 0 : i64, tpu.core_type = #tpu.core_type<tc>, window_params = [{transform_indices = @transform_0, window_bounds = array<i64: 1, 8, 96>}, {transform_indices = @transform_1, window_bounds = array<i64: 1, 1, 8>}, {transform_indices = @transform_2, window_bounds = array<i64: 1, 8, 32>}]} {
    %c0 = arith.constant 0 : index
    %c0_0 = arith.constant 0 : index
    %c0_1 = arith.constant 0 : index
    %0 = vector.load %arg1[%c0, %c0_0, %c0_1] : memref<1x8x96xf32, #tpu.memory_space<vmem>>, vector<1x8x96xf32>
    %1 = vector.shape_cast %0 : vector<1x8x96xf32> to vector<8x96xf32>
    %2 = vector.extract_strided_slice %1 {offsets = [0, 0], sizes = [8, 32], strides = [1, 1]} : vector<8x96xf32> to vector<8x32xf32>
    %3 = vector.extract_strided_slice %1 {offsets = [0, 32], sizes = [8, 32], strides = [1, 1]} : vector<8x96xf32> to vector<8x32xf32>
    %4 = vector.extract_strided_slice %1 {offsets = [0, 64], sizes = [8, 32], strides = [1, 1]} : vector<8x96xf32> to vector<8x32xf32>
    %c0_2 = arith.constant 0 : index
    %c0_3 = arith.constant 0 : index
    %c0_4 = arith.constant 0 : index
    %5 = vector.load %arg2[%c0_2, %c0_3, %c0_4] : memref<1x1x8xf32, #tpu.memory_space<vmem>>, vector<1x1x8xf32>
    %6 = vector.shape_cast %5 : vector<1x1x8xf32> to vector<1x8xf32>
    %7 = vector.extract_strided_slice %2 {offsets = [0, 0], sizes = [8, 8], strides = [1, 1]} : vector<8x32xf32> to vector<8x8xf32>
    %8 = arith.truncf %7 : vector<8x8xf32> to vector<8x8xbf16>
    %9 = vector.extract_strided_slice %3 {offsets = [0, 0], sizes = [8, 8], strides = [1, 1]} : vector<8x32xf32> to vector<8x8xf32>
    %10 = arith.truncf %9 : vector<8x8xf32> to vector<8x8xbf16>
    %11 = vector.extract_strided_slice %4 {offsets = [0, 0], sizes = [8, 8], strides = [1, 1]} : vector<8x32xf32> to vector<8x8xf32>
    %12 = arith.truncf %11 : vector<8x8xf32> to vector<8x8xbf16>
    %cst = arith.constant dense<0.000000e+00> : vector<8x8xf32>
    %13 = tpu.matmul %8, %10, %cst {dimension_numbers = #tpu.dot_dimension_numbers<[1], [1], [0], [0], [0, 0, 1, 0], [], []>} : vector<8x8xbf16>, vector<8x8xbf16>, vector<8x8xf32> -> vector<8x8xf32>
    %cst_5 = arith.constant 0.353553385 : f32
    %14 = vector.broadcast %cst_5 : f32 to vector<8x8xf32>
    %15 = arith.mulf %13, %14 : vector<8x8xf32>
    %16 = vector.broadcast %6 : vector<1x8xf32> to vector<8x8xf32>
    %17 = arith.addf %15, %16 : vector<8x8xf32>
    %cst_6 = arith.constant dense<0xFF800000> : vector<8xf32>
    %18 = vector.multi_reduction <maximumf>, %17, %cst_6 [1] : vector<8x8xf32> to vector<8xf32>
    %19 = vector.shape_cast %18 : vector<8xf32> to vector<8x1xf32>
    %20 = vector.broadcast %19 : vector<8x1xf32> to vector<8x8xf32>
    %21 = arith.subf %17, %20 : vector<8x8xf32>
    %22 = math.exp %21 : vector<8x8xf32>
    %cst_7 = arith.constant dense<0.000000e+00> : vector<8xf32>
    %23 = vector.multi_reduction <add>, %22, %cst_7 [1] : vector<8x8xf32> to vector<8xf32>
    %24 = vector.shape_cast %23 : vector<8xf32> to vector<8x1xf32>
    %25 = tpu.reciprocal %24 {approx = true} : vector<8x1xf32> -> vector<8x1xf32>
    %26 = vector.broadcast %25 : vector<8x1xf32> to vector<8x8xf32>
    %27 = arith.mulf %22, %26 : vector<8x8xf32>
    %28 = arith.truncf %27 : vector<8x8xf32> to vector<8x8xbf16>
    %cst_8 = arith.constant dense<0.000000e+00> : vector<8x8xf32>
    %29 = tpu.matmul %28, %12, %cst_8 {dimension_numbers = #tpu.dot_dimension_numbers<[1], [0], [0], [1], [0, 0, 1, 1], [], []>} : vector<8x8xbf16>, vector<8x8xbf16>, vector<8x8xf32> -> vector<8x8xf32>
    %30 = vector.extract_strided_slice %2 {offsets = [0, 8], sizes = [8, 8], strides = [1, 1]} : vector<8x32xf32> to vector<8x8xf32>
    %31 = arith.truncf %30 : vector<8x8xf32> to vector<8x8xbf16>
    %32 = vector.extract_strided_slice %3 {offsets = [0, 8], sizes = [8, 8], strides = [1, 1]} : vector<8x32xf32> to vector<8x8xf32>
    %33 = arith.truncf %32 : vector<8x8xf32> to vector<8x8xbf16>
    %34 = vector.extract_strided_slice %4 {offsets = [0, 8], sizes = [8, 8], strides = [1, 1]} : vector<8x32xf32> to vector<8x8xf32>
    %35 = arith.truncf %34 : vector<8x8xf32> to vector<8x8xbf16>
    %cst_9 = arith.constant dense<0.000000e+00> : vector<8x8xf32>
    %36 = tpu.matmul %31, %33, %cst_9 {dimension_numbers = #tpu.dot_dimension_numbers<[1], [1], [0], [0], [0, 0, 1, 0], [], []>} : vector<8x8xbf16>, vector<8x8xbf16>, vector<8x8xf32> -> vector<8x8xf32>
    %cst_10 = arith.constant 0.353553385 : f32
    %37 = vector.broadcast %cst_10 : f32 to vector<8x8xf32>
    %38 = arith.mulf %36, %37 : vector<8x8xf32>
    %39 = vector.broadcast %6 : vector<1x8xf32> to vector<8x8xf32>
    %40 = arith.addf %38, %39 : vector<8x8xf32>
    %cst_11 = arith.constant dense<0xFF800000> : vector<8xf32>
    %41 = vector.multi_reduction <maximumf>, %40, %cst_11 [1] : vector<8x8xf32> to vector<8xf32>
    %42 = vector.shape_cast %41 : vector<8xf32> to vector<8x1xf32>
    %43 = vector.broadcast %42 : vector<8x1xf32> to vector<8x8xf32>
    %44 = arith.subf %40, %43 : vector<8x8xf32>
    %45 = math.exp %44 : vector<8x8xf32>
    %cst_12 = arith.constant dense<0.000000e+00> : vector<8xf32>
    %46 = vector.multi_reduction <add>, %45, %cst_12 [1] : vector<8x8xf32> to vector<8xf32>
    %47 = vector.shape_cast %46 : vector<8xf32> to vector<8x1xf32>
    %48 = tpu.reciprocal %47 {approx = true} : vector<8x1xf32> -> vector<8x1xf32>
    %49 = vector.broadcast %48 : vector<8x1xf32> to vector<8x8xf32>
    %50 = arith.mulf %45, %49 : vector<8x8xf32>
    %51 = arith.truncf %50 : vector<8x8xf32> to vector<8x8xbf16>
    %cst_13 = arith.constant dense<0.000000e+00> : vector<8x8xf32>
    %52 = tpu.matmul %51, %35, %cst_13 {dimension_numbers = #tpu.dot_dimension_numbers<[1], [0], [0], [1], [0, 0, 1, 1], [], []>} : vector<8x8xbf16>, vector<8x8xbf16>, vector<8x8xf32> -> vector<8x8xf32>
    %53 = vector.extract_strided_slice %2 {offsets = [0, 16], sizes = [8, 8], strides = [1, 1]} : vector<8x32xf32> to vector<8x8xf32>
    %54 = arith.truncf %53 : vector<8x8xf32> to vector<8x8xbf16>
    %55 = vector.extract_strided_slice %3 {offsets = [0, 16], sizes = [8, 8], strides = [1, 1]} : vector<8x32xf32> to vector<8x8xf32>
    %56 = arith.truncf %55 : vector<8x8xf32> to vector<8x8xbf16>
    %57 = vector.extract_strided_slice %4 {offsets = [0, 16], sizes = [8, 8], strides = [1, 1]} : vector<8x32xf32> to vector<8x8xf32>
    %58 = arith.truncf %57 : vector<8x8xf32> to vector<8x8xbf16>
    %cst_14 = arith.constant dense<0.000000e+00> : vector<8x8xf32>
    %59 = tpu.matmul %54, %56, %cst_14 {dimension_numbers = #tpu.dot_dimension_numbers<[1], [1], [0], [0], [0, 0, 1, 0], [], []>} : vector<8x8xbf16>, vector<8x8xbf16>, vector<8x8xf32> -> vector<8x8xf32>
    %cst_15 = arith.constant 0.353553385 : f32
    %60 = vector.broadcast %cst_15 : f32 to vector<8x8xf32>
    %61 = arith.mulf %59, %60 : vector<8x8xf32>
    %62 = vector.broadcast %6 : vector<1x8xf32> to vector<8x8xf32>
    %63 = arith.addf %61, %62 : vector<8x8xf32>
    %cst_16 = arith.constant dense<0xFF800000> : vector<8xf32>
    %64 = vector.multi_reduction <maximumf>, %63, %cst_16 [1] : vector<8x8xf32> to vector<8xf32>
    %65 = vector.shape_cast %64 : vector<8xf32> to vector<8x1xf32>
    %66 = vector.broadcast %65 : vector<8x1xf32> to vector<8x8xf32>
    %67 = arith.subf %63, %66 : vector<8x8xf32>
    %68 = math.exp %67 : vector<8x8xf32>
    %cst_17 = arith.constant dense<0.000000e+00> : vector<8xf32>
    %69 = vector.multi_reduction <add>, %68, %cst_17 [1] : vector<8x8xf32> to vector<8xf32>
    %70 = vector.shape_cast %69 : vector<8xf32> to vector<8x1xf32>
    %71 = tpu.reciprocal %70 {approx = true} : vector<8x1xf32> -> vector<8x1xf32>
    %72 = vector.broadcast %71 : vector<8x1xf32> to vector<8x8xf32>
    %73 = arith.mulf %68, %72 : vector<8x8xf32>
    %74 = arith.truncf %73 : vector<8x8xf32> to vector<8x8xbf16>
    %cst_18 = arith.constant dense<0.000000e+00> : vector<8x8xf32>
    %75 = tpu.matmul %74, %58, %cst_18 {dimension_numbers = #tpu.dot_dimension_numbers<[1], [0], [0], [1], [0, 0, 1, 1], [], []>} : vector<8x8xbf16>, vector<8x8xbf16>, vector<8x8xf32> -> vector<8x8xf32>
    %76 = vector.extract_strided_slice %2 {offsets = [0, 24], sizes = [8, 8], strides = [1, 1]} : vector<8x32xf32> to vector<8x8xf32>
    %77 = arith.truncf %76 : vector<8x8xf32> to vector<8x8xbf16>
    %78 = vector.extract_strided_slice %3 {offsets = [0, 24], sizes = [8, 8], strides = [1, 1]} : vector<8x32xf32> to vector<8x8xf32>
    %79 = arith.truncf %78 : vector<8x8xf32> to vector<8x8xbf16>
    %80 = vector.extract_strided_slice %4 {offsets = [0, 24], sizes = [8, 8], strides = [1, 1]} : vector<8x32xf32> to vector<8x8xf32>
    %81 = arith.truncf %80 : vector<8x8xf32> to vector<8x8xbf16>
    %cst_19 = arith.constant dense<0.000000e+00> : vector<8x8xf32>
    %82 = tpu.matmul %77, %79, %cst_19 {dimension_numbers = #tpu.dot_dimension_numbers<[1], [1], [0], [0], [0, 0, 1, 0], [], []>} : vector<8x8xbf16>, vector<8x8xbf16>, vector<8x8xf32> -> vector<8x8xf32>
    %cst_20 = arith.constant 0.353553385 : f32
    %83 = vector.broadcast %cst_20 : f32 to vector<8x8xf32>
    %84 = arith.mulf %82, %83 : vector<8x8xf32>
    %85 = vector.broadcast %6 : vector<1x8xf32> to vector<8x8xf32>
    %86 = arith.addf %84, %85 : vector<8x8xf32>
    %cst_21 = arith.constant dense<0xFF800000> : vector<8xf32>
    %87 = vector.multi_reduction <maximumf>, %86, %cst_21 [1] : vector<8x8xf32> to vector<8xf32>
    %88 = vector.shape_cast %87 : vector<8xf32> to vector<8x1xf32>
    %89 = vector.broadcast %88 : vector<8x1xf32> to vector<8x8xf32>
    %90 = arith.subf %86, %89 : vector<8x8xf32>
    %91 = math.exp %90 : vector<8x8xf32>
    %cst_22 = arith.constant dense<0.000000e+00> : vector<8xf32>
    %92 = vector.multi_reduction <add>, %91, %cst_22 [1] : vector<8x8xf32> to vector<8xf32>
    %93 = vector.shape_cast %92 : vector<8xf32> to vector<8x1xf32>
    %94 = tpu.reciprocal %93 {approx = true} : vector<8x1xf32> -> vector<8x1xf32>
    %95 = vector.broadcast %94 : vector<8x1xf32> to vector<8x8xf32>
    %96 = arith.mulf %91, %95 : vector<8x8xf32>
    %97 = arith.truncf %96 : vector<8x8xf32> to vector<8x8xbf16>
    %cst_23 = arith.constant dense<0.000000e+00> : vector<8x8xf32>
    %98 = tpu.matmul %97, %81, %cst_23 {dimension_numbers = #tpu.dot_dimension_numbers<[1], [0], [0], [1], [0, 0, 1, 1], [], []>} : vector<8x8xbf16>, vector<8x8xbf16>, vector<8x8xf32> -> vector<8x8xf32>
    %99 = tpu.concatenate %29, %52, %75, %98 in 1 : vector<8x8xf32>, vector<8x8xf32>, vector<8x8xf32>, vector<8x8xf32> -> vector<8x32xf32>
    %c0_24 = arith.constant 0 : index
    %c0_25 = arith.constant 0 : index
    %c0_26 = arith.constant 0 : index
    %100 = vector.load %arg3[%c0_24, %c0_25, %c0_26] : memref<1x8x32xf32, #tpu.memory_space<vmem>>, vector<1x8x32xf32>
    %101 = vector.shape_cast %100 : vector<1x8x32xf32> to vector<8x32xf32>
    %102 = vector.shape_cast %99 : vector<8x32xf32> to vector<1x8x32xf32>
    tpu.vector_store %arg3[%c0_24, %c0_25, %c0_26], %102 {strides = array<i32>} : memref<1x8x32xf32, #tpu.memory_space<vmem>>, vector<1x8x32xf32>,
    return
  }
  func.func @transform_0(%arg0: i32) -> (i32, i32, i32) {
    %c0_i32 = arith.constant 0 : i32
    %c0_i32_0 = arith.constant 0 : i32
    %c0_i32_1 = arith.constant 0 : i32
    return %arg0, %c0_i32, %c0_i32_0 : i32, i32, i32
  }
  func.func @transform_1(%arg0: i32) -> (i32, i32, i32) {
    %c0_i32 = arith.constant 0 : i32
    %c0_i32_0 = arith.constant 0 : i32
    %c0_i32_1 = arith.constant 0 : i32
    return %arg0, %c0_i32, %c0_i32_0 : i32, i32, i32
  }
  func.func @transform_2(%arg0: i32) -> (i32, i32, i32) {
    %c0_i32 = arith.constant 0 : i32
    %c0_i32_0 = arith.constant 0 : i32
    %c0_i32_1 = arith.constant 0 : i32
    return %arg0, %c0_i32, %c0_i32_0 : i32, i32, i32
  }
}

module attributes {stable_mosaic.version = 11 : i64} {
  func.func @_cross_attn_kernel(%arg0: i32, %arg1: memref<1x8x32xf32, #tpu.memory_space<vmem>>, %arg2: memref<1x8x64xf32, #tpu.memory_space<vmem>>, %arg3: memref<1x1x8xf32, #tpu.memory_space<vmem>>, %arg4: memref<1x8x32xf32, #tpu.memory_space<vmem>>) attributes {dimension_semantics = [#tpu.dimension_semantics<parallel>], iteration_bounds = array<i64: 2>, scalar_prefetch = 0 : i64, scratch_operands = 0 : i64, tpu.core_type = #tpu.core_type<tc>, window_params = [{transform_indices = @transform_0, window_bounds = array<i64: 1, 8, 32>}, {transform_indices = @transform_1, window_bounds = array<i64: 1, 8, 64>}, {transform_indices = @transform_2, window_bounds = array<i64: 1, 1, 8>}, {transform_indices = @transform_3, window_bounds = array<i64: 1, 8, 32>}]} {
    %c0 = arith.constant 0 : index
    %c0_0 = arith.constant 0 : index
    %c0_1 = arith.constant 0 : index
    %0 = vector.load %arg2[%c0, %c0_0, %c0_1] : memref<1x8x64xf32, #tpu.memory_space<vmem>>, vector<1x8x64xf32>
    %1 = vector.shape_cast %0 : vector<1x8x64xf32> to vector<8x64xf32>
    %c0_2 = arith.constant 0 : index
    %c0_3 = arith.constant 0 : index
    %c0_4 = arith.constant 0 : index
    %2 = vector.load %arg1[%c0_2, %c0_3, %c0_4] : memref<1x8x32xf32, #tpu.memory_space<vmem>>, vector<1x8x32xf32>
    %3 = vector.shape_cast %2 : vector<1x8x32xf32> to vector<8x32xf32>
    %4 = vector.extract_strided_slice %1 {offsets = [0, 0], sizes = [8, 32], strides = [1, 1]} : vector<8x64xf32> to vector<8x32xf32>
    %5 = vector.extract_strided_slice %1 {offsets = [0, 32], sizes = [8, 32], strides = [1, 1]} : vector<8x64xf32> to vector<8x32xf32>
    %c0_5 = arith.constant 0 : index
    %c0_6 = arith.constant 0 : index
    %c0_7 = arith.constant 0 : index
    %6 = vector.load %arg3[%c0_5, %c0_6, %c0_7] : memref<1x1x8xf32, #tpu.memory_space<vmem>>, vector<1x1x8xf32>
    %7 = vector.shape_cast %6 : vector<1x1x8xf32> to vector<1x8xf32>
    %8 = vector.extract_strided_slice %3 {offsets = [0, 0], sizes = [8, 8], strides = [1, 1]} : vector<8x32xf32> to vector<8x8xf32>
    %9 = arith.truncf %8 : vector<8x8xf32> to vector<8x8xbf16>
    %10 = vector.extract_strided_slice %4 {offsets = [0, 0], sizes = [8, 8], strides = [1, 1]} : vector<8x32xf32> to vector<8x8xf32>
    %11 = arith.truncf %10 : vector<8x8xf32> to vector<8x8xbf16>
    %12 = vector.extract_strided_slice %5 {offsets = [0, 0], sizes = [8, 8], strides = [1, 1]} : vector<8x32xf32> to vector<8x8xf32>
    %13 = arith.truncf %12 : vector<8x8xf32> to vector<8x8xbf16>
    %cst = arith.constant dense<0.000000e+00> : vector<8x8xf32>
    %14 = tpu.matmul %9, %11, %cst {dimension_numbers = #tpu.dot_dimension_numbers<[1], [1], [0], [0], [0, 0, 1, 0], [], []>} : vector<8x8xbf16>, vector<8x8xbf16>, vector<8x8xf32> -> vector<8x8xf32>
    %cst_8 = arith.constant 0.353553385 : f32
    %15 = vector.broadcast %cst_8 : f32 to vector<8x8xf32>
    %16 = arith.mulf %14, %15 : vector<8x8xf32>
    %17 = vector.broadcast %7 : vector<1x8xf32> to vector<8x8xf32>
    %18 = arith.addf %16, %17 : vector<8x8xf32>
    %cst_9 = arith.constant dense<0xFF800000> : vector<8xf32>
    %19 = vector.multi_reduction <maximumf>, %18, %cst_9 [1] : vector<8x8xf32> to vector<8xf32>
    %20 = vector.shape_cast %19 : vector<8xf32> to vector<8x1xf32>
    %21 = vector.broadcast %20 : vector<8x1xf32> to vector<8x8xf32>
    %22 = arith.subf %18, %21 : vector<8x8xf32>
    %23 = math.exp %22 : vector<8x8xf32>
    %cst_10 = arith.constant dense<0.000000e+00> : vector<8xf32>
    %24 = vector.multi_reduction <add>, %23, %cst_10 [1] : vector<8x8xf32> to vector<8xf32>
    %25 = vector.shape_cast %24 : vector<8xf32> to vector<8x1xf32>
    %26 = tpu.reciprocal %25 {approx = true} : vector<8x1xf32> -> vector<8x1xf32>
    %27 = vector.broadcast %26 : vector<8x1xf32> to vector<8x8xf32>
    %28 = arith.mulf %23, %27 : vector<8x8xf32>
    %29 = arith.truncf %28 : vector<8x8xf32> to vector<8x8xbf16>
    %cst_11 = arith.constant dense<0.000000e+00> : vector<8x8xf32>
    %30 = tpu.matmul %29, %13, %cst_11 {dimension_numbers = #tpu.dot_dimension_numbers<[1], [0], [0], [1], [0, 0, 1, 1], [], []>} : vector<8x8xbf16>, vector<8x8xbf16>, vector<8x8xf32> -> vector<8x8xf32>
    %31 = vector.extract_strided_slice %3 {offsets = [0, 8], sizes = [8, 8], strides = [1, 1]} : vector<8x32xf32> to vector<8x8xf32>
    %32 = arith.truncf %31 : vector<8x8xf32> to vector<8x8xbf16>
    %33 = vector.extract_strided_slice %4 {offsets = [0, 8], sizes = [8, 8], strides = [1, 1]} : vector<8x32xf32> to vector<8x8xf32>
    %34 = arith.truncf %33 : vector<8x8xf32> to vector<8x8xbf16>
    %35 = vector.extract_strided_slice %5 {offsets = [0, 8], sizes = [8, 8], strides = [1, 1]} : vector<8x32xf32> to vector<8x8xf32>
    %36 = arith.truncf %35 : vector<8x8xf32> to vector<8x8xbf16>
    %cst_12 = arith.constant dense<0.000000e+00> : vector<8x8xf32>
    %37 = tpu.matmul %32, %34, %cst_12 {dimension_numbers = #tpu.dot_dimension_numbers<[1], [1], [0], [0], [0, 0, 1, 0], [], []>} : vector<8x8xbf16>, vector<8x8xbf16>, vector<8x8xf32> -> vector<8x8xf32>
    %cst_13 = arith.constant 0.353553385 : f32
    %38 = vector.broadcast %cst_13 : f32 to vector<8x8xf32>
    %39 = arith.mulf %37, %38 : vector<8x8xf32>
    %40 = vector.broadcast %7 : vector<1x8xf32> to vector<8x8xf32>
    %41 = arith.addf %39, %40 : vector<8x8xf32>
    %cst_14 = arith.constant dense<0xFF800000> : vector<8xf32>
    %42 = vector.multi_reduction <maximumf>, %41, %cst_14 [1] : vector<8x8xf32> to vector<8xf32>
    %43 = vector.shape_cast %42 : vector<8xf32> to vector<8x1xf32>
    %44 = vector.broadcast %43 : vector<8x1xf32> to vector<8x8xf32>
    %45 = arith.subf %41, %44 : vector<8x8xf32>
    %46 = math.exp %45 : vector<8x8xf32>
    %cst_15 = arith.constant dense<0.000000e+00> : vector<8xf32>
    %47 = vector.multi_reduction <add>, %46, %cst_15 [1] : vector<8x8xf32> to vector<8xf32>
    %48 = vector.shape_cast %47 : vector<8xf32> to vector<8x1xf32>
    %49 = tpu.reciprocal %48 {approx = true} : vector<8x1xf32> -> vector<8x1xf32>
    %50 = vector.broadcast %49 : vector<8x1xf32> to vector<8x8xf32>
    %51 = arith.mulf %46, %50 : vector<8x8xf32>
    %52 = arith.truncf %51 : vector<8x8xf32> to vector<8x8xbf16>
    %cst_16 = arith.constant dense<0.000000e+00> : vector<8x8xf32>
    %53 = tpu.matmul %52, %36, %cst_16 {dimension_numbers = #tpu.dot_dimension_numbers<[1], [0], [0], [1], [0, 0, 1, 1], [], []>} : vector<8x8xbf16>, vector<8x8xbf16>, vector<8x8xf32> -> vector<8x8xf32>
    %54 = vector.extract_strided_slice %3 {offsets = [0, 16], sizes = [8, 8], strides = [1, 1]} : vector<8x32xf32> to vector<8x8xf32>
    %55 = arith.truncf %54 : vector<8x8xf32> to vector<8x8xbf16>
    %56 = vector.extract_strided_slice %4 {offsets = [0, 16], sizes = [8, 8], strides = [1, 1]} : vector<8x32xf32> to vector<8x8xf32>
    %57 = arith.truncf %56 : vector<8x8xf32> to vector<8x8xbf16>
    %58 = vector.extract_strided_slice %5 {offsets = [0, 16], sizes = [8, 8], strides = [1, 1]} : vector<8x32xf32> to vector<8x8xf32>
    %59 = arith.truncf %58 : vector<8x8xf32> to vector<8x8xbf16>
    %cst_17 = arith.constant dense<0.000000e+00> : vector<8x8xf32>
    %60 = tpu.matmul %55, %57, %cst_17 {dimension_numbers = #tpu.dot_dimension_numbers<[1], [1], [0], [0], [0, 0, 1, 0], [], []>} : vector<8x8xbf16>, vector<8x8xbf16>, vector<8x8xf32> -> vector<8x8xf32>
    %cst_18 = arith.constant 0.353553385 : f32
    %61 = vector.broadcast %cst_18 : f32 to vector<8x8xf32>
    %62 = arith.mulf %60, %61 : vector<8x8xf32>
    %63 = vector.broadcast %7 : vector<1x8xf32> to vector<8x8xf32>
    %64 = arith.addf %62, %63 : vector<8x8xf32>
    %cst_19 = arith.constant dense<0xFF800000> : vector<8xf32>
    %65 = vector.multi_reduction <maximumf>, %64, %cst_19 [1] : vector<8x8xf32> to vector<8xf32>
    %66 = vector.shape_cast %65 : vector<8xf32> to vector<8x1xf32>
    %67 = vector.broadcast %66 : vector<8x1xf32> to vector<8x8xf32>
    %68 = arith.subf %64, %67 : vector<8x8xf32>
    %69 = math.exp %68 : vector<8x8xf32>
    %cst_20 = arith.constant dense<0.000000e+00> : vector<8xf32>
    %70 = vector.multi_reduction <add>, %69, %cst_20 [1] : vector<8x8xf32> to vector<8xf32>
    %71 = vector.shape_cast %70 : vector<8xf32> to vector<8x1xf32>
    %72 = tpu.reciprocal %71 {approx = true} : vector<8x1xf32> -> vector<8x1xf32>
    %73 = vector.broadcast %72 : vector<8x1xf32> to vector<8x8xf32>
    %74 = arith.mulf %69, %73 : vector<8x8xf32>
    %75 = arith.truncf %74 : vector<8x8xf32> to vector<8x8xbf16>
    %cst_21 = arith.constant dense<0.000000e+00> : vector<8x8xf32>
    %76 = tpu.matmul %75, %59, %cst_21 {dimension_numbers = #tpu.dot_dimension_numbers<[1], [0], [0], [1], [0, 0, 1, 1], [], []>} : vector<8x8xbf16>, vector<8x8xbf16>, vector<8x8xf32> -> vector<8x8xf32>
    %77 = vector.extract_strided_slice %3 {offsets = [0, 24], sizes = [8, 8], strides = [1, 1]} : vector<8x32xf32> to vector<8x8xf32>
    %78 = arith.truncf %77 : vector<8x8xf32> to vector<8x8xbf16>
    %79 = vector.extract_strided_slice %4 {offsets = [0, 24], sizes = [8, 8], strides = [1, 1]} : vector<8x32xf32> to vector<8x8xf32>
    %80 = arith.truncf %79 : vector<8x8xf32> to vector<8x8xbf16>
    %81 = vector.extract_strided_slice %5 {offsets = [0, 24], sizes = [8, 8], strides = [1, 1]} : vector<8x32xf32> to vector<8x8xf32>
    %82 = arith.truncf %81 : vector<8x8xf32> to vector<8x8xbf16>
    %cst_22 = arith.constant dense<0.000000e+00> : vector<8x8xf32>
    %83 = tpu.matmul %78, %80, %cst_22 {dimension_numbers = #tpu.dot_dimension_numbers<[1], [1], [0], [0], [0, 0, 1, 0], [], []>} : vector<8x8xbf16>, vector<8x8xbf16>, vector<8x8xf32> -> vector<8x8xf32>
    %cst_23 = arith.constant 0.353553385 : f32
    %84 = vector.broadcast %cst_23 : f32 to vector<8x8xf32>
    %85 = arith.mulf %83, %84 : vector<8x8xf32>
    %86 = vector.broadcast %7 : vector<1x8xf32> to vector<8x8xf32>
    %87 = arith.addf %85, %86 : vector<8x8xf32>
    %cst_24 = arith.constant dense<0xFF800000> : vector<8xf32>
    %88 = vector.multi_reduction <maximumf>, %87, %cst_24 [1] : vector<8x8xf32> to vector<8xf32>
    %89 = vector.shape_cast %88 : vector<8xf32> to vector<8x1xf32>
    %90 = vector.broadcast %89 : vector<8x1xf32> to vector<8x8xf32>
    %91 = arith.subf %87, %90 : vector<8x8xf32>
    %92 = math.exp %91 : vector<8x8xf32>
    %cst_25 = arith.constant dense<0.000000e+00> : vector<8xf32>
    %93 = vector.multi_reduction <add>, %92, %cst_25 [1] : vector<8x8xf32> to vector<8xf32>
    %94 = vector.shape_cast %93 : vector<8xf32> to vector<8x1xf32>
    %95 = tpu.reciprocal %94 {approx = true} : vector<8x1xf32> -> vector<8x1xf32>
    %96 = vector.broadcast %95 : vector<8x1xf32> to vector<8x8xf32>
    %97 = arith.mulf %92, %96 : vector<8x8xf32>
    %98 = arith.truncf %97 : vector<8x8xf32> to vector<8x8xbf16>
    %cst_26 = arith.constant dense<0.000000e+00> : vector<8x8xf32>
    %99 = tpu.matmul %98, %82, %cst_26 {dimension_numbers = #tpu.dot_dimension_numbers<[1], [0], [0], [1], [0, 0, 1, 1], [], []>} : vector<8x8xbf16>, vector<8x8xbf16>, vector<8x8xf32> -> vector<8x8xf32>
    %100 = tpu.concatenate %30, %53, %76, %99 in 1 : vector<8x8xf32>, vector<8x8xf32>, vector<8x8xf32>, vector<8x8xf32> -> vector<8x32xf32>
    %c0_27 = arith.constant 0 : index
    %c0_28 = arith.constant 0 : index
    %c0_29 = arith.constant 0 : index
    %101 = vector.load %arg4[%c0_27, %c0_28, %c0_29] : memref<1x8x32xf32, #tpu.memory_space<vmem>>, vector<1x8x32xf32>
    %102 = vector.shape_cast %101 : vector<1x8x32xf32> to vector<8x32xf32>
    %103 = vector.shape_cast %100 : vector<8x32xf32> to vector<1x8x32xf32>
    tpu.vector_store %arg4[%c0_27, %c0_28, %c0_29], %103 {strides = array<i32>} : memref<1x8x32xf32, #tpu.memory_space<vmem>>, vector<1x8x32xf32>,
    return
  }
  func.func @transform_0(%arg0: i32) -> (i32, i32, i32) {
    %c0_i32 = arith.constant 0 : i32
    %c0_i32_0 = arith.constant 0 : i32
    %c0_i32_1 = arith.constant 0 : i32
    return %arg0, %c0_i32, %c0_i32_0 : i32, i32, i32
  }
  func.func @transform_1(%arg0: i32) -> (i32, i32, i32) {
    %c0_i32 = arith.constant 0 : i32
    %c0_i32_0 = arith.constant 0 : i32
    %c0_i32_1 = arith.constant 0 : i32
    return %arg0, %c0_i32, %c0_i32_0 : i32, i32, i32
  }
  func.func @transform_2(%arg0: i32) -> (i32, i32, i32) {
    %c0_i32 = arith.constant 0 : i32
    %c0_i32_0 = arith.constant 0 : i32
    %c0_i32_1 = arith.constant 0 : i32
    return %arg0, %c0_i32, %c0_i32_0 : i32, i32, i32
  }
  func.func @transform_3(%arg0: i32) -> (i32, i32, i32) {
    %c0_i32 = arith.constant 0 : i32
    %c0_i32_0 = arith.constant 0 : i32
    %c0_i32_1 = arith.constant 0 : i32
    return %arg0, %c0_i32, %c0_i32_0 : i32, i32, i32
  }
}

module attributes {stable_mosaic.version = 11 : i64} {
  func.func @_self_attn_kernel(%arg0: i32, %arg1: memref<1x8x96xf32, #tpu.memory_space<vmem>>, %arg2: memref<1x1x8xf32, #tpu.memory_space<vmem>>, %arg3: memref<1x8x32xf32, #tpu.memory_space<vmem>>) attributes {dimension_semantics = [#tpu.dimension_semantics<parallel>], iteration_bounds = array<i64: 2>, scalar_prefetch = 0 : i64, scratch_operands = 0 : i64, tpu.core_type = #tpu.core_type<tc>, window_params = [{transform_indices = @transform_0, window_bounds = array<i64: 1, 8, 96>}, {transform_indices = @transform_1, window_bounds = array<i64: 1, 1, 8>}, {transform_indices = @transform_2, window_bounds = array<i64: 1, 8, 32>}]} {
    %c0 = arith.constant 0 : index
    %c0_0 = arith.constant 0 : index
    %c0_1 = arith.constant 0 : index
    %0 = vector.load %arg1[%c0, %c0_0, %c0_1] : memref<1x8x96xf32, #tpu.memory_space<vmem>>, vector<1x8x96xf32>
    %1 = vector.shape_cast %0 : vector<1x8x96xf32> to vector<8x96xf32>
    %2 = vector.extract_strided_slice %1 {offsets = [0, 0], sizes = [8, 32], strides = [1, 1]} : vector<8x96xf32> to vector<8x32xf32>
    %3 = vector.extract_strided_slice %1 {offsets = [0, 32], sizes = [8, 32], strides = [1, 1]} : vector<8x96xf32> to vector<8x32xf32>
    %4 = vector.extract_strided_slice %1 {offsets = [0, 64], sizes = [8, 32], strides = [1, 1]} : vector<8x96xf32> to vector<8x32xf32>
    %c0_2 = arith.constant 0 : index
    %c0_3 = arith.constant 0 : index
    %c0_4 = arith.constant 0 : index
    %5 = vector.load %arg2[%c0_2, %c0_3, %c0_4] : memref<1x1x8xf32, #tpu.memory_space<vmem>>, vector<1x1x8xf32>
    %6 = vector.shape_cast %5 : vector<1x1x8xf32> to vector<1x8xf32>
    %7 = tpu.iota {dimensions = array<i32: 0>} : vector<8x8xi32>
    %8 = tpu.iota {dimensions = array<i32: 1>} : vector<8x8xi32>
    %9 = arith.cmpi sle, %8, %7 : vector<8x8xi32>
    %cst = arith.constant 0.000000e+00 : f32
    %cst_5 = arith.constant -1.000000e+09 : f32
    %10 = vector.broadcast %cst : f32 to vector<8x8xf32>
    %11 = vector.broadcast %cst_5 : f32 to vector<8x8xf32>
    %12 = arith.select %9, %10, %11 : vector<8x8xi1>, vector<8x8xf32>
    %13 = vector.extract_strided_slice %2 {offsets = [0, 0], sizes = [8, 8], strides = [1, 1]} : vector<8x32xf32> to vector<8x8xf32>
    %14 = arith.truncf %13 : vector<8x8xf32> to vector<8x8xbf16>
    %15 = vector.extract_strided_slice %3 {offsets = [0, 0], sizes = [8, 8], strides = [1, 1]} : vector<8x32xf32> to vector<8x8xf32>
    %16 = arith.truncf %15 : vector<8x8xf32> to vector<8x8xbf16>
    %17 = vector.extract_strided_slice %4 {offsets = [0, 0], sizes = [8, 8], strides = [1, 1]} : vector<8x32xf32> to vector<8x8xf32>
    %18 = arith.truncf %17 : vector<8x8xf32> to vector<8x8xbf16>
    %cst_6 = arith.constant dense<0.000000e+00> : vector<8x8xf32>
    %19 = tpu.matmul %14, %16, %cst_6 {dimension_numbers = #tpu.dot_dimension_numbers<[1], [1], [0], [0], [0, 0, 1, 0], [], []>} : vector<8x8xbf16>, vector<8x8xbf16>, vector<8x8xf32> -> vector<8x8xf32>
    %cst_7 = arith.constant 0.353553385 : f32
    %20 = vector.broadcast %cst_7 : f32 to vector<8x8xf32>
    %21 = arith.mulf %19, %20 : vector<8x8xf32>
    %22 = vector.broadcast %6 : vector<1x8xf32> to vector<8x8xf32>
    %23 = arith.addf %21, %22 : vector<8x8xf32>
    %24 = arith.addf %23, %12 : vector<8x8xf32>
    %cst_8 = arith.constant dense<0xFF800000> : vector<8xf32>
    %25 = vector.multi_reduction <maximumf>, %24, %cst_8 [1] : vector<8x8xf32> to vector<8xf32>
    %26 = vector.shape_cast %25 : vector<8xf32> to vector<8x1xf32>
    %27 = vector.broadcast %26 : vector<8x1xf32> to vector<8x8xf32>
    %28 = arith.subf %24, %27 : vector<8x8xf32>
    %29 = math.exp %28 : vector<8x8xf32>
    %cst_9 = arith.constant dense<0.000000e+00> : vector<8xf32>
    %30 = vector.multi_reduction <add>, %29, %cst_9 [1] : vector<8x8xf32> to vector<8xf32>
    %31 = vector.shape_cast %30 : vector<8xf32> to vector<8x1xf32>
    %32 = tpu.reciprocal %31 {approx = true} : vector<8x1xf32> -> vector<8x1xf32>
    %33 = vector.broadcast %32 : vector<8x1xf32> to vector<8x8xf32>
    %34 = arith.mulf %29, %33 : vector<8x8xf32>
    %35 = arith.truncf %34 : vector<8x8xf32> to vector<8x8xbf16>
    %cst_10 = arith.constant dense<0.000000e+00> : vector<8x8xf32>
    %36 = tpu.matmul %35, %18, %cst_10 {dimension_numbers = #tpu.dot_dimension_numbers<[1], [0], [0], [1], [0, 0, 1, 1], [], []>} : vector<8x8xbf16>, vector<8x8xbf16>, vector<8x8xf32> -> vector<8x8xf32>
    %37 = vector.extract_strided_slice %2 {offsets = [0, 8], sizes = [8, 8], strides = [1, 1]} : vector<8x32xf32> to vector<8x8xf32>
    %38 = arith.truncf %37 : vector<8x8xf32> to vector<8x8xbf16>
    %39 = vector.extract_strided_slice %3 {offsets = [0, 8], sizes = [8, 8], strides = [1, 1]} : vector<8x32xf32> to vector<8x8xf32>
    %40 = arith.truncf %39 : vector<8x8xf32> to vector<8x8xbf16>
    %41 = vector.extract_strided_slice %4 {offsets = [0, 8], sizes = [8, 8], strides = [1, 1]} : vector<8x32xf32> to vector<8x8xf32>
    %42 = arith.truncf %41 : vector<8x8xf32> to vector<8x8xbf16>
    %cst_11 = arith.constant dense<0.000000e+00> : vector<8x8xf32>
    %43 = tpu.matmul %38, %40, %cst_11 {dimension_numbers = #tpu.dot_dimension_numbers<[1], [1], [0], [0], [0, 0, 1, 0], [], []>} : vector<8x8xbf16>, vector<8x8xbf16>, vector<8x8xf32> -> vector<8x8xf32>
    %cst_12 = arith.constant 0.353553385 : f32
    %44 = vector.broadcast %cst_12 : f32 to vector<8x8xf32>
    %45 = arith.mulf %43, %44 : vector<8x8xf32>
    %46 = vector.broadcast %6 : vector<1x8xf32> to vector<8x8xf32>
    %47 = arith.addf %45, %46 : vector<8x8xf32>
    %48 = arith.addf %47, %12 : vector<8x8xf32>
    %cst_13 = arith.constant dense<0xFF800000> : vector<8xf32>
    %49 = vector.multi_reduction <maximumf>, %48, %cst_13 [1] : vector<8x8xf32> to vector<8xf32>
    %50 = vector.shape_cast %49 : vector<8xf32> to vector<8x1xf32>
    %51 = vector.broadcast %50 : vector<8x1xf32> to vector<8x8xf32>
    %52 = arith.subf %48, %51 : vector<8x8xf32>
    %53 = math.exp %52 : vector<8x8xf32>
    %cst_14 = arith.constant dense<0.000000e+00> : vector<8xf32>
    %54 = vector.multi_reduction <add>, %53, %cst_14 [1] : vector<8x8xf32> to vector<8xf32>
    %55 = vector.shape_cast %54 : vector<8xf32> to vector<8x1xf32>
    %56 = tpu.reciprocal %55 {approx = true} : vector<8x1xf32> -> vector<8x1xf32>
    %57 = vector.broadcast %56 : vector<8x1xf32> to vector<8x8xf32>
    %58 = arith.mulf %53, %57 : vector<8x8xf32>
    %59 = arith.truncf %58 : vector<8x8xf32> to vector<8x8xbf16>
    %cst_15 = arith.constant dense<0.000000e+00> : vector<8x8xf32>
    %60 = tpu.matmul %59, %42, %cst_15 {dimension_numbers = #tpu.dot_dimension_numbers<[1], [0], [0], [1], [0, 0, 1, 1], [], []>} : vector<8x8xbf16>, vector<8x8xbf16>, vector<8x8xf32> -> vector<8x8xf32>
    %61 = vector.extract_strided_slice %2 {offsets = [0, 16], sizes = [8, 8], strides = [1, 1]} : vector<8x32xf32> to vector<8x8xf32>
    %62 = arith.truncf %61 : vector<8x8xf32> to vector<8x8xbf16>
    %63 = vector.extract_strided_slice %3 {offsets = [0, 16], sizes = [8, 8], strides = [1, 1]} : vector<8x32xf32> to vector<8x8xf32>
    %64 = arith.truncf %63 : vector<8x8xf32> to vector<8x8xbf16>
    %65 = vector.extract_strided_slice %4 {offsets = [0, 16], sizes = [8, 8], strides = [1, 1]} : vector<8x32xf32> to vector<8x8xf32>
    %66 = arith.truncf %65 : vector<8x8xf32> to vector<8x8xbf16>
    %cst_16 = arith.constant dense<0.000000e+00> : vector<8x8xf32>
    %67 = tpu.matmul %62, %64, %cst_16 {dimension_numbers = #tpu.dot_dimension_numbers<[1], [1], [0], [0], [0, 0, 1, 0], [], []>} : vector<8x8xbf16>, vector<8x8xbf16>, vector<8x8xf32> -> vector<8x8xf32>
    %cst_17 = arith.constant 0.353553385 : f32
    %68 = vector.broadcast %cst_17 : f32 to vector<8x8xf32>
    %69 = arith.mulf %67, %68 : vector<8x8xf32>
    %70 = vector.broadcast %6 : vector<1x8xf32> to vector<8x8xf32>
    %71 = arith.addf %69, %70 : vector<8x8xf32>
    %72 = arith.addf %71, %12 : vector<8x8xf32>
    %cst_18 = arith.constant dense<0xFF800000> : vector<8xf32>
    %73 = vector.multi_reduction <maximumf>, %72, %cst_18 [1] : vector<8x8xf32> to vector<8xf32>
    %74 = vector.shape_cast %73 : vector<8xf32> to vector<8x1xf32>
    %75 = vector.broadcast %74 : vector<8x1xf32> to vector<8x8xf32>
    %76 = arith.subf %72, %75 : vector<8x8xf32>
    %77 = math.exp %76 : vector<8x8xf32>
    %cst_19 = arith.constant dense<0.000000e+00> : vector<8xf32>
    %78 = vector.multi_reduction <add>, %77, %cst_19 [1] : vector<8x8xf32> to vector<8xf32>
    %79 = vector.shape_cast %78 : vector<8xf32> to vector<8x1xf32>
    %80 = tpu.reciprocal %79 {approx = true} : vector<8x1xf32> -> vector<8x1xf32>
    %81 = vector.broadcast %80 : vector<8x1xf32> to vector<8x8xf32>
    %82 = arith.mulf %77, %81 : vector<8x8xf32>
    %83 = arith.truncf %82 : vector<8x8xf32> to vector<8x8xbf16>
    %cst_20 = arith.constant dense<0.000000e+00> : vector<8x8xf32>
    %84 = tpu.matmul %83, %66, %cst_20 {dimension_numbers = #tpu.dot_dimension_numbers<[1], [0], [0], [1], [0, 0, 1, 1], [], []>} : vector<8x8xbf16>, vector<8x8xbf16>, vector<8x8xf32> -> vector<8x8xf32>
    %85 = vector.extract_strided_slice %2 {offsets = [0, 24], sizes = [8, 8], strides = [1, 1]} : vector<8x32xf32> to vector<8x8xf32>
    %86 = arith.truncf %85 : vector<8x8xf32> to vector<8x8xbf16>
    %87 = vector.extract_strided_slice %3 {offsets = [0, 24], sizes = [8, 8], strides = [1, 1]} : vector<8x32xf32> to vector<8x8xf32>
    %88 = arith.truncf %87 : vector<8x8xf32> to vector<8x8xbf16>
    %89 = vector.extract_strided_slice %4 {offsets = [0, 24], sizes = [8, 8], strides = [1, 1]} : vector<8x32xf32> to vector<8x8xf32>
    %90 = arith.truncf %89 : vector<8x8xf32> to vector<8x8xbf16>
    %cst_21 = arith.constant dense<0.000000e+00> : vector<8x8xf32>
    %91 = tpu.matmul %86, %88, %cst_21 {dimension_numbers = #tpu.dot_dimension_numbers<[1], [1], [0], [0], [0, 0, 1, 0], [], []>} : vector<8x8xbf16>, vector<8x8xbf16>, vector<8x8xf32> -> vector<8x8xf32>
    %cst_22 = arith.constant 0.353553385 : f32
    %92 = vector.broadcast %cst_22 : f32 to vector<8x8xf32>
    %93 = arith.mulf %91, %92 : vector<8x8xf32>
    %94 = vector.broadcast %6 : vector<1x8xf32> to vector<8x8xf32>
    %95 = arith.addf %93, %94 : vector<8x8xf32>
    %96 = arith.addf %95, %12 : vector<8x8xf32>
    %cst_23 = arith.constant dense<0xFF800000> : vector<8xf32>
    %97 = vector.multi_reduction <maximumf>, %96, %cst_23 [1] : vector<8x8xf32> to vector<8xf32>
    %98 = vector.shape_cast %97 : vector<8xf32> to vector<8x1xf32>
    %99 = vector.broadcast %98 : vector<8x1xf32> to vector<8x8xf32>
    %100 = arith.subf %96, %99 : vector<8x8xf32>
    %101 = math.exp %100 : vector<8x8xf32>
    %cst_24 = arith.constant dense<0.000000e+00> : vector<8xf32>
    %102 = vector.multi_reduction <add>, %101, %cst_24 [1] : vector<8x8xf32> to vector<8xf32>
    %103 = vector.shape_cast %102 : vector<8xf32> to vector<8x1xf32>
    %104 = tpu.reciprocal %103 {approx = true} : vector<8x1xf32> -> vector<8x1xf32>
    %105 = vector.broadcast %104 : vector<8x1xf32> to vector<8x8xf32>
    %106 = arith.mulf %101, %105 : vector<8x8xf32>
    %107 = arith.truncf %106 : vector<8x8xf32> to vector<8x8xbf16>
    %cst_25 = arith.constant dense<0.000000e+00> : vector<8x8xf32>
    %108 = tpu.matmul %107, %90, %cst_25 {dimension_numbers = #tpu.dot_dimension_numbers<[1], [0], [0], [1], [0, 0, 1, 1], [], []>} : vector<8x8xbf16>, vector<8x8xbf16>, vector<8x8xf32> -> vector<8x8xf32>
    %109 = tpu.concatenate %36, %60, %84, %108 in 1 : vector<8x8xf32>, vector<8x8xf32>, vector<8x8xf32>, vector<8x8xf32> -> vector<8x32xf32>
    %c0_26 = arith.constant 0 : index
    %c0_27 = arith.constant 0 : index
    %c0_28 = arith.constant 0 : index
    %110 = vector.load %arg3[%c0_26, %c0_27, %c0_28] : memref<1x8x32xf32, #tpu.memory_space<vmem>>, vector<1x8x32xf32>
    %111 = vector.shape_cast %110 : vector<1x8x32xf32> to vector<8x32xf32>
    %112 = vector.shape_cast %109 : vector<8x32xf32> to vector<1x8x32xf32>
    tpu.vector_store %arg3[%c0_26, %c0_27, %c0_28], %112 {strides = array<i32>} : memref<1x8x32xf32, #tpu.memory_space<vmem>>, vector<1x8x32xf32>,
    return
  }
  func.func @transform_0(%arg0: i32) -> (i32, i32, i32) {
    %c0_i32 = arith.constant 0 : i32
    %c0_i32_0 = arith.constant 0 : i32
    %c0_i32_1 = arith.constant 0 : i32
    return %arg0, %c0_i32, %c0_i32_0 : i32, i32, i32
  }
  func.func @transform_1(%arg0: i32) -> (i32, i32, i32) {
    %c0_i32 = arith.constant 0 : i32
    %c0_i32_0 = arith.constant 0 : i32
    %c0_i32_1 = arith.constant 0 : i32
    return %arg0, %c0_i32, %c0_i32_0 : i32, i32, i32
  }
  func.func @transform_2(%arg0: i32) -> (i32, i32, i32) {
    %c0_i32 = arith.constant 0 : i32
    %c0_i32_0 = arith.constant 0 : i32
    %c0_i32_1 = arith.constant 0 : i32
    return %arg0, %c0_i32, %c0_i32_0 : i32, i32, i32
  }
}

</mosaic_0001>

<llo_original>
// kernel: _lambda_.35
$region0: #{_lambda_.35}
  #allocation0 [shape = 'u32[]', space=smem, size = 0x4, offset = 0x4, fixed_abs, tag = 'smem constant byte address 0x4 - core index']
  #allocation1 [shape = 'u32[144,128]{1,0:T(1,128)}', space=vmem, size = 0x12000, scoped, tag = 'internal scratch']
  #allocation2 [shape = 'f32[16,128]{1,0:T(8,128)}', space=vmem, size = 0x2000, scoped, tag = 'scratch operand']
  %s0 = inlined_call_operand.vmem [shape: f32[16,32], index: 0, kind: input, shape index: {}]
  %s1 = inlined_call_operand.vmem [shape: bf16[32,128], index: 1, kind: input, shape index: {}]
  %s2 = inlined_call_operand.vmem [shape: f32[1,128], index: 2, kind: input, shape index: {}]
  %s3 = inlined_call_operand.vmem [shape: f32[16,128], index: 3, kind: output, shape index: {}]
  %s4 = sld [smem:[#allocation0]]
  $region30: #{_lambda_.35} parent=0
    _
  %s6 = ssub.s32 1, %s4
  %s7 = scalar_select 0, %s6, %s4
  // Predicated region
  $region2: #{_lambda_.35} parent=0 // pred_check
    _
  $region3: #{_lambda_.35} parent=0 // pred_check_branch
    %9 = sbr.rel (0) target = $region5
  $region4: #{_lambda_.35} parent=0 // pred_region
    _
  $region5: #{_lambda_.35} parent=0 // pred_fallthru
    _
  // Predicated region
  $region6: #{_lambda_.35} parent=0 // pred_check
    _
  $region7: #{_lambda_.35} parent=0 // pred_check_branch
    %11 = sbr.rel (0) target = $region9
  $region8: #{_lambda_.35} parent=0 // pred_region
    _
  $region9: #{_lambda_.35} parent=0 // pred_fallthru
    _
  // Predicated region
  $region10: #{_lambda_.35} parent=0 // pred_check
    _
  $region11: #{_lambda_.35} parent=0 // pred_check_branch
    %13 = sbr.rel (0) target = $region13
  $region12: #{_lambda_.35} parent=0 // pred_region
    _
  $region13: #{_lambda_.35} parent=0 // pred_fallthru
    _
  %p15 = scmp.eq.s32.totalorder 0, 0
  // Predicated region
  $region14: #{_lambda_.35} parent=0 // pred_check
    %p16 = pneg %p15
  $region15: #{_lambda_.35} parent=0 // pred_check_branch
    %18 = sbr.rel (%p16) target = $region17
  $region16: #{_lambda_.35} parent=0 // pred_region
    %19 = vst [vmem:[#allocation2] sm:$0xff] 0.0
    %20 = vst [vmem:[#allocation2 + $0x8] sm:$0xff] 0.0
  $region17: #{_lambda_.35} parent=0 // pred_fallthru
    _
  %v21 = vld [vmem:[#allocation2] sm:$0xff]
  %v22 = vld [vmem:[#allocation2 + $0x8] sm:$0xff]
  %v23 = vld [vmem:[%s0] sm:$0xff]
  %v24 = vld [vmem:[%s0 + $0x8] sm:$0xff]
  %v25 = vpack.c.bf16 %v24, %v23
  %v26 = vld [vmem:[%s1] sm:$0xf]
  %v27 = vld [vmem:[%s1 + $0x4] sm:$0xf]
  %v28 = vld [vmem:[%s1 + $0x8] sm:$0xf]
  %v29 = vld [vmem:[%s1 + $0xc] sm:$0xf]
  %v34 = vunpack.c.l.b16 %v26
  %v35 = vunpack.c.l.b16 %v27
  %v36 = vunpack.c.l.b16 %v28
  %v37 = vunpack.c.l.b16 %v29
  %v38 = vpack.c.b16 %v35, %v34
  %v39 = vpack.c.b16 %v37, %v36
  %vm42 = vcmask 261120
  %v44 = vsel %vm42, %v25, 0
  %46 = vmatprep.subr.bf16.mxu0 0
  %47 = vmatpush1.bf16.msra.mxu0 %v38
  %48 = vmatprep.subr.bf16.mxu0 0
  %49 = vmatpush1.bf16.msra.mxu0 %v39
  %50 = vmatprep.subr.bf16.mxu0 0
  %51 = vmatpush1.bf16.msra.mxu0 0
  %52 = vmatprep.subr.bf16.mxu0 0
  %53 = vmatpush1.bf16.msra.mxu0 0
  %54 = vmatprep.subr.bf16.mxu0 0
  %55 = vmatpush1.bf16.msra.mxu0 0
  %56 = vmatprep.subr.bf16.mxu0 0
  %57 = vmatpush1.bf16.msra.mxu0 0
  %58 = vmatprep.subr.bf16.mxu0 0
  %59 = vmatpush1.bf16.msra.mxu0 0
  %60 = vmatprep.subr.bf16.mxu0 0
  %61 = vmatpush1.bf16.msra.mxu0 0
  %62 = vmatprep.subr.bf16.mxu0 0
  %63 = vmatpush1.bf16.msra.mxu0 0
  %64 = vmatprep.subr.bf16.mxu0 0
  %65 = vmatpush1.bf16.msra.mxu0 0
  %66 = vmatprep.subr.bf16.mxu0 0
  %67 = vmatpush1.bf16.msra.mxu0 0
  %68 = vmatprep.subr.bf16.mxu0 0
  %69 = vmatpush1.bf16.msra.mxu0 0
  %70 = vmatprep.subr.bf16.mxu0 0
  %71 = vmatpush1.bf16.msra.mxu0 0
  %72 = vmatprep.subr.bf16.mxu0 0
  %73 = vmatpush1.bf16.msra.mxu0 0
  %74 = vmatprep.subr.bf16.mxu0 0
  %75 = vmatpush1.bf16.msra.mxu0 0
  %76 = vmatprep.subr.bf16.mxu0 0
  %77 = vmatpush1.bf16.msra.mxu0 0
  %78 = vmatprep.mubr.bf16.mxu0 0
  %79 = vmatmul.mubr.bf16.gmra.mrb[0].mxu0 %v44
  %v80 = vpop.f32.mrb[0].mxu0
  %v81 = vadd.f32 0.0, %v80
  %v82 = vpop.f32.mrb[0].mxu0
  %v83 = vpop.f32.mrb[0].mxu0
  %v84 = vadd.f32 0.0, %v83
  %v85 = vpop.f32.mrb[0].mxu0
  %86 = vdwg.mxu0
  %v87 = vadd.f32 %v21, %v81
  %v88 = vadd.f32 %v22, %v84
  %89 = vst [vmem:[#allocation2] sm:$0xff] %v87
  %90 = vst [vmem:[#allocation2 + $0x8] sm:$0xff] %v88
  // Predicated region
  $region18: #{_lambda_.35} parent=0 // pred_check
    %p91 = pneg %p15
  $region19: #{_lambda_.35} parent=0 // pred_check_branch
    %93 = sbr.rel (%p91) target = $region21
  $region20: #{_lambda_.35} parent=0 // pred_region
    %v94 = vld [vmem:[#allocation2] sm:$0xff]
    %v95 = vld [vmem:[#allocation2 + $0x8] sm:$0xff]
    %v96 = vld [vmem:[%s2] sm:$0x1]
    %v98 = vlaneseq
    %v99 = vshrl.u32 %v98, 7
    %v100 = vsub.s32 0, %v99
    %v101 = vrot.slane %v96, %v100
    %v103 = vadd.f32 %v94, %v101
    %v104 = vadd.f32 %v95, %v101
    %105 = vst [vmem:[%s3] sm:$0xff] %v103
    %106 = vst [vmem:[%s3 + $0x8] sm:$0xff] %v104
  $region21: #{_lambda_.35} parent=0 // pred_fallthru
    _
  // Predicated region
  $region22: #{_lambda_.35} parent=0 // pred_check
    _
  $region23: #{_lambda_.35} parent=0 // pred_check_branch
    %108 = sbr.rel (0) target = $region25
  $region24: #{_lambda_.35} parent=0 // pred_region
    _
  $region25: #{_lambda_.35} parent=0 // pred_fallthru
    _
  // Predicated region
  $region26: #{_lambda_.35} parent=0 // pred_check
    _
  $region27: #{_lambda_.35} parent=0 // pred_check_branch
    %110 = sbr.rel (0) target = $region29
  $region28: #{_lambda_.35} parent=0 // pred_region
    _
  $region29: #{_lambda_.35} parent=0 // pred_fallthru
    _

// kernel: _lambda_.38
$region0: #{_lambda_.38}
  #allocation0 [shape = 'u32[]', space=smem, size = 0x4, offset = 0x4, fixed_abs, tag = 'smem constant byte address 0x4 - core index']
  #allocation1 [shape = 'u32[144,128]{1,0:T(1,128)}', space=vmem, size = 0x12000, scoped, tag = 'internal scratch']
  %s0 = inlined_call_operand.vmem [shape: f32[16,32], index: 0, kind: input, shape index: {}]
  %s1 = inlined_call_operand.vmem [shape: f32[16,32], index: 1, kind: input, shape index: {}]
  %s2 = inlined_call_operand.vmem [shape: f32[1,32], index: 2, kind: input, shape index: {}]
  %s3 = inlined_call_operand.vmem [shape: f32[1,32], index: 3, kind: input, shape index: {}]
  %s4 = inlined_call_operand.vmem [shape: f32[16,32], index: 4, kind: output, shape index: {}]
  %s5 = sld [smem:[#allocation0]]
  $region26: #{_lambda_.38} parent=0
    _
  %s7 = ssub.s32 1, %s5
  %s8 = scalar_select 0, %s7, %s5
  // Predicated region
  $region2: #{_lambda_.38} parent=0 // pred_check
    _
  $region3: #{_lambda_.38} parent=0 // pred_check_branch
    %10 = sbr.rel (0) target = $region5
  $region4: #{_lambda_.38} parent=0 // pred_region
    _
  $region5: #{_lambda_.38} parent=0 // pred_fallthru
    _
  // Predicated region
  $region6: #{_lambda_.38} parent=0 // pred_check
    _
  $region7: #{_lambda_.38} parent=0 // pred_check_branch
    %12 = sbr.rel (0) target = $region9
  $region8: #{_lambda_.38} parent=0 // pred_region
    _
  $region9: #{_lambda_.38} parent=0 // pred_fallthru
    _
  // Predicated region
  $region10: #{_lambda_.38} parent=0 // pred_check
    _
  $region11: #{_lambda_.38} parent=0 // pred_check_branch
    %14 = sbr.rel (0) target = $region13
  $region12: #{_lambda_.38} parent=0 // pred_region
    _
  $region13: #{_lambda_.38} parent=0 // pred_fallthru
    _
  // Predicated region
  $region14: #{_lambda_.38} parent=0 // pred_check
    _
  $region15: #{_lambda_.38} parent=0 // pred_check_branch
    %16 = sbr.rel (0) target = $region17
  $region16: #{_lambda_.38} parent=0 // pred_region
    _
  $region17: #{_lambda_.38} parent=0 // pred_fallthru
    _
  %v17 = vld [vmem:[%s0] sm:$0xff]
  %v18 = vld [vmem:[%s0 + $0x8] sm:$0xff]
  %v19 = vld [vmem:[%s1] sm:$0xff]
  %v20 = vld [vmem:[%s1 + $0x8] sm:$0xff]
  %v21 = vadd.f32 %v17, %v19
  %v22 = vadd.f32 %v18, %v20
  %vm23 = vcmask 261120
  %v24 = vsel %vm23, %v21, 0.0
  %25 = vadd.xlane.f32.xlu0 %v24
  %v26 = vpop.xlane.xlu0 %25
  %v27 = vsel %vm23, %v22, 0.0
  %28 = vadd.xlane.f32.xlu0 %v27
  %v29 = vpop.xlane.xlu0 %28
  %v30 = vrcp.pop 32.0
  %v31 = vmul.f32 %v26, %v30
  %v32 = vmul.f32 %v29, %v30
  %v33 = vsub.f32 %v21, %v31
  %v34 = vsub.f32 %v22, %v32
  %v35 = vmul.f32 %v33, %v33
  %v36 = vmul.f32 %v34, %v34
  %v37 = vsel %vm23, %v35, 0.0
  %38 = vadd.xlane.f32.xlu0 %v37
  %v39 = vpop.xlane.xlu0 %38
  %v40 = vsel %vm23, %v36, 0.0
  %41 = vadd.xlane.f32.xlu0 %v40
  %v42 = vpop.xlane.xlu0 %41
  %v43 = vmul.f32 %v39, %v30
  %v44 = vmul.f32 %v42, %v30
  %v45 = vadd.f32 %v43, 1e-05
  %v46 = vadd.f32 %v44, 1e-05
  %v47 = vrsqrt.pop %v45
  %v48 = vrsqrt.pop %v46
  %v49 = vmul.f32 %v33, %v47
  %v50 = vmul.f32 %v34, %v48
  %v51 = vld [vmem:[%s2] sm:$0x1]
  %v53 = vlaneseq
  %v54 = vshrl.u32 %v53, 7
  %v55 = vsub.s32 0, %v54
  %v56 = vrot.slane %v51, %v55
  %v58 = vmul.f32 %v49, %v56
  %v59 = vmul.f32 %v50, %v56
  %v60 = vld [vmem:[%s3] sm:$0x1]
  %v62 = vlaneseq
  %v63 = vshrl.u32 %v62, 7
  %v64 = vsub.s32 0, %v63
  %v65 = vrot.slane %v60, %v64
  %v67 = vadd.f32 %v58, %v65
  %v68 = vadd.f32 %v59, %v65
  %69 = vst.msk [vmem:[%s4] sm:$0xff] %vm23, %v67
  %70 = vst.msk [vmem:[%s4 + $0x8] sm:$0xff] %vm23, %v68
  // Predicated region
  $region18: #{_lambda_.38} parent=0 // pred_check
    _
  $region19: #{_lambda_.38} parent=0 // pred_check_branch
    %72 = sbr.rel (0) target = $region21
  $region20: #{_lambda_.38} parent=0 // pred_region
    _
  $region21: #{_lambda_.38} parent=0 // pred_fallthru
    _
  // Predicated region
  $region22: #{_lambda_.38} parent=0 // pred_check
    _
  $region23: #{_lambda_.38} parent=0 // pred_check_branch
    %74 = sbr.rel (0) target = $region25
  $region24: #{_lambda_.38} parent=0 // pred_region
    _
  $region25: #{_lambda_.38} parent=0 // pred_fallthru
    _

// kernel: _lambda_.39
$region0: #{_lambda_.39}
  #allocation0 [shape = 'u32[]', space=smem, size = 0x4, offset = 0x4, fixed_abs, tag = 'smem constant byte address 0x4 - core index']
  #allocation1 [shape = 'u32[144,128]{1,0:T(1,128)}', space=vmem, size = 0x12000, scoped, tag = 'internal scratch']
  %s0 = inlined_call_operand.vmem [shape: f32[16,32], index: 0, kind: input, shape index: {}]
  %s1 = inlined_call_operand.vmem [shape: bf16[32,128], index: 1, kind: input, shape index: {}]
  %s2 = inlined_call_operand.vmem [shape: f32[1,128], index: 2, kind: input, shape index: {}]
  %s3 = inlined_call_operand.vmem [shape: bf16[128,32], index: 3, kind: input, shape index: {}]
  %s4 = inlined_call_operand.vmem [shape: f32[1,32], index: 4, kind: input, shape index: {}]
  %s5 = inlined_call_operand.vmem [shape: f32[16,32], index: 5, kind: output, shape index: {}]
  %s6 = sld [smem:[#allocation0]]
  $region30: #{_lambda_.39} parent=0
    _
  %s8 = ssub.s32 1, %s6
  %s9 = scalar_select 0, %s8, %s6
  // Predicated region
  $region2: #{_lambda_.39} parent=0 // pred_check
    _
  $region3: #{_lambda_.39} parent=0 // pred_check_branch
    %11 = sbr.rel (0) target = $region5
  $region4: #{_lambda_.39} parent=0 // pred_region
    _
  $region5: #{_lambda_.39} parent=0 // pred_fallthru
    _
  // Predicated region
  $region6: #{_lambda_.39} parent=0 // pred_check
    _
  $region7: #{_lambda_.39} parent=0 // pred_check_branch
    %13 = sbr.rel (0) target = $region9
  $region8: #{_lambda_.39} parent=0 // pred_region
    _
  $region9: #{_lambda_.39} parent=0 // pred_fallthru
    _
  // Predicated region
  $region10: #{_lambda_.39} parent=0 // pred_check
    _
  $region11: #{_lambda_.39} parent=0 // pred_check_branch
    %15 = sbr.rel (0) target = $region13
  $region12: #{_lambda_.39} parent=0 // pred_region
    _
  $region13: #{_lambda_.39} parent=0 // pred_fallthru
    _
  // Predicated region
  $region14: #{_lambda_.39} parent=0 // pred_check
    _
  $region15: #{_lambda_.39} parent=0 // pred_check_branch
    %17 = sbr.rel (0) target = $region17
  $region16: #{_lambda_.39} parent=0 // pred_region
    _
  $region17: #{_lambda_.39} parent=0 // pred_fallthru
    _
  // Predicated region
  $region18: #{_lambda_.39} parent=0 // pred_check
    _
  $region19: #{_lambda_.39} parent=0 // pred_check_branch
    %19 = sbr.rel (0) target = $region21
  $region20: #{_lambda_.39} parent=0 // pred_region
    _
  $region21: #{_lambda_.39} parent=0 // pred_fallthru
    _
  %v21 = vld [vmem:[%s0] sm:$0xff]
  %v22 = vld [vmem:[%s0 + $0x8] sm:$0xff]
  %v23 = vpack.c.bf16 %v22, %v21
  %v24 = vld [vmem:[%s1] sm:$0xf]
  %v25 = vld [vmem:[%s1 + $0x4] sm:$0xf]
  %v26 = vld [vmem:[%s1 + $0x8] sm:$0xf]
  %v27 = vld [vmem:[%s1 + $0xc] sm:$0xf]
  %v28 = vld [vmem:[%s2] sm:$0x1]
  %v30 = vlaneseq
  %v31 = vshrl.u32 %v30, 7
  %v32 = vsub.s32 0, %v31
  %v33 = vrot.slane %v28, %v32
  %v39 = vunpack.c.l.b16 %v24
  %v40 = vunpack.c.l.b16 %v25
  %v41 = vunpack.c.l.b16 %v26
  %v42 = vunpack.c.l.b16 %v27
  %v43 = vpack.c.b16 %v40, %v39
  %v44 = vpack.c.b16 %v42, %v41
  %vm47 = vcmask 261120
  %v49 = vsel %vm47, %v23, 0
  %51 = vmatprep.subr.bf16.mxu0 0
  %52 = vmatpush1.bf16.msra.mxu0 %v43
  %53 = vmatprep.subr.bf16.mxu0 0
  %54 = vmatpush1.bf16.msra.mxu0 %v44
  %55 = vmatprep.subr.bf16.mxu0 0
  %56 = vmatpush1.bf16.msra.mxu0 0
  %57 = vmatprep.subr.bf16.mxu0 0
  %58 = vmatpush1.bf16.msra.mxu0 0
  %59 = vmatprep.subr.bf16.mxu0 0
  %60 = vmatpush1.bf16.msra.mxu0 0
  %61 = vmatprep.subr.bf16.mxu0 0
  %62 = vmatpush1.bf16.msra.mxu0 0
  %63 = vmatprep.subr.bf16.mxu0 0
  %64 = vmatpush1.bf16.msra.mxu0 0
  %65 = vmatprep.subr.bf16.mxu0 0
  %66 = vmatpush1.bf16.msra.mxu0 0
  %67 = vmatprep.subr.bf16.mxu0 0
  %68 = vmatpush1.bf16.msra.mxu0 0
  %69 = vmatprep.subr.bf16.mxu0 0
  %70 = vmatpush1.bf16.msra.mxu0 0
  %71 = vmatprep.subr.bf16.mxu0 0
  %72 = vmatpush1.bf16.msra.mxu0 0
  %73 = vmatprep.subr.bf16.mxu0 0
  %74 = vmatpush1.bf16.msra.mxu0 0
  %75 = vmatprep.subr.bf16.mxu0 0
  %76 = vmatpush1.bf16.msra.mxu0 0
  %77 = vmatprep.subr.bf16.mxu0 0
  %78 = vmatpush1.bf16.msra.mxu0 0
  %79 = vmatprep.subr.bf16.mxu0 0
  %80 = vmatpush1.bf16.msra.mxu0 0
  %81 = vmatprep.subr.bf16.mxu0 0
  %82 = vmatpush1.bf16.msra.mxu0 0
  %83 = vmatprep.mubr.bf16.mxu0 0
  %84 = vmatmul.mubr.bf16.gmra.mrb[0].mxu0 %v49
  %v85 = vpop.f32.mrb[0].mxu0
  %v86 = vadd.f32 %v33, %v85
  %v87 = vpop.f32.mrb[0].mxu0
  %v88 = vpop.f32.mrb[0].mxu0
  %v89 = vadd.f32 %v33, %v88
  %v90 = vpop.f32.mrb[0].mxu0
  %91 = vdwg.mxu0
  %v92 = vmax.f32 %v86, 0.0
  %v93 = vmax.f32 %v89, 0.0
  %v94 = vpack.c.bf16 %v93, %v92
  %v95 = vld [vmem:[%s3] sm:$0xf]
  %v96 = vld [vmem:[%s3 + $0x4] sm:$0xf]
  %v97 = vld [vmem:[%s3 + $0x8] sm:$0xf]
  %v98 = vld [vmem:[%s3 + $0xc] sm:$0xf]
  %v99 = vld [vmem:[%s3 + $0x10] sm:$0xf]
  %v100 = vld [vmem:[%s3 + $0x14] sm:$0xf]
  %v101 = vld [vmem:[%s3 + $0x18] sm:$0xf]
  %v102 = vld [vmem:[%s3 + $0x1c] sm:$0xf]
  %v103 = vld [vmem:[%s3 + $0x20] sm:$0xf]
  %v104 = vld [vmem:[%s3 + $0x24] sm:$0xf]
  %v105 = vld [vmem:[%s3 + $0x28] sm:$0xf]
  %v106 = vld [vmem:[%s3 + $0x2c] sm:$0xf]
  %v107 = vld [vmem:[%s3 + $0x30] sm:$0xf]
  %v108 = vld [vmem:[%s3 + $0x34] sm:$0xf]
  %v109 = vld [vmem:[%s3 + $0x38] sm:$0xf]
  %v110 = vld [vmem:[%s3 + $0x3c] sm:$0xf]
  %v111 = vld [vmem:[%s4] sm:$0x1]
  %v113 = vlaneseq
  %v114 = vshrl.u32 %v113, 7
  %v115 = vsub.s32 0, %v114
  %v116 = vrot.slane %v111, %v115
  %v134 = vunpack.c.l.b16 %v95
  %v135 = vunpack.c.l.b16 %v96
  %v136 = vunpack.c.l.b16 %v97
  %v137 = vunpack.c.l.b16 %v98
  %v138 = vunpack.c.l.b16 %v99
  %v139 = vunpack.c.l.b16 %v100
  %v140 = vunpack.c.l.b16 %v101
  %v141 = vunpack.c.l.b16 %v102
  %v142 = vunpack.c.l.b16 %v103
  %v143 = vunpack.c.l.b16 %v104
  %v144 = vunpack.c.l.b16 %v105
  %v145 = vunpack.c.l.b16 %v106
  %v146 = vunpack.c.l.b16 %v107
  %v147 = vunpack.c.l.b16 %v108
  %v148 = vunpack.c.l.b16 %v109
  %v149 = vunpack.c.l.b16 %v110
  %v150 = vpack.c.b16 %v135, %v134
  %v151 = vpack.c.b16 %v137, %v136
  %v152 = vpack.c.b16 %v139, %v138
  %v153 = vpack.c.b16 %v141, %v140
  %v154 = vpack.c.b16 %v143, %v142
  %v155 = vpack.c.b16 %v145, %v144
  %v156 = vpack.c.b16 %v147, %v146
  %v157 = vpack.c.b16 %v149, %v148
  %166 = vmatprep.subr.bf16.mxu0 0
  %167 = vmatpush1.bf16.msra.mxu0 %v150
  %168 = vmatprep.subr.bf16.mxu0 0
  %169 = vmatpush1.bf16.msra.mxu0 %v151
  %170 = vmatprep.subr.bf16.mxu0 0
  %171 = vmatpush1.bf16.msra.mxu0 %v152
  %172 = vmatprep.subr.bf16.mxu0 0
  %173 = vmatpush1.bf16.msra.mxu0 %v153
  %174 = vmatprep.subr.bf16.mxu0 0
  %175 = vmatpush1.bf16.msra.mxu0 %v154
  %176 = vmatprep.subr.bf16.mxu0 0
  %177 = vmatpush1.bf16.msra.mxu0 %v155
  %178 = vmatprep.subr.bf16.mxu0 0
  %179 = vmatpush1.bf16.msra.mxu0 %v156
  %180 = vmatprep.subr.bf16.mxu0 0
  %181 = vmatpush1.bf16.msra.mxu0 %v157
  %182 = vmatprep.subr.bf16.mxu0 0
  %183 = vmatpush1.bf16.msra.mxu0 0
  %184 = vmatprep.subr.bf16.mxu0 0
  %185 = vmatpush1.bf16.msra.mxu0 0
  %186 = vmatprep.subr.bf16.mxu0 0
  %187 = vmatpush1.bf16.msra.mxu0 0
  %188 = vmatprep.subr.bf16.mxu0 0
  %189 = vmatpush1.bf16.msra.mxu0 0
  %190 = vmatprep.subr.bf16.mxu0 0
  %191 = vmatpush1.bf16.msra.mxu0 0
  %192 = vmatprep.subr.bf16.mxu0 0
  %193 = vmatpush1.bf16.msra.mxu0 0
  %194 = vmatprep.subr.bf16.mxu0 0
  %195 = vmatpush1.bf16.msra.mxu0 0
  %196 = vmatprep.subr.bf16.mxu0 0
  %197 = vmatpush1.bf16.msra.mxu0 0
  %198 = vmatprep.mubr.bf16.mxu0 0
  %199 = vmatmul.mubr.bf16.gmra.mrb[0].mxu0 %v94
  %v200 = vpop.f32.mrb[0].mxu0
  %v201 = vadd.f32 %v116, %v200
  %v202 = vpop.f32.mrb[0].mxu0
  %v203 = vpop.f32.mrb[0].mxu0
  %v204 = vadd.f32 %v116, %v203
  %v205 = vpop.f32.mrb[0].mxu0
  %206 = vdwg.mxu0
  %207 = vst.msk [vmem:[%s5] sm:$0xff] %vm47, %v201
  %208 = vst.msk [vmem:[%s5 + $0x8] sm:$0xff] %vm47, %v204
  // Predicated region
  $region22: #{_lambda_.39} parent=0 // pred_check
    _
  $region23: #{_lambda_.39} parent=0 // pred_check_branch
    %210 = sbr.rel (0) target = $region25
  $region24: #{_lambda_.39} parent=0 // pred_region
    _
  $region25: #{_lambda_.39} parent=0 // pred_fallthru
    _
  // Predicated region
  $region26: #{_lambda_.39} parent=0 // pred_check
    _
  $region27: #{_lambda_.39} parent=0 // pred_check_branch
    %212 = sbr.rel (0) target = $region29
  $region28: #{_lambda_.39} parent=0 // pred_region
    _
  $region29: #{_lambda_.39} parent=0 // pred_fallthru
    _

// kernel: _lambda_.36
$region0: #{_lambda_.36}
  #allocation0 [shape = 'u32[]', space=smem, size = 0x4, offset = 0x4, fixed_abs, tag = 'smem constant byte address 0x4 - core index']
  #allocation1 [shape = 'u32[144,128]{1,0:T(1,128)}', space=vmem, size = 0x12000, scoped, tag = 'internal scratch']
  %s0 = inlined_call_operand.vmem [shape: f32[2,8,96], index: 0, kind: input, shape index: {}]
  %s1 = inlined_call_operand.vmem [shape: f32[2,1,8], index: 1, kind: input, shape index: {}]
  %s2 = inlined_call_operand.vmem [shape: f32[2,8,32], index: 2, kind: output, shape index: {}]
  %s3 = sld [smem:[#allocation0]]
  $region41: #{_lambda_.36} parent=0
    _
  %s5 = ssub.s32 1, %s3
  %s6 = scalar_select 0, %s5, %s3
  loop: start=0, step=1, limit=4
  $region2: #{_lambda_.36} parent=0 // loop_pre_header
    _
  $region3: #{_lambda_.36} parent=0 // loop_header
    %s8 = sphi 0, %s12
    %p9 = scmp.ge.s32.totalorder %s8, 4
    %s18 = sphi 0, %s20
    %s21 = sphi 0, %s18
    %s22 = sphi 0, %s21
    %s38 = sphi 0, %s22
    %s44 = sphi 0, %s46
    %s47 = sphi 0, %s44
    %s48 = sphi 0, %s47
    %s64 = sphi 0, %s48
    %s70 = sphi 0, %s72
    %s73 = sphi 0, %s70
    %s74 = sphi 0, %s73
    %s90 = sphi 0, %s74
  $region4: #{_lambda_.36} parent=0 // loop_header_branch
    %11 = sbr.rel (%p9) target = $region8
  $region5: #{_lambda_.36} parent=0 // loop_body
    %s13 = ssub.s32 %s8, 1
    %s14 = ssub.s32 %s8, 2
    %s15 = sadd.s32 %s8, 1
    %s16 = ssub.s32 %s8, %s15
    %p17 = scmp.eq.s32.totalorder %s16, 0
    %s19 = sadd.s32 %s18, 1
    %s20 = scalar_select %p17, %s18, %s19
    %p23 = pneg %p17
    %p24 = scmp.eq.s32.totalorder %s8, 1
    %p25 = por %p23, %p24
    %p26 = scmp.ne.s32.totalorder %s18, %s21
    %p27 = scmp.eq.s32.totalorder %s8, 0
    %p28 = por %p26, %p27
    %p29 = scmp.ne.s32.totalorder %s18, %s21
    %p30 = scmp.eq.s32.totalorder %s13, 1
    %p31 = por %p29, %p30
    %p32 = scmp.ne.s32.totalorder %s21, %s22
    %p33 = scmp.eq.s32.totalorder %s13, 0
    %p34 = por %p32, %p33
    %p35 = scmp.ne.s32.totalorder %s21, %s22
    %p36 = scmp.eq.s32.totalorder %s14, 1
    %p37 = por %p35, %p36
    %p39 = scmp.ne.s32.totalorder %s22, %s38
    %p40 = scmp.eq.s32.totalorder %s14, 0
    %p41 = por %p39, %p40
    %s42 = ssub.s32 %s8, %s15
    %p43 = scmp.eq.s32.totalorder %s42, 0
    %s45 = sadd.s32 %s44, 1
    %s46 = scalar_select %p43, %s44, %s45
    %p49 = pneg %p43
    %p50 = scmp.eq.s32.totalorder %s8, 1
    %p51 = por %p49, %p50
    %p52 = scmp.ne.s32.totalorder %s44, %s47
    %p53 = scmp.eq.s32.totalorder %s8, 0
    %p54 = por %p52, %p53
    %p55 = scmp.ne.s32.totalorder %s44, %s47
    %p56 = scmp.eq.s32.totalorder %s13, 1
    %p57 = por %p55, %p56
    %p58 = scmp.ne.s32.totalorder %s47, %s48
    %p59 = scmp.eq.s32.totalorder %s13, 0
    %p60 = por %p58, %p59
    %p61 = scmp.ne.s32.totalorder %s47, %s48
    %p62 = scmp.eq.s32.totalorder %s14, 1
    %p63 = por %p61, %p62
    %p65 = scmp.ne.s32.totalorder %s48, %s64
    %p66 = scmp.eq.s32.totalorder %s14, 0
    %p67 = por %p65, %p66
    %s68 = ssub.s32 %s8, %s15
    %p69 = scmp.eq.s32.totalorder %s68, 0
    %s71 = sadd.s32 %s70, 1
    %s72 = scalar_select %p69, %s70, %s71
    %p75 = pneg %p69
    %p76 = scmp.eq.s32.totalorder %s8, 1
    %p77 = por %p75, %p76
    %p78 = scmp.ne.s32.totalorder %s70, %s73
    %p79 = scmp.eq.s32.totalorder %s8, 0
    %p80 = por %p78, %p79
    %p81 = scmp.ne.s32.totalorder %s70, %s73
    %p82 = scmp.eq.s32.totalorder %s13, 1
    %p83 = por %p81, %p82
    %p84 = scmp.ne.s32.totalorder %s73, %s74
    %p85 = scmp.eq.s32.totalorder %s13, 0
    %p86 = por %p84, %p85
    %p87 = scmp.ne.s32.totalorder %s73, %s74
    %p88 = scmp.eq.s32.totalorder %s14, 1
    %p89 = por %p87, %p88
    %p91 = scmp.ne.s32.totalorder %s74, %s90
    %p92 = scmp.eq.s32.totalorder %s14, 0
    %p93 = por %p91, %p92
    %p94 = scmp.le.s32.totalorder 1, %s8
    %p95 = scmp.lt.s32.totalorder %s8, 3
    %p96 = pnand %p94, %p95
    %p97 = pneg %p96
    // Predicated region
    $region9: #{_lambda_.36} parent=5 // pred_check
      _
    $region10: #{_lambda_.36} parent=5 // pred_check_branch
      %99 = sbr.rel (%p96) target = $region12
    $region11: #{_lambda_.36} parent=5 // pred_region
      %s100 = ssub.s32 %s8, 1
    $region12: #{_lambda_.36} parent=5 // pred_fallthru
      _
    %p101 = scmp.lt.s32.totalorder %s8, 2
    // Predicated region
    $region13: #{_lambda_.36} parent=5 // pred_check
      %p102 = pneg %p101
    $region14: #{_lambda_.36} parent=5 // pred_check_branch
      %104 = sbr.rel (%p102) target = $region16
    $region15: #{_lambda_.36} parent=5 // pred_region
      // Predicated region
      $region17: #{_lambda_.36} parent=15 // pred_check
        %p105 = pneg %p28
      $region18: #{_lambda_.36} parent=15 // pred_check_branch
        %107 = sbr.rel (%p105) target = $region20
      $region19: #{_lambda_.36} parent=15 // pred_region
        %p108 = scmp.lt.s32.totalorder %s8, 1
        %s109 = scalar_select %p108, %s8, 1
        %s110 = smul.addr %s109, 8
        %s111 = scalar_lea.vmem %s0, %s110
      $region20: #{_lambda_.36} parent=15 // pred_fallthru
        _
      // Predicated region
      $region21: #{_lambda_.36} parent=15 // pred_check
        %p112 = pneg %p54
      $region22: #{_lambda_.36} parent=15 // pred_check_branch
        %114 = sbr.rel (%p112) target = $region24
      $region23: #{_lambda_.36} parent=15 // pred_region
        %p115 = scmp.lt.s32.totalorder %s8, 1
        %s116 = scalar_select %p115, %s8, 1
        %s117 = scalar_lea.vmem %s1, %s116
      $region24: #{_lambda_.36} parent=15 // pred_fallthru
        _
    $region16: #{_lambda_.36} parent=5 // pred_fallthru
      _
    %p118 = scmp.le.s32.totalorder 1, %s8
    %p119 = scmp.lt.s32.totalorder %s8, 3
    %p120 = pnand %p118, %p119
    %p121 = pneg %p120
    // Predicated region
    $region25: #{_lambda_.36} parent=5 // pred_check
      _
    $region26: #{_lambda_.36} parent=5 // pred_check_branch
      %123 = sbr.rel (%p120) target = $region28
    $region27: #{_lambda_.36} parent=5 // pred_region
      %s124 = ssub.s32 %s8, 1
      %p125 = scmp.lt.s32.totalorder %s13, 1
      %s126 = scalar_select %p125, %s13, 1
      %s127 = smul.addr %s126, 8
      %s128 = scalar_lea.vmem %s0, %s127
      %p129 = pneg %p34
      %p130 = pneg %p31
      %p131 = scmp.lt.s32.totalorder %s13, 1
      %s132 = scalar_select %p131, %s13, 1
      %s133 = scalar_lea.vmem %s1, %s132
      %p134 = pneg %p60
      %p135 = pneg %p57
      %p136 = pneg %p86
      %p137 = pneg %p83
      %p138 = scmp.lt.s32.totalorder %s13, 1
      %s139 = scalar_select %p138, %s13, 1
      %s140 = smul.addr %s139, 8
      %s141 = scalar_lea.vmem %s2, %s140
      %p142 = scmp.lt.s32.totalorder %s13, 1
      %s143 = scalar_select %p142, %s13, 1
      %s144 = smul.addr %s143, 8
      %s145 = scalar_lea.vmem %s0, %s144
      %p146 = scmp.lt.s32.totalorder %s13, 1
      %s147 = scalar_select %p146, %s13, 1
      %s148 = scalar_lea.vmem %s1, %s147
      %p149 = scmp.lt.s32.totalorder %s13, 1
      %s150 = scalar_select %p149, %s13, 1
      %s151 = smul.addr %s150, 8
      %s152 = scalar_lea.vmem %s2, %s151
      %v154 = vld [vmem:[%s145] sm:$0xff]
      %v155 = vld [vmem:[%s148] sm:$0x1]
      %v156 = vpack.c.bf16 %v154, %v154
      %158 = vrot.lane.b32.xlu0 %v156, 96
      %v159 = vpop.permute.xlu0 %158
      %vm160 = vcmask 64512
      %v162 = vsel %vm160, %v156, 0
      %v165 = vsel %vm160, %v159, 0
      %167 = vmatprep.subr.bf16.mxu0 0
      %168 = vmatpush1.bf16.xpose.msra.mxu0 %v165
      %169 = vmatprep.subr.bf16.mxu0 0
      %170 = vmatpush1.bf16.xpose.msra.mxu0 0
      %171 = vmatprep.subr.bf16.mxu0 0
      %172 = vmatpush1.bf16.xpose.msra.mxu0 0
      %173 = vmatprep.subr.bf16.mxu0 0
      %174 = vmatpush1.bf16.xpose.msra.mxu0 0
      %175 = vmatprep.subr.bf16.mxu0 0
      %176 = vmatpush1.bf16.xpose.msra.mxu0 0
      %177 = vmatprep.subr.bf16.mxu0 0
      %178 = vmatpush1.bf16.xpose.msra.mxu0 0
      %179 = vmatprep.subr.bf16.mxu0 0
      %180 = vmatpush1.bf16.xpose.msra.mxu0 0
      %181 = vmatprep.subr.bf16.mxu0 0
      %182 = vmatpush1.bf16.xpose.msra.mxu0 0
      %183 = vmatprep.subr.bf16.mxu0 0
      %184 = vmatpush1.bf16.xpose.msra.mxu0 0
      %185 = vmatprep.subr.bf16.mxu0 0
      %186 = vmatpush1.bf16.xpose.msra.mxu0 0
      %187 = vmatprep.subr.bf16.mxu0 0
      %188 = vmatpush1.bf16.xpose.msra.mxu0 0
      %189 = vmatprep.subr.bf16.mxu0 0
      %190 = vmatpush1.bf16.xpose.msra.mxu0 0
      %191 = vmatprep.subr.bf16.mxu0 0
      %192 = vmatpush1.bf16.xpose.msra.mxu0 0
      %193 = vmatprep.subr.bf16.mxu0 0
      %194 = vmatpush1.bf16.xpose.msra.mxu0 0
      %195 = vmatprep.subr.bf16.mxu0 0
      %196 = vmatpush1.bf16.xpose.msra.mxu0 0
      %197 = vmatprep.subr.bf16.mxu0 0
      %198 = vmatpush1.bf16.xpose.msra.mxu0 0
      %199 = vmatprep.mubr.bf16.mxu0 0
      %200 = vmatmul.mubr.bf16.gmra.mrb[0].mxu0 %v162
      %v201 = vpop.f32.mrb[0].mxu0
      %v202 = vadd.f32 0.0, %v201
      %v203 = vpop.f32.mrb[0].mxu0
      %v204 = vpop.f32.mrb[0].mxu0
      %v205 = vpop.f32.mrb[0].mxu0
      %206 = vdwg.mxu0
      %v207 = vmul.f32 %v202, 0.35355338
      %v209 = vlaneseq
      %v210 = vshrl.u32 %v209, 7
      %v211 = vsub.s32 0, %v210
      %v212 = vrot.slane %v155, %v211
      %v214 = vadd.f32 %v207, %v212
      %v215 = vsel %vm160, %v214, -inf
      %216 = vmax.xlane.f32.xlu0 %v215
      %v217 = vpop.xlane.xlu0 %216
      %v218 = vsub.f32 %v214, %v217
      %v219 = vmul.f32 %v218, 1.442695
      %v220 = vpow.pop %v219
      %v221 = vsel %vm160, %v220, 0.0
      %222 = vadd.xlane.f32.xlu0 %v221
      %v223 = vpop.xlane.xlu0 %222
      %v224 = vrcp.pop %v223
      %v225 = vmul.f32 %v220, %v224
      %v226 = vpack.c.bf16 %v225, %v225
      %227 = vrot.lane.b32.xlu0 %v156, 64
      %v228 = vpop.permute.xlu0 %227
      %v230 = vsel %vm160, %v226, 0
      %vm232 = vcmask 1043456
      %v234 = vsel %vm232, %v228, 0
      %236 = vmatprep.subr.bf16.mxu0 0
      %237 = vmatpush1.bf16.msra.mxu0 %v234
      %238 = vmatprep.subr.bf16.mxu0 0
      %239 = vmatpush1.bf16.msra.mxu0 0
      %240 = vmatprep.subr.bf16.mxu0 0
      %241 = vmatpush1.bf16.msra.mxu0 0
      %242 = vmatprep.subr.bf16.mxu0 0
      %243 = vmatpush1.bf16.msra.mxu0 0
      %244 = vmatprep.subr.bf16.mxu0 0
      %245 = vmatpush1.bf16.msra.mxu0 0
      %246 = vmatprep.subr.bf16.mxu0 0
      %247 = vmatpush1.bf16.msra.mxu0 0
      %248 = vmatprep.subr.bf16.mxu0 0
      %249 = vmatpush1.bf16.msra.mxu0 0
      %250 = vmatprep.subr.bf16.mxu0 0
      %251 = vmatpush1.bf16.msra.mxu0 0
      %252 = vmatprep.subr.bf16.mxu0 0
      %253 = vmatpush1.bf16.msra.mxu0 0
      %254 = vmatprep.subr.bf16.mxu0 0
      %255 = vmatpush1.bf16.msra.mxu0 0
      %256 = vmatprep.subr.bf16.mxu0 0
      %257 = vmatpush1.bf16.msra.mxu0 0
      %258 = vmatprep.subr.bf16.mxu0 0
      %259 = vmatpush1.bf16.msra.mxu0 0
      %260 = vmatprep.subr.bf16.mxu0 0
      %261 = vmatpush1.bf16.msra.mxu0 0
      %262 = vmatprep.subr.bf16.mxu0 0
      %263 = vmatpush1.bf16.msra.mxu0 0
      %264 = vmatprep.subr.bf16.mxu0 0
      %265 = vmatpush1.bf16.msra.mxu0 0
      %266 = vmatprep.subr.bf16.mxu0 0
      %267 = vmatpush1.bf16.msra.mxu0 0
      %268 = vmatprep.mubr.bf16.mxu0 0
      %269 = vmatmul.mubr.bf16.gmra.mrb[0].mxu0 %v230
      %v270 = vpop.f32.mrb[0].mxu0
      %v271 = vadd.f32 0.0, %v270
      %v272 = vpop.f32.mrb[0].mxu0
      %v273 = vpop.f32.mrb[0].mxu0
      %v274 = vpop.f32.mrb[0].mxu0
      %275 = vdwg.mxu0
      %276 = vrot.lane.b32.xlu0 %v156, 120
      %v277 = vpop.permute.xlu0 %276
      %278 = vrot.lane.b32.xlu0 %v156, 88
      %v279 = vpop.permute.xlu0 %278
      %v281 = vsel %vm160, %v277, 0
      %v284 = vsel %vm160, %v279, 0
      %286 = vmatprep.subr.bf16.mxu0 0
      %287 = vmatpush1.bf16.xpose.msra.mxu0 %v284
      %288 = vmatprep.subr.bf16.mxu0 0
      %289 = vmatpush1.bf16.xpose.msra.mxu0 0
      %290 = vmatprep.subr.bf16.mxu0 0
      %291 = vmatpush1.bf16.xpose.msra.mxu0 0
      %292 = vmatprep.subr.bf16.mxu0 0
      %293 = vmatpush1.bf16.xpose.msra.mxu0 0
      %294 = vmatprep.subr.bf16.mxu0 0
      %295 = vmatpush1.bf16.xpose.msra.mxu0 0
      %296 = vmatprep.subr.bf16.mxu0 0
      %297 = vmatpush1.bf16.xpose.msra.mxu0 0
      %298 = vmatprep.subr.bf16.mxu0 0
      %299 = vmatpush1.bf16.xpose.msra.mxu0 0
      %300 = vmatprep.subr.bf16.mxu0 0
      %301 = vmatpush1.bf16.xpose.msra.mxu0 0
      %302 = vmatprep.subr.bf16.mxu0 0
      %303 = vmatpush1.bf16.xpose.msra.mxu0 0
      %304 = vmatprep.subr.bf16.mxu0 0
      %305 = vmatpush1.bf16.xpose.msra.mxu0 0
      %306 = vmatprep.subr.bf16.mxu0 0
      %307 = vmatpush1.bf16.xpose.msra.mxu0 0
      %308 = vmatprep.subr.bf16.mxu0 0
      %309 = vmatpush1.bf16.xpose.msra.mxu0 0
      %310 = vmatprep.subr.bf16.mxu0 0
      %311 = vmatpush1.bf16.xpose.msra.mxu0 0
      %312 = vmatprep.subr.bf16.mxu0 0
      %313 = vmatpush1.bf16.xpose.msra.mxu0 0
      %314 = vmatprep.subr.bf16.mxu0 0
      %315 = vmatpush1.bf16.xpose.msra.mxu0 0
      %316 = vmatprep.subr.bf16.mxu0 0
      %317 = vmatpush1.bf16.xpose.msra.mxu0 0
      %318 = vmatprep.mubr.bf16.mxu0 0
      %319 = vmatmul.mubr.bf16.gmra.mrb[0].mxu0 %v281
      %v320 = vpop.f32.mrb[0].mxu0
      %v321 = vadd.f32 0.0, %v320
      %v322 = vpop.f32.mrb[0].mxu0
      %v323 = vpop.f32.mrb[0].mxu0
      %v324 = vpop.f32.mrb[0].mxu0
      %325 = vdwg.mxu0
      %v326 = vmul.f32 %v321, 0.35355338
      %v327 = vadd.f32 %v326, %v212
      %v328 = vsel %vm160, %v327, -inf
      %329 = vmax.xlane.f32.xlu0 %v328
      %v330 = vpop.xlane.xlu0 %329
      %v331 = vsub.f32 %v327, %v330
      %v332 = vmul.f32 %v331, 1.442695
      %v333 = vpow.pop %v332
      %v334 = vsel %vm160, %v333, 0.0
      %335 = vadd.xlane.f32.xlu0 %v334
      %v336 = vpop.xlane.xlu0 %335
      %v337 = vrcp.pop %v336
      %v338 = vmul.f32 %v333, %v337
      %v339 = vpack.c.bf16 %v338, %v338
      %340 = vrot.lane.b32.xlu0 %v156, 56
      %v341 = vpop.permute.xlu0 %340
      %v343 = vsel %vm160, %v339, 0
      %v346 = vsel %vm232, %v341, 0
      %348 = vmatprep.subr.bf16.mxu0 0
      %349 = vmatpush1.bf16.msra.mxu0 %v346
      %350 = vmatprep.subr.bf16.mxu0 0
      %351 = vmatpush1.bf16.msra.mxu0 0
      %352 = vmatprep.subr.bf16.mxu0 0
      %353 = vmatpush1.bf16.msra.mxu0 0
      %354 = vmatprep.subr.bf16.mxu0 0
      %355 = vmatpush1.bf16.msra.mxu0 0
      %356 = vmatprep.subr.bf16.mxu0 0
      %357 = vmatpush1.bf16.msra.mxu0 0
      %358 = vmatprep.subr.bf16.mxu0 0
      %359 = vmatpush1.bf16.msra.mxu0 0
      %360 = vmatprep.subr.bf16.mxu0 0
      %361 = vmatpush1.bf16.msra.mxu0 0
      %362 = vmatprep.subr.bf16.mxu0 0
      %363 = vmatpush1.bf16.msra.mxu0 0
      %364 = vmatprep.subr.bf16.mxu0 0
      %365 = vmatpush1.bf16.msra.mxu0 0
      %366 = vmatprep.subr.bf16.mxu0 0
      %367 = vmatpush1.bf16.msra.mxu0 0
      %368 = vmatprep.subr.bf16.mxu0 0
      %369 = vmatpush1.bf16.msra.mxu0 0
      %370 = vmatprep.subr.bf16.mxu0 0
      %371 = vmatpush1.bf16.msra.mxu0 0
      %372 = vmatprep.subr.bf16.mxu0 0
      %373 = vmatpush1.bf16.msra.mxu0 0
      %374 = vmatprep.subr.bf16.mxu0 0
      %375 = vmatpush1.bf16.msra.mxu0 0
      %376 = vmatprep.subr.bf16.mxu0 0
      %377 = vmatpush1.bf16.msra.mxu0 0
      %378 = vmatprep.subr.bf16.mxu0 0
      %379 = vmatpush1.bf16.msra.mxu0 0
      %380 = vmatprep.mubr.bf16.mxu0 0
      %381 = vmatmul.mubr.bf16.gmra.mrb[0].mxu0 %v343
      %v382 = vpop.f32.mrb[0].mxu0
      %v383 = vadd.f32 0.0, %v382
      %v384 = vpop.f32.mrb[0].mxu0
      %v385 = vpop.f32.mrb[0].mxu0
      %v386 = vpop.f32.mrb[0].mxu0
      %387 = vdwg.mxu0
      %388 = vrot.lane.b32.xlu0 %v156, 112
      %v389 = vpop.permute.xlu0 %388
      %390 = vrot.lane.b32.xlu0 %v156, 80
      %v391 = vpop.permute.xlu0 %390
      %v393 = vsel %vm160, %v389, 0
      %v396 = vsel %vm160, %v391, 0
      %398 = vmatprep.subr.bf16.mxu0 0
      %399 = vmatpush1.bf16.xpose.msra.mxu0 %v396
      %400 = vmatprep.subr.bf16.mxu0 0
      %401 = vmatpush1.bf16.xpose.msra.mxu0 0
      %402 = vmatprep.subr.bf16.mxu0 0
      %403 = vmatpush1.bf16.xpose.msra.mxu0 0
      %404 = vmatprep.subr.bf16.mxu0 0
      %405 = vmatpush1.bf16.xpose.msra.mxu0 0
      %406 = vmatprep.subr.bf16.mxu0 0
      %407 = vmatpush1.bf16.xpose.msra.mxu0 0
      %408 = vmatprep.subr.bf16.mxu0 0
      %409 = vmatpush1.bf16.xpose.msra.mxu0 0
      %410 = vmatprep.subr.bf16.mxu0 0
      %411 = vmatpush1.bf16.xpose.msra.mxu0 0
      %412 = vmatprep.subr.bf16.mxu0 0
      %413 = vmatpush1.bf16.xpose.msra.mxu0 0
      %414 = vmatprep.subr.bf16.mxu0 0
      %415 = vmatpush1.bf16.xpose.msra.mxu0 0
      %416 = vmatprep.subr.bf16.mxu0 0
      %417 = vmatpush1.bf16.xpose.msra.mxu0 0
      %418 = vmatprep.subr.bf16.mxu0 0
      %419 = vmatpush1.bf16.xpose.msra.mxu0 0
      %420 = vmatprep.subr.bf16.mxu0 0
      %421 = vmatpush1.bf16.xpose.msra.mxu0 0
      %422 = vmatprep.subr.bf16.mxu0 0
      %423 = vmatpush1.bf16.xpose.msra.mxu0 0
      %424 = vmatprep.subr.bf16.mxu0 0
      %425 = vmatpush1.bf16.xpose.msra.mxu0 0
      %426 = vmatprep.subr.bf16.mxu0 0
      %427 = vmatpush1.bf16.xpose.msra.mxu0 0
      %428 = vmatprep.subr.bf16.mxu0 0
      %429 = vmatpush1.bf16.xpose.msra.mxu0 0
      %430 = vmatprep.mubr.bf16.mxu0 0
      %431 = vmatmul.mubr.bf16.gmra.mrb[0].mxu0 %v393
      %v432 = vpop.f32.mrb[0].mxu0
      %v433 = vadd.f32 0.0, %v432
      %v434 = vpop.f32.mrb[0].mxu0
      %v435 = vpop.f32.mrb[0].mxu0
      %v436 = vpop.f32.mrb[0].mxu0
      %437 = vdwg.mxu0
      %v438 = vmul.f32 %v433, 0.35355338
      %v439 = vadd.f32 %v438, %v212
      %v440 = vsel %vm160, %v439, -inf
      %441 = vmax.xlane.f32.xlu0 %v440
      %v442 = vpop.xlane.xlu0 %441
      %v443 = vsub.f32 %v439, %v442
      %v444 = vmul.f32 %v443, 1.442695
      %v445 = vpow.pop %v444
      %v446 = vsel %vm160, %v445, 0.0
      %447 = vadd.xlane.f32.xlu0 %v446
      %v448 = vpop.xlane.xlu0 %447
      %v449 = vrcp.pop %v448
      %v450 = vmul.f32 %v445, %v449
      %v451 = vpack.c.bf16 %v450, %v450
      %452 = vrot.lane.b32.xlu0 %v156, 48
      %v453 = vpop.permute.xlu0 %452
      %v455 = vsel %vm160, %v451, 0
      %v458 = vsel %vm232, %v453, 0
      %460 = vmatprep.subr.bf16.mxu0 0
      %461 = vmatpush1.bf16.msra.mxu0 %v458
      %462 = vmatprep.subr.bf16.mxu0 0
      %463 = vmatpush1.bf16.msra.mxu0 0
      %464 = vmatprep.subr.bf16.mxu0 0
      %465 = vmatpush1.bf16.msra.mxu0 0
      %466 = vmatprep.subr.bf16.mxu0 0
      %467 = vmatpush1.bf16.msra.mxu0 0
      %468 = vmatprep.subr.bf16.mxu0 0
      %469 = vmatpush1.bf16.msra.mxu0 0
      %470 = vmatprep.subr.bf16.mxu0 0
      %471 = vmatpush1.bf16.msra.mxu0 0
      %472 = vmatprep.subr.bf16.mxu0 0
      %473 = vmatpush1.bf16.msra.mxu0 0
      %474 = vmatprep.subr.bf16.mxu0 0
      %475 = vmatpush1.bf16.msra.mxu0 0
      %476 = vmatprep.subr.bf16.mxu0 0
      %477 = vmatpush1.bf16.msra.mxu0 0
      %478 = vmatprep.subr.bf16.mxu0 0
      %479 = vmatpush1.bf16.msra.mxu0 0
      %480 = vmatprep.subr.bf16.mxu0 0
      %481 = vmatpush1.bf16.msra.mxu0 0
      %482 = vmatprep.subr.bf16.mxu0 0
      %483 = vmatpush1.bf16.msra.mxu0 0
      %484 = vmatprep.subr.bf16.mxu0 0
      %485 = vmatpush1.bf16.msra.mxu0 0
      %486 = vmatprep.subr.bf16.mxu0 0
      %487 = vmatpush1.bf16.msra.mxu0 0
      %488 = vmatprep.subr.bf16.mxu0 0
      %489 = vmatpush1.bf16.msra.mxu0 0
      %490 = vmatprep.subr.bf16.mxu0 0
      %491 = vmatpush1.bf16.msra.mxu0 0
      %492 = vmatprep.mubr.bf16.mxu0 0
      %493 = vmatmul.mubr.bf16.gmra.mrb[0].mxu0 %v455
      %v494 = vpop.f32.mrb[0].mxu0
      %v495 = vadd.f32 0.0, %v494
      %v496 = vpop.f32.mrb[0].mxu0
      %v497 = vpop.f32.mrb[0].mxu0
      %v498 = vpop.f32.mrb[0].mxu0
      %499 = vdwg.mxu0
      %500 = vrot.lane.b32.xlu0 %v156, 104
      %v501 = vpop.permute.xlu0 %500
      %502 = vrot.lane.b32.xlu0 %v156, 72
      %v503 = vpop.permute.xlu0 %502
      %v505 = vsel %vm160, %v501, 0
      %v508 = vsel %vm160, %v503, 0
      %510 = vmatprep.subr.bf16.mxu0 0
      %511 = vmatpush1.bf16.xpose.msra.mxu0 %v508
      %512 = vmatprep.subr.bf16.mxu0 0
      %513 = vmatpush1.bf16.xpose.msra.mxu0 0
      %514 = vmatprep.subr.bf16.mxu0 0
      %515 = vmatpush1.bf16.xpose.msra.mxu0 0
      %516 = vmatprep.subr.bf16.mxu0 0
      %517 = vmatpush1.bf16.xpose.msra.mxu0 0
      %518 = vmatprep.subr.bf16.mxu0 0
      %519 = vmatpush1.bf16.xpose.msra.mxu0 0
      %520 = vmatprep.subr.bf16.mxu0 0
      %521 = vmatpush1.bf16.xpose.msra.mxu0 0
      %522 = vmatprep.subr.bf16.mxu0 0
      %523 = vmatpush1.bf16.xpose.msra.mxu0 0
      %524 = vmatprep.subr.bf16.mxu0 0
      %525 = vmatpush1.bf16.xpose.msra.mxu0 0
      %526 = vmatprep.subr.bf16.mxu0 0
      %527 = vmatpush1.bf16.xpose.msra.mxu0 0
      %528 = vmatprep.subr.bf16.mxu0 0
      %529 = vmatpush1.bf16.xpose.msra.mxu0 0
      %530 = vmatprep.subr.bf16.mxu0 0
      %531 = vmatpush1.bf16.xpose.msra.mxu0 0
      %532 = vmatprep.subr.bf16.mxu0 0
      %533 = vmatpush1.bf16.xpose.msra.mxu0 0
      %534 = vmatprep.subr.bf16.mxu0 0
      %535 = vmatpush1.bf16.xpose.msra.mxu0 0
      %536 = vmatprep.subr.bf16.mxu0 0
      %537 = vmatpush1.bf16.xpose.msra.mxu0 0
      %538 = vmatprep.subr.bf16.mxu0 0
      %539 = vmatpush1.bf16.xpose.msra.mxu0 0
      %540 = vmatprep.subr.bf16.mxu0 0
      %541 = vmatpush1.bf16.xpose.msra.mxu0 0
      %542 = vmatprep.mubr.bf16.mxu0 0
      %543 = vmatmul.mubr.bf16.gmra.mrb[0].mxu0 %v505
      %v544 = vpop.f32.mrb[0].mxu0
      %v545 = vadd.f32 0.0, %v544
      %v546 = vpop.f32.mrb[0].mxu0
      %v547 = vpop.f32.mrb[0].mxu0
      %v548 = vpop.f32.mrb[0].mxu0
      %549 = vdwg.mxu0
      %v550 = vmul.f32 %v545, 0.35355338
      %v551 = vadd.f32 %v550, %v212
      %v552 = vsel %vm160, %v551, -inf
      %553 = vmax.xlane.f32.xlu0 %v552
      %v554 = vpop.xlane.xlu0 %553
      %v555 = vsub.f32 %v551, %v554
      %v556 = vmul.f32 %v555, 1.442695
      %v557 = vpow.pop %v556
      %v558 = vsel %vm160, %v557, 0.0
      %559 = vadd.xlane.f32.xlu0 %v558
      %v560 = vpop.xlane.xlu0 %559
      %v561 = vrcp.pop %v560
      %v562 = vmul.f32 %v557, %v561
      %v563 = vpack.c.bf16 %v562, %v562
      %564 = vrot.lane.b32.xlu0 %v156, 40
      %v565 = vpop.permute.xlu0 %564
      %v567 = vsel %vm160, %v563, 0
      %v570 = vsel %vm232, %v565, 0
      %572 = vmatprep.subr.bf16.mxu0 0
      %573 = vmatpush1.bf16.msra.mxu0 %v570
      %574 = vmatprep.subr.bf16.mxu0 0
      %575 = vmatpush1.bf16.msra.mxu0 0
      %576 = vmatprep.subr.bf16.mxu0 0
      %577 = vmatpush1.bf16.msra.mxu0 0
      %578 = vmatprep.subr.bf16.mxu0 0
      %579 = vmatpush1.bf16.msra.mxu0 0
      %580 = vmatprep.subr.bf16.mxu0 0
      %581 = vmatpush1.bf16.msra.mxu0 0
      %582 = vmatprep.subr.bf16.mxu0 0
      %583 = vmatpush1.bf16.msra.mxu0 0
      %584 = vmatprep.subr.bf16.mxu0 0
      %585 = vmatpush1.bf16.msra.mxu0 0
      %586 = vmatprep.subr.bf16.mxu0 0
      %587 = vmatpush1.bf16.msra.mxu0 0
      %588 = vmatprep.subr.bf16.mxu0 0
      %589 = vmatpush1.bf16.msra.mxu0 0
      %590 = vmatprep.subr.bf16.mxu0 0
      %591 = vmatpush1.bf16.msra.mxu0 0
      %592 = vmatprep.subr.bf16.mxu0 0
      %593 = vmatpush1.bf16.msra.mxu0 0
      %594 = vmatprep.subr.bf16.mxu0 0
      %595 = vmatpush1.bf16.msra.mxu0 0
      %596 = vmatprep.subr.bf16.mxu0 0
      %597 = vmatpush1.bf16.msra.mxu0 0
      %598 = vmatprep.subr.bf16.mxu0 0
      %599 = vmatpush1.bf16.msra.mxu0 0
      %600 = vmatprep.subr.bf16.mxu0 0
      %601 = vmatpush1.bf16.msra.mxu0 0
      %602 = vmatprep.subr.bf16.mxu0 0
      %603 = vmatpush1.bf16.msra.mxu0 0
      %604 = vmatprep.mubr.bf16.mxu0 0
      %605 = vmatmul.mubr.bf16.gmra.mrb[0].mxu0 %v567
      %v606 = vpop.f32.mrb[0].mxu0
      %v607 = vadd.f32 0.0, %v606
      %v608 = vpop.f32.mrb[0].mxu0
      %v609 = vpop.f32.mrb[0].mxu0
      %v610 = vpop.f32.mrb[0].mxu0
      %611 = vdwg.mxu0
      %613 = vrot.lane.b32.xlu0 %v383, 8
      %v614 = vpop.permute.xlu0 %613
      %617 = vrot.lane.b32.xlu0 %v495, 16
      %v618 = vpop.permute.xlu0 %617
      %621 = vrot.lane.b32.xlu0 %v607, 24
      %v622 = vpop.permute.xlu0 %621
      %v624 = vsel %vm160, %v271, %v614
      %vm625 = vcmask 130048
      %v626 = vsel %vm625, %v624, %v618
      %vm627 = vcmask 195584
      %v628 = vsel %vm627, %v626, %v622
      %vm629 = vcmask 261120
      %630 = vst.msk [vmem:[%s152] sm:$0xff] %vm629, %v628
      %p631 = scmp.lt.s32.totalorder %s13, 1
      %s632 = scalar_select %p631, %s13, 1
      %s633 = smul.addr %s632, 8
      %s634 = scalar_lea.vmem %s2, %s633
      // Predicated region
      $region29: #{_lambda_.36} parent=27 // pred_check
        %p635 = pneg %p83
      $region30: #{_lambda_.36} parent=27 // pred_check_branch
        %637 = sbr.rel (%p635) target = $region32
      $region31: #{_lambda_.36} parent=27 // pred_region
        _
      $region32: #{_lambda_.36} parent=27 // pred_fallthru
        _
    $region28: #{_lambda_.36} parent=5 // pred_fallthru
      _
    %p638 = scmp.le.s32.totalorder 2, %s8
    // Predicated region
    $region33: #{_lambda_.36} parent=5 // pred_check
      %p639 = pneg %p638
    $region34: #{_lambda_.36} parent=5 // pred_check_branch
      %641 = sbr.rel (%p639) target = $region36
    $region35: #{_lambda_.36} parent=5 // pred_region
      %s642 = ssub.s32 %s8, 2
      // Predicated region
      $region37: #{_lambda_.36} parent=35 // pred_check
        %p643 = pneg %p89
      $region38: #{_lambda_.36} parent=35 // pred_check_branch
        %645 = sbr.rel (%p643) target = $region40
      $region39: #{_lambda_.36} parent=35 // pred_region
        %p646 = scmp.lt.s32.totalorder %s14, 1
        %s647 = scalar_select %p646, %s14, 1
        %s648 = smul.addr %s647, 8
        %s649 = scalar_lea.vmem %s2, %s648
      $region40: #{_lambda_.36} parent=35 // pred_fallthru
        _
    $region36: #{_lambda_.36} parent=5 // pred_fallthru
      _
  $region6: #{_lambda_.36} parent=0 // loop_footer
    %s12 = sadd.s32 1, %s8
  $region7: #{_lambda_.36} parent=0 // loop_footer_branch
    %7 = sbr.rel target = $region3
  $region8: #{_lambda_.36} parent=0 // loop_exit
    _

// kernel: _lambda_.53
$region0: #{_lambda_.53}
  #allocation0 [shape = 'u32[]', space=smem, size = 0x4, offset = 0x4, fixed_abs, tag = 'smem constant byte address 0x4 - core index']
  #allocation1 [shape = 'u32[144,128]{1,0:T(1,128)}', space=vmem, size = 0x12000, scoped, tag = 'internal scratch']
  %s0 = inlined_call_operand.vmem [shape: f32[2,8,32], index: 0, kind: input, shape index: {}]
  %s1 = inlined_call_operand.vmem [shape: f32[2,8,64], index: 1, kind: input, shape index: {}]
  %s2 = inlined_call_operand.vmem [shape: f32[2,1,8], index: 2, kind: input, shape index: {}]
  %s3 = inlined_call_operand.vmem [shape: f32[2,8,32], index: 3, kind: output, shape index: {}]
  %s4 = sld [smem:[#allocation0]]
  $region45: #{_lambda_.53} parent=0
    _
  %s6 = ssub.s32 1, %s4
  %s7 = scalar_select 0, %s6, %s4
  loop: start=0, step=1, limit=4
  $region2: #{_lambda_.53} parent=0 // loop_pre_header
    _
  $region3: #{_lambda_.53} parent=0 // loop_header
    %s9 = sphi 0, %s13
    %p10 = scmp.ge.s32.totalorder %s9, 4
    %s19 = sphi 0, %s21
    %s22 = sphi 0, %s19
    %s23 = sphi 0, %s22
    %s39 = sphi 0, %s23
    %s45 = sphi 0, %s47
    %s48 = sphi 0, %s45
    %s49 = sphi 0, %s48
    %s65 = sphi 0, %s49
    %s71 = sphi 0, %s73
    %s74 = sphi 0, %s71
    %s75 = sphi 0, %s74
    %s91 = sphi 0, %s75
    %s97 = sphi 0, %s99
    %s100 = sphi 0, %s97
    %s101 = sphi 0, %s100
    %s117 = sphi 0, %s101
  $region4: #{_lambda_.53} parent=0 // loop_header_branch
    %12 = sbr.rel (%p10) target = $region8
  $region5: #{_lambda_.53} parent=0 // loop_body
    %s14 = ssub.s32 %s9, 1
    %s15 = ssub.s32 %s9, 2
    %s16 = sadd.s32 %s9, 1
    %s17 = ssub.s32 %s9, %s16
    %p18 = scmp.eq.s32.totalorder %s17, 0
    %s20 = sadd.s32 %s19, 1
    %s21 = scalar_select %p18, %s19, %s20
    %p24 = pneg %p18
    %p25 = scmp.eq.s32.totalorder %s9, 1
    %p26 = por %p24, %p25
    %p27 = scmp.ne.s32.totalorder %s19, %s22
    %p28 = scmp.eq.s32.totalorder %s9, 0
    %p29 = por %p27, %p28
    %p30 = scmp.ne.s32.totalorder %s19, %s22
    %p31 = scmp.eq.s32.totalorder %s14, 1
    %p32 = por %p30, %p31
    %p33 = scmp.ne.s32.totalorder %s22, %s23
    %p34 = scmp.eq.s32.totalorder %s14, 0
    %p35 = por %p33, %p34
    %p36 = scmp.ne.s32.totalorder %s22, %s23
    %p37 = scmp.eq.s32.totalorder %s15, 1
    %p38 = por %p36, %p37
    %p40 = scmp.ne.s32.totalorder %s23, %s39
    %p41 = scmp.eq.s32.totalorder %s15, 0
    %p42 = por %p40, %p41
    %s43 = ssub.s32 %s9, %s16
    %p44 = scmp.eq.s32.totalorder %s43, 0
    %s46 = sadd.s32 %s45, 1
    %s47 = scalar_select %p44, %s45, %s46
    %p50 = pneg %p44
    %p51 = scmp.eq.s32.totalorder %s9, 1
    %p52 = por %p50, %p51
    %p53 = scmp.ne.s32.totalorder %s45, %s48
    %p54 = scmp.eq.s32.totalorder %s9, 0
    %p55 = por %p53, %p54
    %p56 = scmp.ne.s32.totalorder %s45, %s48
    %p57 = scmp.eq.s32.totalorder %s14, 1
    %p58 = por %p56, %p57
    %p59 = scmp.ne.s32.totalorder %s48, %s49
    %p60 = scmp.eq.s32.totalorder %s14, 0
    %p61 = por %p59, %p60
    %p62 = scmp.ne.s32.totalorder %s48, %s49
    %p63 = scmp.eq.s32.totalorder %s15, 1
    %p64 = por %p62, %p63
    %p66 = scmp.ne.s32.totalorder %s49, %s65
    %p67 = scmp.eq.s32.totalorder %s15, 0
    %p68 = por %p66, %p67
    %s69 = ssub.s32 %s9, %s16
    %p70 = scmp.eq.s32.totalorder %s69, 0
    %s72 = sadd.s32 %s71, 1
    %s73 = scalar_select %p70, %s71, %s72
    %p76 = pneg %p70
    %p77 = scmp.eq.s32.totalorder %s9, 1
    %p78 = por %p76, %p77
    %p79 = scmp.ne.s32.totalorder %s71, %s74
    %p80 = scmp.eq.s32.totalorder %s9, 0
    %p81 = por %p79, %p80
    %p82 = scmp.ne.s32.totalorder %s71, %s74
    %p83 = scmp.eq.s32.totalorder %s14, 1
    %p84 = por %p82, %p83
    %p85 = scmp.ne.s32.totalorder %s74, %s75
    %p86 = scmp.eq.s32.totalorder %s14, 0
    %p87 = por %p85, %p86
    %p88 = scmp.ne.s32.totalorder %s74, %s75
    %p89 = scmp.eq.s32.totalorder %s15, 1
    %p90 = por %p88, %p89
    %p92 = scmp.ne.s32.totalorder %s75, %s91
    %p93 = scmp.eq.s32.totalorder %s15, 0
    %p94 = por %p92, %p93
    %s95 = ssub.s32 %s9, %s16
    %p96 = scmp.eq.s32.totalorder %s95, 0
    %s98 = sadd.s32 %s97, 1
    %s99 = scalar_select %p96, %s97, %s98
    %p102 = pneg %p96
    %p103 = scmp.eq.s32.totalorder %s9, 1
    %p104 = por %p102, %p103
    %p105 = scmp.ne.s32.totalorder %s97, %s100
    %p106 = scmp.eq.s32.totalorder %s9, 0
    %p107 = por %p105, %p106
    %p108 = scmp.ne.s32.totalorder %s97, %s100
    %p109 = scmp.eq.s32.totalorder %s14, 1
    %p110 = por %p108, %p109
    %p111 = scmp.ne.s32.totalorder %s100, %s101
    %p112 = scmp.eq.s32.totalorder %s14, 0
    %p113 = por %p111, %p112
    %p114 = scmp.ne.s32.totalorder %s100, %s101
    %p115 = scmp.eq.s32.totalorder %s15, 1
    %p116 = por %p114, %p115
    %p118 = scmp.ne.s32.totalorder %s101, %s117
    %p119 = scmp.eq.s32.totalorder %s15, 0
    %p120 = por %p118, %p119
    %p121 = scmp.le.s32.totalorder 1, %s9
    %p122 = scmp.lt.s32.totalorder %s9, 3
    %p123 = pnand %p121, %p122
    %p124 = pneg %p123
    // Predicated region
    $region9: #{_lambda_.53} parent=5 // pred_check
      _
    $region10: #{_lambda_.53} parent=5 // pred_check_branch
      %126 = sbr.rel (%p123) target = $region12
    $region11: #{_lambda_.53} parent=5 // pred_region
      %s127 = ssub.s32 %s9, 1
    $region12: #{_lambda_.53} parent=5 // pred_fallthru
      _
    %p128 = scmp.lt.s32.totalorder %s9, 2
    // Predicated region
    $region13: #{_lambda_.53} parent=5 // pred_check
      %p129 = pneg %p128
    $region14: #{_lambda_.53} parent=5 // pred_check_branch
      %131 = sbr.rel (%p129) target = $region16
    $region15: #{_lambda_.53} parent=5 // pred_region
      // Predicated region
      $region17: #{_lambda_.53} parent=15 // pred_check
        %p132 = pneg %p29
      $region18: #{_lambda_.53} parent=15 // pred_check_branch
        %134 = sbr.rel (%p132) target = $region20
      $region19: #{_lambda_.53} parent=15 // pred_region
        %p135 = scmp.lt.s32.totalorder %s9, 1
        %s136 = scalar_select %p135, %s9, 1
        %s137 = smul.addr %s136, 8
        %s138 = scalar_lea.vmem %s0, %s137
      $region20: #{_lambda_.53} parent=15 // pred_fallthru
        _
      // Predicated region
      $region21: #{_lambda_.53} parent=15 // pred_check
        %p139 = pneg %p55
      $region22: #{_lambda_.53} parent=15 // pred_check_branch
        %141 = sbr.rel (%p139) target = $region24
      $region23: #{_lambda_.53} parent=15 // pred_region
        %p142 = scmp.lt.s32.totalorder %s9, 1
        %s143 = scalar_select %p142, %s9, 1
        %s144 = smul.addr %s143, 8
        %s145 = scalar_lea.vmem %s1, %s144
      $region24: #{_lambda_.53} parent=15 // pred_fallthru
        _
      // Predicated region
      $region25: #{_lambda_.53} parent=15 // pred_check
        %p146 = pneg %p81
      $region26: #{_lambda_.53} parent=15 // pred_check_branch
        %148 = sbr.rel (%p146) target = $region28
      $region27: #{_lambda_.53} parent=15 // pred_region
        %p149 = scmp.lt.s32.totalorder %s9, 1
        %s150 = scalar_select %p149, %s9, 1
        %s151 = scalar_lea.vmem %s2, %s150
      $region28: #{_lambda_.53} parent=15 // pred_fallthru
        _
    $region16: #{_lambda_.53} parent=5 // pred_fallthru
      _
    %p152 = scmp.le.s32.totalorder 1, %s9
    %p153 = scmp.lt.s32.totalorder %s9, 3
    %p154 = pnand %p152, %p153
    %p155 = pneg %p154
    // Predicated region
    $region29: #{_lambda_.53} parent=5 // pred_check
      _
    $region30: #{_lambda_.53} parent=5 // pred_check_branch
      %157 = sbr.rel (%p154) target = $region32
    $region31: #{_lambda_.53} parent=5 // pred_region
      %s158 = ssub.s32 %s9, 1
      %p159 = scmp.lt.s32.totalorder %s14, 1
      %s160 = scalar_select %p159, %s14, 1
      %s161 = smul.addr %s160, 8
      %s162 = scalar_lea.vmem %s0, %s161
      %p163 = pneg %p35
      %p164 = pneg %p32
      %p165 = scmp.lt.s32.totalorder %s14, 1
      %s166 = scalar_select %p165, %s14, 1
      %s167 = smul.addr %s166, 8
      %s168 = scalar_lea.vmem %s1, %s167
      %p169 = pneg %p61
      %p170 = pneg %p58
      %p171 = scmp.lt.s32.totalorder %s14, 1
      %s172 = scalar_select %p171, %s14, 1
      %s173 = scalar_lea.vmem %s2, %s172
      %p174 = pneg %p87
      %p175 = pneg %p84
      %p176 = pneg %p113
      %p177 = pneg %p110
      %p178 = scmp.lt.s32.totalorder %s14, 1
      %s179 = scalar_select %p178, %s14, 1
      %s180 = smul.addr %s179, 8
      %s181 = scalar_lea.vmem %s3, %s180
      %p182 = scmp.lt.s32.totalorder %s14, 1
      %s183 = scalar_select %p182, %s14, 1
      %s184 = smul.addr %s183, 8
      %s185 = scalar_lea.vmem %s0, %s184
      %p186 = scmp.lt.s32.totalorder %s14, 1
      %s187 = scalar_select %p186, %s14, 1
      %s188 = smul.addr %s187, 8
      %s189 = scalar_lea.vmem %s1, %s188
      %p190 = scmp.lt.s32.totalorder %s14, 1
      %s191 = scalar_select %p190, %s14, 1
      %s192 = scalar_lea.vmem %s2, %s191
      %p193 = scmp.lt.s32.totalorder %s14, 1
      %s194 = scalar_select %p193, %s14, 1
      %s195 = smul.addr %s194, 8
      %s196 = scalar_lea.vmem %s3, %s195
      %v198 = vld [vmem:[%s189] sm:$0xff]
      %v199 = vld [vmem:[%s185] sm:$0xff]
      %v200 = vld [vmem:[%s192] sm:$0x1]
      %v201 = vpack.c.bf16 %v199, %v199
      %v202 = vpack.c.bf16 %v198, %v198
      %vm203 = vcmask 64512
      %v205 = vsel %vm203, %v201, 0
      %v208 = vsel %vm203, %v202, 0
      %210 = vmatprep.subr.bf16.mxu0 0
      %211 = vmatpush1.bf16.xpose.msra.mxu0 %v208
      %212 = vmatprep.subr.bf16.mxu0 0
      %213 = vmatpush1.bf16.xpose.msra.mxu0 0
      %214 = vmatprep.subr.bf16.mxu0 0
      %215 = vmatpush1.bf16.xpose.msra.mxu0 0
      %216 = vmatprep.subr.bf16.mxu0 0
      %217 = vmatpush1.bf16.xpose.msra.mxu0 0
      %218 = vmatprep.subr.bf16.mxu0 0
      %219 = vmatpush1.bf16.xpose.msra.mxu0 0
      %220 = vmatprep.subr.bf16.mxu0 0
      %221 = vmatpush1.bf16.xpose.msra.mxu0 0
      %222 = vmatprep.subr.bf16.mxu0 0
      %223 = vmatpush1.bf16.xpose.msra.mxu0 0
      %224 = vmatprep.subr.bf16.mxu0 0
      %225 = vmatpush1.bf16.xpose.msra.mxu0 0
      %226 = vmatprep.subr.bf16.mxu0 0
      %227 = vmatpush1.bf16.xpose.msra.mxu0 0
      %228 = vmatprep.subr.bf16.mxu0 0
      %229 = vmatpush1.bf16.xpose.msra.mxu0 0
      %230 = vmatprep.subr.bf16.mxu0 0
      %231 = vmatpush1.bf16.xpose.msra.mxu0 0
      %232 = vmatprep.subr.bf16.mxu0 0
      %233 = vmatpush1.bf16.xpose.msra.mxu0 0
      %234 = vmatprep.subr.bf16.mxu0 0
      %235 = vmatpush1.bf16.xpose.msra.mxu0 0
      %236 = vmatprep.subr.bf16.mxu0 0
      %237 = vmatpush1.bf16.xpose.msra.mxu0 0
      %238 = vmatprep.subr.bf16.mxu0 0
      %239 = vmatpush1.bf16.xpose.msra.mxu0 0
      %240 = vmatprep.subr.bf16.mxu0 0
      %241 = vmatpush1.bf16.xpose.msra.mxu0 0
      %242 = vmatprep.mubr.bf16.mxu0 0
      %243 = vmatmul.mubr.bf16.gmra.mrb[0].mxu0 %v205
      %v244 = vpop.f32.mrb[0].mxu0
      %v245 = vadd.f32 0.0, %v244
      %v246 = vpop.f32.mrb[0].mxu0
      %v247 = vpop.f32.mrb[0].mxu0
      %v248 = vpop.f32.mrb[0].mxu0
      %249 = vdwg.mxu0
      %v250 = vmul.f32 %v245, 0.35355338
      %v252 = vlaneseq
      %v253 = vshrl.u32 %v252, 7
      %v254 = vsub.s32 0, %v253
      %v255 = vrot.slane %v200, %v254
      %v257 = vadd.f32 %v250, %v255
      %v258 = vsel %vm203, %v257, -inf
      %259 = vmax.xlane.f32.xlu0 %v258
      %v260 = vpop.xlane.xlu0 %259
      %v261 = vsub.f32 %v257, %v260
      %v262 = vmul.f32 %v261, 1.442695
      %v263 = vpow.pop %v262
      %v264 = vsel %vm203, %v263, 0.0
      %265 = vadd.xlane.f32.xlu0 %v264
      %v266 = vpop.xlane.xlu0 %265
      %v267 = vrcp.pop %v266
      %v268 = vmul.f32 %v263, %v267
      %v269 = vpack.c.bf16 %v268, %v268
      %271 = vrot.lane.b32.xlu0 %v202, 96
      %v272 = vpop.permute.xlu0 %271
      %v274 = vsel %vm203, %v269, 0
      %vm276 = vcmask 1043456
      %v278 = vsel %vm276, %v272, 0
      %280 = vmatprep.subr.bf16.mxu0 0
      %281 = vmatpush1.bf16.msra.mxu0 %v278
      %282 = vmatprep.subr.bf16.mxu0 0
      %283 = vmatpush1.bf16.msra.mxu0 0
      %284 = vmatprep.subr.bf16.mxu0 0
      %285 = vmatpush1.bf16.msra.mxu0 0
      %286 = vmatprep.subr.bf16.mxu0 0
      %287 = vmatpush1.bf16.msra.mxu0 0
      %288 = vmatprep.subr.bf16.mxu0 0
      %289 = vmatpush1.bf16.msra.mxu0 0
      %290 = vmatprep.subr.bf16.mxu0 0
      %291 = vmatpush1.bf16.msra.mxu0 0
      %292 = vmatprep.subr.bf16.mxu0 0
      %293 = vmatpush1.bf16.msra.mxu0 0
      %294 = vmatprep.subr.bf16.mxu0 0
      %295 = vmatpush1.bf16.msra.mxu0 0
      %296 = vmatprep.subr.bf16.mxu0 0
      %297 = vmatpush1.bf16.msra.mxu0 0
      %298 = vmatprep.subr.bf16.mxu0 0
      %299 = vmatpush1.bf16.msra.mxu0 0
      %300 = vmatprep.subr.bf16.mxu0 0
      %301 = vmatpush1.bf16.msra.mxu0 0
      %302 = vmatprep.subr.bf16.mxu0 0
      %303 = vmatpush1.bf16.msra.mxu0 0
      %304 = vmatprep.subr.bf16.mxu0 0
      %305 = vmatpush1.bf16.msra.mxu0 0
      %306 = vmatprep.subr.bf16.mxu0 0
      %307 = vmatpush1.bf16.msra.mxu0 0
      %308 = vmatprep.subr.bf16.mxu0 0
      %309 = vmatpush1.bf16.msra.mxu0 0
      %310 = vmatprep.subr.bf16.mxu0 0
      %311 = vmatpush1.bf16.msra.mxu0 0
      %312 = vmatprep.mubr.bf16.mxu0 0
      %313 = vmatmul.mubr.bf16.gmra.mrb[0].mxu0 %v274
      %v314 = vpop.f32.mrb[0].mxu0
      %v315 = vadd.f32 0.0, %v314
      %v316 = vpop.f32.mrb[0].mxu0
      %v317 = vpop.f32.mrb[0].mxu0
      %v318 = vpop.f32.mrb[0].mxu0
      %319 = vdwg.mxu0
      %321 = vrot.lane.b32.xlu0 %v201, 120
      %v322 = vpop.permute.xlu0 %321
      %323 = vrot.lane.b32.xlu0 %v202, 120
      %v324 = vpop.permute.xlu0 %323
      %v326 = vsel %vm203, %v322, 0
      %v329 = vsel %vm203, %v324, 0
      %331 = vmatprep.subr.bf16.mxu0 0
      %332 = vmatpush1.bf16.xpose.msra.mxu0 %v329
      %333 = vmatprep.subr.bf16.mxu0 0
      %334 = vmatpush1.bf16.xpose.msra.mxu0 0
      %335 = vmatprep.subr.bf16.mxu0 0
      %336 = vmatpush1.bf16.xpose.msra.mxu0 0
      %337 = vmatprep.subr.bf16.mxu0 0
      %338 = vmatpush1.bf16.xpose.msra.mxu0 0
      %339 = vmatprep.subr.bf16.mxu0 0
      %340 = vmatpush1.bf16.xpose.msra.mxu0 0
      %341 = vmatprep.subr.bf16.mxu0 0
      %342 = vmatpush1.bf16.xpose.msra.mxu0 0
      %343 = vmatprep.subr.bf16.mxu0 0
      %344 = vmatpush1.bf16.xpose.msra.mxu0 0
      %345 = vmatprep.subr.bf16.mxu0 0
      %346 = vmatpush1.bf16.xpose.msra.mxu0 0
      %347 = vmatprep.subr.bf16.mxu0 0
      %348 = vmatpush1.bf16.xpose.msra.mxu0 0
      %349 = vmatprep.subr.bf16.mxu0 0
      %350 = vmatpush1.bf16.xpose.msra.mxu0 0
      %351 = vmatprep.subr.bf16.mxu0 0
      %352 = vmatpush1.bf16.xpose.msra.mxu0 0
      %353 = vmatprep.subr.bf16.mxu0 0
      %354 = vmatpush1.bf16.xpose.msra.mxu0 0
      %355 = vmatprep.subr.bf16.mxu0 0
      %356 = vmatpush1.bf16.xpose.msra.mxu0 0
      %357 = vmatprep.subr.bf16.mxu0 0
      %358 = vmatpush1.bf16.xpose.msra.mxu0 0
      %359 = vmatprep.subr.bf16.mxu0 0
      %360 = vmatpush1.bf16.xpose.msra.mxu0 0
      %361 = vmatprep.subr.bf16.mxu0 0
      %362 = vmatpush1.bf16.xpose.msra.mxu0 0
      %363 = vmatprep.mubr.bf16.mxu0 0
      %364 = vmatmul.mubr.bf16.gmra.mrb[0].mxu0 %v326
      %v365 = vpop.f32.mrb[0].mxu0
      %v366 = vadd.f32 0.0, %v365
      %v367 = vpop.f32.mrb[0].mxu0
      %v368 = vpop.f32.mrb[0].mxu0
      %v369 = vpop.f32.mrb[0].mxu0
      %370 = vdwg.mxu0
      %v371 = vmul.f32 %v366, 0.35355338
      %v372 = vadd.f32 %v371, %v255
      %v373 = vsel %vm203, %v372, -inf
      %374 = vmax.xlane.f32.xlu0 %v373
      %v375 = vpop.xlane.xlu0 %374
      %v376 = vsub.f32 %v372, %v375
      %v377 = vmul.f32 %v376, 1.442695
      %v378 = vpow.pop %v377
      %v379 = vsel %vm203, %v378, 0.0
      %380 = vadd.xlane.f32.xlu0 %v379
      %v381 = vpop.xlane.xlu0 %380
      %v382 = vrcp.pop %v381
      %v383 = vmul.f32 %v378, %v382
      %v384 = vpack.c.bf16 %v383, %v383
      %385 = vrot.lane.b32.xlu0 %v202, 88
      %v386 = vpop.permute.xlu0 %385
      %v388 = vsel %vm203, %v384, 0
      %v391 = vsel %vm276, %v386, 0
      %393 = vmatprep.subr.bf16.mxu0 0
      %394 = vmatpush1.bf16.msra.mxu0 %v391
      %395 = vmatprep.subr.bf16.mxu0 0
      %396 = vmatpush1.bf16.msra.mxu0 0
      %397 = vmatprep.subr.bf16.mxu0 0
      %398 = vmatpush1.bf16.msra.mxu0 0
      %399 = vmatprep.subr.bf16.mxu0 0
      %400 = vmatpush1.bf16.msra.mxu0 0
      %401 = vmatprep.subr.bf16.mxu0 0
      %402 = vmatpush1.bf16.msra.mxu0 0
      %403 = vmatprep.subr.bf16.mxu0 0
      %404 = vmatpush1.bf16.msra.mxu0 0
      %405 = vmatprep.subr.bf16.mxu0 0
      %406 = vmatpush1.bf16.msra.mxu0 0
      %407 = vmatprep.subr.bf16.mxu0 0
      %408 = vmatpush1.bf16.msra.mxu0 0
      %409 = vmatprep.subr.bf16.mxu0 0
      %410 = vmatpush1.bf16.msra.mxu0 0
      %411 = vmatprep.subr.bf16.mxu0 0
      %412 = vmatpush1.bf16.msra.mxu0 0
      %413 = vmatprep.subr.bf16.mxu0 0
      %414 = vmatpush1.bf16.msra.mxu0 0
      %415 = vmatprep.subr.bf16.mxu0 0
      %416 = vmatpush1.bf16.msra.mxu0 0
      %417 = vmatprep.subr.bf16.mxu0 0
      %418 = vmatpush1.bf16.msra.mxu0 0
      %419 = vmatprep.subr.bf16.mxu0 0
      %420 = vmatpush1.bf16.msra.mxu0 0
      %421 = vmatprep.subr.bf16.mxu0 0
      %422 = vmatpush1.bf16.msra.mxu0 0
      %423 = vmatprep.subr.bf16.mxu0 0
      %424 = vmatpush1.bf16.msra.mxu0 0
      %425 = vmatprep.mubr.bf16.mxu0 0
      %426 = vmatmul.mubr.bf16.gmra.mrb[0].mxu0 %v388
      %v427 = vpop.f32.mrb[0].mxu0
      %v428 = vadd.f32 0.0, %v427
      %v429 = vpop.f32.mrb[0].mxu0
      %v430 = vpop.f32.mrb[0].mxu0
      %v431 = vpop.f32.mrb[0].mxu0
      %432 = vdwg.mxu0
      %433 = vrot.lane.b32.xlu0 %v201, 112
      %v434 = vpop.permute.xlu0 %433
      %435 = vrot.lane.b32.xlu0 %v202, 112
      %v436 = vpop.permute.xlu0 %435
      %v438 = vsel %vm203, %v434, 0
      %v441 = vsel %vm203, %v436, 0
      %443 = vmatprep.subr.bf16.mxu0 0
      %444 = vmatpush1.bf16.xpose.msra.mxu0 %v441
      %445 = vmatprep.subr.bf16.mxu0 0
      %446 = vmatpush1.bf16.xpose.msra.mxu0 0
      %447 = vmatprep.subr.bf16.mxu0 0
      %448 = vmatpush1.bf16.xpose.msra.mxu0 0
      %449 = vmatprep.subr.bf16.mxu0 0
      %450 = vmatpush1.bf16.xpose.msra.mxu0 0
      %451 = vmatprep.subr.bf16.mxu0 0
      %452 = vmatpush1.bf16.xpose.msra.mxu0 0
      %453 = vmatprep.subr.bf16.mxu0 0
      %454 = vmatpush1.bf16.xpose.msra.mxu0 0
      %455 = vmatprep.subr.bf16.mxu0 0
      %456 = vmatpush1.bf16.xpose.msra.mxu0 0
      %457 = vmatprep.subr.bf16.mxu0 0
      %458 = vmatpush1.bf16.xpose.msra.mxu0 0
      %459 = vmatprep.subr.bf16.mxu0 0
      %460 = vmatpush1.bf16.xpose.msra.mxu0 0
      %461 = vmatprep.subr.bf16.mxu0 0
      %462 = vmatpush1.bf16.xpose.msra.mxu0 0
      %463 = vmatprep.subr.bf16.mxu0 0
      %464 = vmatpush1.bf16.xpose.msra.mxu0 0
      %465 = vmatprep.subr.bf16.mxu0 0
      %466 = vmatpush1.bf16.xpose.msra.mxu0 0
      %467 = vmatprep.subr.bf16.mxu0 0
      %468 = vmatpush1.bf16.xpose.msra.mxu0 0
      %469 = vmatprep.subr.bf16.mxu0 0
      %470 = vmatpush1.bf16.xpose.msra.mxu0 0
      %471 = vmatprep.subr.bf16.mxu0 0
      %472 = vmatpush1.bf16.xpose.msra.mxu0 0
      %473 = vmatprep.subr.bf16.mxu0 0
      %474 = vmatpush1.bf16.xpose.msra.mxu0 0
      %475 = vmatprep.mubr.bf16.mxu0 0
      %476 = vmatmul.mubr.bf16.gmra.mrb[0].mxu0 %v438
      %v477 = vpop.f32.mrb[0].mxu0
      %v478 = vadd.f32 0.0, %v477
      %v479 = vpop.f32.mrb[0].mxu0
      %v480 = vpop.f32.mrb[0].mxu0
      %v481 = vpop.f32.mrb[0].mxu0
      %482 = vdwg.mxu0
      %v483 = vmul.f32 %v478, 0.35355338
      %v484 = vadd.f32 %v483, %v255
      %v485 = vsel %vm203, %v484, -inf
      %486 = vmax.xlane.f32.xlu0 %v485
      %v487 = vpop.xlane.xlu0 %486
      %v488 = vsub.f32 %v484, %v487
      %v489 = vmul.f32 %v488, 1.442695
      %v490 = vpow.pop %v489
      %v491 = vsel %vm203, %v490, 0.0
      %492 = vadd.xlane.f32.xlu0 %v491
      %v493 = vpop.xlane.xlu0 %492
      %v494 = vrcp.pop %v493
      %v495 = vmul.f32 %v490, %v494
      %v496 = vpack.c.bf16 %v495, %v495
      %497 = vrot.lane.b32.xlu0 %v202, 80
      %v498 = vpop.permute.xlu0 %497
      %v500 = vsel %vm203, %v496, 0
      %v503 = vsel %vm276, %v498, 0
      %505 = vmatprep.subr.bf16.mxu0 0
      %506 = vmatpush1.bf16.msra.mxu0 %v503
      %507 = vmatprep.subr.bf16.mxu0 0
      %508 = vmatpush1.bf16.msra.mxu0 0
      %509 = vmatprep.subr.bf16.mxu0 0
      %510 = vmatpush1.bf16.msra.mxu0 0
      %511 = vmatprep.subr.bf16.mxu0 0
      %512 = vmatpush1.bf16.msra.mxu0 0
      %513 = vmatprep.subr.bf16.mxu0 0
      %514 = vmatpush1.bf16.msra.mxu0 0
      %515 = vmatprep.subr.bf16.mxu0 0
      %516 = vmatpush1.bf16.msra.mxu0 0
      %517 = vmatprep.subr.bf16.mxu0 0
      %518 = vmatpush1.bf16.msra.mxu0 0
      %519 = vmatprep.subr.bf16.mxu0 0
      %520 = vmatpush1.bf16.msra.mxu0 0
      %521 = vmatprep.subr.bf16.mxu0 0
      %522 = vmatpush1.bf16.msra.mxu0 0
      %523 = vmatprep.subr.bf16.mxu0 0
      %524 = vmatpush1.bf16.msra.mxu0 0
      %525 = vmatprep.subr.bf16.mxu0 0
      %526 = vmatpush1.bf16.msra.mxu0 0
      %527 = vmatprep.subr.bf16.mxu0 0
      %528 = vmatpush1.bf16.msra.mxu0 0
      %529 = vmatprep.subr.bf16.mxu0 0
      %530 = vmatpush1.bf16.msra.mxu0 0
      %531 = vmatprep.subr.bf16.mxu0 0
      %532 = vmatpush1.bf16.msra.mxu0 0
      %533 = vmatprep.subr.bf16.mxu0 0
      %534 = vmatpush1.bf16.msra.mxu0 0
      %535 = vmatprep.subr.bf16.mxu0 0
      %536 = vmatpush1.bf16.msra.mxu0 0
      %537 = vmatprep.mubr.bf16.mxu0 0
      %538 = vmatmul.mubr.bf16.gmra.mrb[0].mxu0 %v500
      %v539 = vpop.f32.mrb[0].mxu0
      %v540 = vadd.f32 0.0, %v539
      %v541 = vpop.f32.mrb[0].mxu0
      %v542 = vpop.f32.mrb[0].mxu0
      %v543 = vpop.f32.mrb[0].mxu0
      %544 = vdwg.mxu0
      %545 = vrot.lane.b32.xlu0 %v201, 104
      %v546 = vpop.permute.xlu0 %545
      %547 = vrot.lane.b32.xlu0 %v202, 104
      %v548 = vpop.permute.xlu0 %547
      %v550 = vsel %vm203, %v546, 0
      %v553 = vsel %vm203, %v548, 0
      %555 = vmatprep.subr.bf16.mxu0 0
      %556 = vmatpush1.bf16.xpose.msra.mxu0 %v553
      %557 = vmatprep.subr.bf16.mxu0 0
      %558 = vmatpush1.bf16.xpose.msra.mxu0 0
      %559 = vmatprep.subr.bf16.mxu0 0
      %560 = vmatpush1.bf16.xpose.msra.mxu0 0
      %561 = vmatprep.subr.bf16.mxu0 0
      %562 = vmatpush1.bf16.xpose.msra.mxu0 0
      %563 = vmatprep.subr.bf16.mxu0 0
      %564 = vmatpush1.bf16.xpose.msra.mxu0 0
      %565 = vmatprep.subr.bf16.mxu0 0
      %566 = vmatpush1.bf16.xpose.msra.mxu0 0
      %567 = vmatprep.subr.bf16.mxu0 0
      %568 = vmatpush1.bf16.xpose.msra.mxu0 0
      %569 = vmatprep.subr.bf16.mxu0 0
      %570 = vmatpush1.bf16.xpose.msra.mxu0 0
      %571 = vmatprep.subr.bf16.mxu0 0
      %572 = vmatpush1.bf16.xpose.msra.mxu0 0
      %573 = vmatprep.subr.bf16.mxu0 0
      %574 = vmatpush1.bf16.xpose.msra.mxu0 0
      %575 = vmatprep.subr.bf16.mxu0 0
      %576 = vmatpush1.bf16.xpose.msra.mxu0 0
      %577 = vmatprep.subr.bf16.mxu0 0
      %578 = vmatpush1.bf16.xpose.msra.mxu0 0
      %579 = vmatprep.subr.bf16.mxu0 0
      %580 = vmatpush1.bf16.xpose.msra.mxu0 0
      %581 = vmatprep.subr.bf16.mxu0 0
      %582 = vmatpush1.bf16.xpose.msra.mxu0 0
      %583 = vmatprep.subr.bf16.mxu0 0
      %584 = vmatpush1.bf16.xpose.msra.mxu0 0
      %585 = vmatprep.subr.bf16.mxu0 0
      %586 = vmatpush1.bf16.xpose.msra.mxu0 0
      %587 = vmatprep.mubr.bf16.mxu0 0
      %588 = vmatmul.mubr.bf16.gmra.mrb[0].mxu0 %v550
      %v589 = vpop.f32.mrb[0].mxu0
      %v590 = vadd.f32 0.0, %v589
      %v591 = vpop.f32.mrb[0].mxu0
      %v592 = vpop.f32.mrb[0].mxu0
      %v593 = vpop.f32.mrb[0].mxu0
      %594 = vdwg.mxu0
      %v595 = vmul.f32 %v590, 0.35355338
      %v596 = vadd.f32 %v595, %v255
      %v597 = vsel %vm203, %v596, -inf
      %598 = vmax.xlane.f32.xlu0 %v597
      %v599 = vpop.xlane.xlu0 %598
      %v600 = vsub.f32 %v596, %v599
      %v601 = vmul.f32 %v600, 1.442695
      %v602 = vpow.pop %v601
      %v603 = vsel %vm203, %v602, 0.0
      %604 = vadd.xlane.f32.xlu0 %v603
      %v605 = vpop.xlane.xlu0 %604
      %v606 = vrcp.pop %v605
      %v607 = vmul.f32 %v602, %v606
      %v608 = vpack.c.bf16 %v607, %v607
      %609 = vrot.lane.b32.xlu0 %v202, 72
      %v610 = vpop.permute.xlu0 %609
      %v612 = vsel %vm203, %v608, 0
      %v615 = vsel %vm276, %v610, 0
      %617 = vmatprep.subr.bf16.mxu0 0
      %618 = vmatpush1.bf16.msra.mxu0 %v615
      %619 = vmatprep.subr.bf16.mxu0 0
      %620 = vmatpush1.bf16.msra.mxu0 0
      %621 = vmatprep.subr.bf16.mxu0 0
      %622 = vmatpush1.bf16.msra.mxu0 0
      %623 = vmatprep.subr.bf16.mxu0 0
      %624 = vmatpush1.bf16.msra.mxu0 0
      %625 = vmatprep.subr.bf16.mxu0 0
      %626 = vmatpush1.bf16.msra.mxu0 0
      %627 = vmatprep.subr.bf16.mxu0 0
      %628 = vmatpush1.bf16.msra.mxu0 0
      %629 = vmatprep.subr.bf16.mxu0 0
      %630 = vmatpush1.bf16.msra.mxu0 0
      %631 = vmatprep.subr.bf16.mxu0 0
      %632 = vmatpush1.bf16.msra.mxu0 0
      %633 = vmatprep.subr.bf16.mxu0 0
      %634 = vmatpush1.bf16.msra.mxu0 0
      %635 = vmatprep.subr.bf16.mxu0 0
      %636 = vmatpush1.bf16.msra.mxu0 0
      %637 = vmatprep.subr.bf16.mxu0 0
      %638 = vmatpush1.bf16.msra.mxu0 0
      %639 = vmatprep.subr.bf16.mxu0 0
      %640 = vmatpush1.bf16.msra.mxu0 0
      %641 = vmatprep.subr.bf16.mxu0 0
      %642 = vmatpush1.bf16.msra.mxu0 0
      %643 = vmatprep.subr.bf16.mxu0 0
      %644 = vmatpush1.bf16.msra.mxu0 0
      %645 = vmatprep.subr.bf16.mxu0 0
      %646 = vmatpush1.bf16.msra.mxu0 0
      %647 = vmatprep.subr.bf16.mxu0 0
      %648 = vmatpush1.bf16.msra.mxu0 0
      %649 = vmatprep.mubr.bf16.mxu0 0
      %650 = vmatmul.mubr.bf16.gmra.mrb[0].mxu0 %v612
      %v651 = vpop.f32.mrb[0].mxu0
      %v652 = vadd.f32 0.0, %v651
      %v653 = vpop.f32.mrb[0].mxu0
      %v654 = vpop.f32.mrb[0].mxu0
      %v655 = vpop.f32.mrb[0].mxu0
      %656 = vdwg.mxu0
      %658 = vrot.lane.b32.xlu0 %v428, 8
      %v659 = vpop.permute.xlu0 %658
      %662 = vrot.lane.b32.xlu0 %v540, 16
      %v663 = vpop.permute.xlu0 %662
      %666 = vrot.lane.b32.xlu0 %v652, 24
      %v667 = vpop.permute.xlu0 %666
      %v669 = vsel %vm203, %v315, %v659
      %vm670 = vcmask 130048
      %v671 = vsel %vm670, %v669, %v663
      %vm672 = vcmask 195584
      %v673 = vsel %vm672, %v671, %v667
      %vm674 = vcmask 261120
      %675 = vst.msk [vmem:[%s196] sm:$0xff] %vm674, %v673
      %p676 = scmp.lt.s32.totalorder %s14, 1
      %s677 = scalar_select %p676, %s14, 1
      %s678 = smul.addr %s677, 8
      %s679 = scalar_lea.vmem %s3, %s678
      // Predicated region
      $region33: #{_lambda_.53} parent=31 // pred_check
        %p680 = pneg %p110
      $region34: #{_lambda_.53} parent=31 // pred_check_branch
        %682 = sbr.rel (%p680) target = $region36
      $region35: #{_lambda_.53} parent=31 // pred_region
        _
      $region36: #{_lambda_.53} parent=31 // pred_fallthru
        _
    $region32: #{_lambda_.53} parent=5 // pred_fallthru
      _
    %p683 = scmp.le.s32.totalorder 2, %s9
    // Predicated region
    $region37: #{_lambda_.53} parent=5 // pred_check
      %p684 = pneg %p683
    $region38: #{_lambda_.53} parent=5 // pred_check_branch
      %686 = sbr.rel (%p684) target = $region40
    $region39: #{_lambda_.53} parent=5 // pred_region
      %s687 = ssub.s32 %s9, 2
      // Predicated region
      $region41: #{_lambda_.53} parent=39 // pred_check
        %p688 = pneg %p116
      $region42: #{_lambda_.53} parent=39 // pred_check_branch
        %690 = sbr.rel (%p688) target = $region44
      $region43: #{_lambda_.53} parent=39 // pred_region
        %p691 = scmp.lt.s32.totalorder %s15, 1
        %s692 = scalar_select %p691, %s15, 1
        %s693 = smul.addr %s692, 8
        %s694 = scalar_lea.vmem %s3, %s693
      $region44: #{_lambda_.53} parent=39 // pred_fallthru
        _
    $region40: #{_lambda_.53} parent=5 // pred_fallthru
      _
  $region6: #{_lambda_.53} parent=0 // loop_footer
    %s13 = sadd.s32 1, %s9
  $region7: #{_lambda_.53} parent=0 // loop_footer_branch
    %8 = sbr.rel target = $region3
  $region8: #{_lambda_.53} parent=0 // loop_exit
    _

// kernel: _lambda_.48
$region0: #{_lambda_.48}
  #allocation0 [shape = 'u32[]', space=smem, size = 0x4, offset = 0x4, fixed_abs, tag = 'smem constant byte address 0x4 - core index']
  #allocation1 [shape = 'u32[144,128]{1,0:T(1,128)}', space=vmem, size = 0x12000, scoped, tag = 'internal scratch']
  %s0 = inlined_call_operand.vmem [shape: f32[2,8,96], index: 0, kind: input, shape index: {}]
  %s1 = inlined_call_operand.vmem [shape: f32[2,1,8], index: 1, kind: input, shape index: {}]
  %s2 = inlined_call_operand.vmem [shape: f32[2,8,32], index: 2, kind: output, shape index: {}]
  %s3 = sld [smem:[#allocation0]]
  $region41: #{_lambda_.48} parent=0
    _
  %s5 = ssub.s32 1, %s3
  %s6 = scalar_select 0, %s5, %s3
  loop: start=0, step=1, limit=4
  $region2: #{_lambda_.48} parent=0 // loop_pre_header
    _
  $region3: #{_lambda_.48} parent=0 // loop_header
    %s8 = sphi 0, %s12
    %p9 = scmp.ge.s32.totalorder %s8, 4
    %s18 = sphi 0, %s20
    %s21 = sphi 0, %s18
    %s22 = sphi 0, %s21
    %s38 = sphi 0, %s22
    %s44 = sphi 0, %s46
    %s47 = sphi 0, %s44
    %s48 = sphi 0, %s47
    %s64 = sphi 0, %s48
    %s70 = sphi 0, %s72
    %s73 = sphi 0, %s70
    %s74 = sphi 0, %s73
    %s90 = sphi 0, %s74
  $region4: #{_lambda_.48} parent=0 // loop_header_branch
    %11 = sbr.rel (%p9) target = $region8
  $region5: #{_lambda_.48} parent=0 // loop_body
    %s13 = ssub.s32 %s8, 1
    %s14 = ssub.s32 %s8, 2
    %s15 = sadd.s32 %s8, 1
    %s16 = ssub.s32 %s8, %s15
    %p17 = scmp.eq.s32.totalorder %s16, 0
    %s19 = sadd.s32 %s18, 1
    %s20 = scalar_select %p17, %s18, %s19
    %p23 = pneg %p17
    %p24 = scmp.eq.s32.totalorder %s8, 1
    %p25 = por %p23, %p24
    %p26 = scmp.ne.s32.totalorder %s18, %s21
    %p27 = scmp.eq.s32.totalorder %s8, 0
    %p28 = por %p26, %p27
    %p29 = scmp.ne.s32.totalorder %s18, %s21
    %p30 = scmp.eq.s32.totalorder %s13, 1
    %p31 = por %p29, %p30
    %p32 = scmp.ne.s32.totalorder %s21, %s22
    %p33 = scmp.eq.s32.totalorder %s13, 0
    %p34 = por %p32, %p33
    %p35 = scmp.ne.s32.totalorder %s21, %s22
    %p36 = scmp.eq.s32.totalorder %s14, 1
    %p37 = por %p35, %p36
    %p39 = scmp.ne.s32.totalorder %s22, %s38
    %p40 = scmp.eq.s32.totalorder %s14, 0
    %p41 = por %p39, %p40
    %s42 = ssub.s32 %s8, %s15
    %p43 = scmp.eq.s32.totalorder %s42, 0
    %s45 = sadd.s32 %s44, 1
    %s46 = scalar_select %p43, %s44, %s45
    %p49 = pneg %p43
    %p50 = scmp.eq.s32.totalorder %s8, 1
    %p51 = por %p49, %p50
    %p52 = scmp.ne.s32.totalorder %s44, %s47
    %p53 = scmp.eq.s32.totalorder %s8, 0
    %p54 = por %p52, %p53
    %p55 = scmp.ne.s32.totalorder %s44, %s47
    %p56 = scmp.eq.s32.totalorder %s13, 1
    %p57 = por %p55, %p56
    %p58 = scmp.ne.s32.totalorder %s47, %s48
    %p59 = scmp.eq.s32.totalorder %s13, 0
    %p60 = por %p58, %p59
    %p61 = scmp.ne.s32.totalorder %s47, %s48
    %p62 = scmp.eq.s32.totalorder %s14, 1
    %p63 = por %p61, %p62
    %p65 = scmp.ne.s32.totalorder %s48, %s64
    %p66 = scmp.eq.s32.totalorder %s14, 0
    %p67 = por %p65, %p66
    %s68 = ssub.s32 %s8, %s15
    %p69 = scmp.eq.s32.totalorder %s68, 0
    %s71 = sadd.s32 %s70, 1
    %s72 = scalar_select %p69, %s70, %s71
    %p75 = pneg %p69
    %p76 = scmp.eq.s32.totalorder %s8, 1
    %p77 = por %p75, %p76
    %p78 = scmp.ne.s32.totalorder %s70, %s73
    %p79 = scmp.eq.s32.totalorder %s8, 0
    %p80 = por %p78, %p79
    %p81 = scmp.ne.s32.totalorder %s70, %s73
    %p82 = scmp.eq.s32.totalorder %s13, 1
    %p83 = por %p81, %p82
    %p84 = scmp.ne.s32.totalorder %s73, %s74
    %p85 = scmp.eq.s32.totalorder %s13, 0
    %p86 = por %p84, %p85
    %p87 = scmp.ne.s32.totalorder %s73, %s74
    %p88 = scmp.eq.s32.totalorder %s14, 1
    %p89 = por %p87, %p88
    %p91 = scmp.ne.s32.totalorder %s74, %s90
    %p92 = scmp.eq.s32.totalorder %s14, 0
    %p93 = por %p91, %p92
    %p94 = scmp.le.s32.totalorder 1, %s8
    %p95 = scmp.lt.s32.totalorder %s8, 3
    %p96 = pnand %p94, %p95
    %p97 = pneg %p96
    // Predicated region
    $region9: #{_lambda_.48} parent=5 // pred_check
      _
    $region10: #{_lambda_.48} parent=5 // pred_check_branch
      %99 = sbr.rel (%p96) target = $region12
    $region11: #{_lambda_.48} parent=5 // pred_region
      %s100 = ssub.s32 %s8, 1
    $region12: #{_lambda_.48} parent=5 // pred_fallthru
      _
    %p101 = scmp.lt.s32.totalorder %s8, 2
    // Predicated region
    $region13: #{_lambda_.48} parent=5 // pred_check
      %p102 = pneg %p101
    $region14: #{_lambda_.48} parent=5 // pred_check_branch
      %104 = sbr.rel (%p102) target = $region16
    $region15: #{_lambda_.48} parent=5 // pred_region
      // Predicated region
      $region17: #{_lambda_.48} parent=15 // pred_check
        %p105 = pneg %p28
      $region18: #{_lambda_.48} parent=15 // pred_check_branch
        %107 = sbr.rel (%p105) target = $region20
      $region19: #{_lambda_.48} parent=15 // pred_region
        %p108 = scmp.lt.s32.totalorder %s8, 1
        %s109 = scalar_select %p108, %s8, 1
        %s110 = smul.addr %s109, 8
        %s111 = scalar_lea.vmem %s0, %s110
      $region20: #{_lambda_.48} parent=15 // pred_fallthru
        _
      // Predicated region
      $region21: #{_lambda_.48} parent=15 // pred_check
        %p112 = pneg %p54
      $region22: #{_lambda_.48} parent=15 // pred_check_branch
        %114 = sbr.rel (%p112) target = $region24
      $region23: #{_lambda_.48} parent=15 // pred_region
        %p115 = scmp.lt.s32.totalorder %s8, 1
        %s116 = scalar_select %p115, %s8, 1
        %s117 = scalar_lea.vmem %s1, %s116
      $region24: #{_lambda_.48} parent=15 // pred_fallthru
        _
    $region16: #{_lambda_.48} parent=5 // pred_fallthru
      _
    %p118 = scmp.le.s32.totalorder 1, %s8
    %p119 = scmp.lt.s32.totalorder %s8, 3
    %p120 = pnand %p118, %p119
    %p121 = pneg %p120
    // Predicated region
    $region25: #{_lambda_.48} parent=5 // pred_check
      _
    $region26: #{_lambda_.48} parent=5 // pred_check_branch
      %123 = sbr.rel (%p120) target = $region28
    $region27: #{_lambda_.48} parent=5 // pred_region
      %s124 = ssub.s32 %s8, 1
      %p125 = scmp.lt.s32.totalorder %s13, 1
      %s126 = scalar_select %p125, %s13, 1
      %s127 = smul.addr %s126, 8
      %s128 = scalar_lea.vmem %s0, %s127
      %p129 = pneg %p34
      %p130 = pneg %p31
      %p131 = scmp.lt.s32.totalorder %s13, 1
      %s132 = scalar_select %p131, %s13, 1
      %s133 = scalar_lea.vmem %s1, %s132
      %p134 = pneg %p60
      %p135 = pneg %p57
      %p136 = pneg %p86
      %p137 = pneg %p83
      %p138 = scmp.lt.s32.totalorder %s13, 1
      %s139 = scalar_select %p138, %s13, 1
      %s140 = smul.addr %s139, 8
      %s141 = scalar_lea.vmem %s2, %s140
      %p142 = scmp.lt.s32.totalorder %s13, 1
      %s143 = scalar_select %p142, %s13, 1
      %s144 = smul.addr %s143, 8
      %s145 = scalar_lea.vmem %s0, %s144
      %p146 = scmp.lt.s32.totalorder %s13, 1
      %s147 = scalar_select %p146, %s13, 1
      %s148 = scalar_lea.vmem %s1, %s147
      %p149 = scmp.lt.s32.totalorder %s13, 1
      %s150 = scalar_select %p149, %s13, 1
      %s151 = smul.addr %s150, 8
      %s152 = scalar_lea.vmem %s2, %s151
      %v154 = vld [vmem:[%s145] sm:$0xff]
      %v155 = vld [vmem:[%s148] sm:$0x1]
      %v156 = vlaneseq
      %v157 = vshrl.u32 %v156, 7
      %v158 = vlaneseq
      %v159 = vand.u32 %v158, 127
      %vm160 = vcmp.le.s32.totalorder %v159, %v157
      %v161 = vsel %vm160, 0.0, -1e+09
      %v162 = vpack.c.bf16 %v154, %v154
      %164 = vrot.lane.b32.xlu0 %v162, 96
      %v165 = vpop.permute.xlu0 %164
      %vm166 = vcmask 64512
      %v168 = vsel %vm166, %v162, 0
      %v171 = vsel %vm166, %v165, 0
      %173 = vmatprep.subr.bf16.mxu0 0
      %174 = vmatpush1.bf16.xpose.msra.mxu0 %v171
      %175 = vmatprep.subr.bf16.mxu0 0
      %176 = vmatpush1.bf16.xpose.msra.mxu0 0
      %177 = vmatprep.subr.bf16.mxu0 0
      %178 = vmatpush1.bf16.xpose.msra.mxu0 0
      %179 = vmatprep.subr.bf16.mxu0 0
      %180 = vmatpush1.bf16.xpose.msra.mxu0 0
      %181 = vmatprep.subr.bf16.mxu0 0
      %182 = vmatpush1.bf16.xpose.msra.mxu0 0
      %183 = vmatprep.subr.bf16.mxu0 0
      %184 = vmatpush1.bf16.xpose.msra.mxu0 0
      %185 = vmatprep.subr.bf16.mxu0 0
      %186 = vmatpush1.bf16.xpose.msra.mxu0 0
      %187 = vmatprep.subr.bf16.mxu0 0
      %188 = vmatpush1.bf16.xpose.msra.mxu0 0
      %189 = vmatprep.subr.bf16.mxu0 0
      %190 = vmatpush1.bf16.xpose.msra.mxu0 0
      %191 = vmatprep.subr.bf16.mxu0 0
      %192 = vmatpush1.bf16.xpose.msra.mxu0 0
      %193 = vmatprep.subr.bf16.mxu0 0
      %194 = vmatpush1.bf16.xpose.msra.mxu0 0
      %195 = vmatprep.subr.bf16.mxu0 0
      %196 = vmatpush1.bf16.xpose.msra.mxu0 0
      %197 = vmatprep.subr.bf16.mxu0 0
      %198 = vmatpush1.bf16.xpose.msra.mxu0 0
      %199 = vmatprep.subr.bf16.mxu0 0
      %200 = vmatpush1.bf16.xpose.msra.mxu0 0
      %201 = vmatprep.subr.bf16.mxu0 0
      %202 = vmatpush1.bf16.xpose.msra.mxu0 0
      %203 = vmatprep.subr.bf16.mxu0 0
      %204 = vmatpush1.bf16.xpose.msra.mxu0 0
      %205 = vmatprep.mubr.bf16.mxu0 0
      %206 = vmatmul.mubr.bf16.gmra.mrb[0].mxu0 %v168
      %v207 = vpop.f32.mrb[0].mxu0
      %v208 = vadd.f32 0.0, %v207
      %v209 = vpop.f32.mrb[0].mxu0
      %v210 = vpop.f32.mrb[0].mxu0
      %v211 = vpop.f32.mrb[0].mxu0
      %212 = vdwg.mxu0
      %v213 = vmul.f32 %v208, 0.35355338
      %v215 = vlaneseq
      %v216 = vshrl.u32 %v215, 7
      %v217 = vsub.s32 0, %v216
      %v218 = vrot.slane %v155, %v217
      %v220 = vadd.f32 %v213, %v218
      %v221 = vadd.f32 %v220, %v161
      %v222 = vsel %vm166, %v221, -inf
      %223 = vmax.xlane.f32.xlu0 %v222
      %v224 = vpop.xlane.xlu0 %223
      %v225 = vsub.f32 %v221, %v224
      %v226 = vmul.f32 %v225, 1.442695
      %v227 = vpow.pop %v226
      %v228 = vsel %vm166, %v227, 0.0
      %229 = vadd.xlane.f32.xlu0 %v228
      %v230 = vpop.xlane.xlu0 %229
      %v231 = vrcp.pop %v230
      %v232 = vmul.f32 %v227, %v231
      %v233 = vpack.c.bf16 %v232, %v232
      %234 = vrot.lane.b32.xlu0 %v162, 64
      %v235 = vpop.permute.xlu0 %234
      %v237 = vsel %vm166, %v233, 0
      %vm239 = vcmask 1043456
      %v241 = vsel %vm239, %v235, 0
      %243 = vmatprep.subr.bf16.mxu0 0
      %244 = vmatpush1.bf16.msra.mxu0 %v241
      %245 = vmatprep.subr.bf16.mxu0 0
      %246 = vmatpush1.bf16.msra.mxu0 0
      %247 = vmatprep.subr.bf16.mxu0 0
      %248 = vmatpush1.bf16.msra.mxu0 0
      %249 = vmatprep.subr.bf16.mxu0 0
      %250 = vmatpush1.bf16.msra.mxu0 0
      %251 = vmatprep.subr.bf16.mxu0 0
      %252 = vmatpush1.bf16.msra.mxu0 0
      %253 = vmatprep.subr.bf16.mxu0 0
      %254 = vmatpush1.bf16.msra.mxu0 0
      %255 = vmatprep.subr.bf16.mxu0 0
      %256 = vmatpush1.bf16.msra.mxu0 0
      %257 = vmatprep.subr.bf16.mxu0 0
      %258 = vmatpush1.bf16.msra.mxu0 0
      %259 = vmatprep.subr.bf16.mxu0 0
      %260 = vmatpush1.bf16.msra.mxu0 0
      %261 = vmatprep.subr.bf16.mxu0 0
      %262 = vmatpush1.bf16.msra.mxu0 0
      %263 = vmatprep.subr.bf16.mxu0 0
      %264 = vmatpush1.bf16.msra.mxu0 0
      %265 = vmatprep.subr.bf16.mxu0 0
      %266 = vmatpush1.bf16.msra.mxu0 0
      %267 = vmatprep.subr.bf16.mxu0 0
      %268 = vmatpush1.bf16.msra.mxu0 0
      %269 = vmatprep.subr.bf16.mxu0 0
      %270 = vmatpush1.bf16.msra.mxu0 0
      %271 = vmatprep.subr.bf16.mxu0 0
      %272 = vmatpush1.bf16.msra.mxu0 0
      %273 = vmatprep.subr.bf16.mxu0 0
      %274 = vmatpush1.bf16.msra.mxu0 0
      %275 = vmatprep.mubr.bf16.mxu0 0
      %276 = vmatmul.mubr.bf16.gmra.mrb[0].mxu0 %v237
      %v277 = vpop.f32.mrb[0].mxu0
      %v278 = vadd.f32 0.0, %v277
      %v279 = vpop.f32.mrb[0].mxu0
      %v280 = vpop.f32.mrb[0].mxu0
      %v281 = vpop.f32.mrb[0].mxu0
      %282 = vdwg.mxu0
      %283 = vrot.lane.b32.xlu0 %v162, 120
      %v284 = vpop.permute.xlu0 %283
      %285 = vrot.lane.b32.xlu0 %v162, 88
      %v286 = vpop.permute.xlu0 %285
      %v288 = vsel %vm166, %v284, 0
      %v291 = vsel %vm166, %v286, 0
      %293 = vmatprep.subr.bf16.mxu0 0
      %294 = vmatpush1.bf16.xpose.msra.mxu0 %v291
      %295 = vmatprep.subr.bf16.mxu0 0
      %296 = vmatpush1.bf16.xpose.msra.mxu0 0
      %297 = vmatprep.subr.bf16.mxu0 0
      %298 = vmatpush1.bf16.xpose.msra.mxu0 0
      %299 = vmatprep.subr.bf16.mxu0 0
      %300 = vmatpush1.bf16.xpose.msra.mxu0 0
      %301 = vmatprep.subr.bf16.mxu0 0
      %302 = vmatpush1.bf16.xpose.msra.mxu0 0
      %303 = vmatprep.subr.bf16.mxu0 0
      %304 = vmatpush1.bf16.xpose.msra.mxu0 0
      %305 = vmatprep.subr.bf16.mxu0 0
      %306 = vmatpush1.bf16.xpose.msra.mxu0 0
      %307 = vmatprep.subr.bf16.mxu0 0
      %308 = vmatpush1.bf16.xpose.msra.mxu0 0
      %309 = vmatprep.subr.bf16.mxu0 0
      %310 = vmatpush1.bf16.xpose.msra.mxu0 0
      %311 = vmatprep.subr.bf16.mxu0 0
      %312 = vmatpush1.bf16.xpose.msra.mxu0 0
      %313 = vmatprep.subr.bf16.mxu0 0
      %314 = vmatpush1.bf16.xpose.msra.mxu0 0
      %315 = vmatprep.subr.bf16.mxu0 0
      %316 = vmatpush1.bf16.xpose.msra.mxu0 0
      %317 = vmatprep.subr.bf16.mxu0 0
      %318 = vmatpush1.bf16.xpose.msra.mxu0 0
      %319 = vmatprep.subr.bf16.mxu0 0
      %320 = vmatpush1.bf16.xpose.msra.mxu0 0
      %321 = vmatprep.subr.bf16.mxu0 0
      %322 = vmatpush1.bf16.xpose.msra.mxu0 0
      %323 = vmatprep.subr.bf16.mxu0 0
      %324 = vmatpush1.bf16.xpose.msra.mxu0 0
      %325 = vmatprep.mubr.bf16.mxu0 0
      %326 = vmatmul.mubr.bf16.gmra.mrb[0].mxu0 %v288
      %v327 = vpop.f32.mrb[0].mxu0
      %v328 = vadd.f32 0.0, %v327
      %v329 = vpop.f32.mrb[0].mxu0
      %v330 = vpop.f32.mrb[0].mxu0
      %v331 = vpop.f32.mrb[0].mxu0
      %332 = vdwg.mxu0
      %v333 = vmul.f32 %v328, 0.35355338
      %v334 = vadd.f32 %v333, %v218
      %v335 = vadd.f32 %v334, %v161
      %v336 = vsel %vm166, %v335, -inf
      %337 = vmax.xlane.f32.xlu0 %v336
      %v338 = vpop.xlane.xlu0 %337
      %v339 = vsub.f32 %v335, %v338
      %v340 = vmul.f32 %v339, 1.442695
      %v341 = vpow.pop %v340
      %v342 = vsel %vm166, %v341, 0.0
      %343 = vadd.xlane.f32.xlu0 %v342
      %v344 = vpop.xlane.xlu0 %343
      %v345 = vrcp.pop %v344
      %v346 = vmul.f32 %v341, %v345
      %v347 = vpack.c.bf16 %v346, %v346
      %348 = vrot.lane.b32.xlu0 %v162, 56
      %v349 = vpop.permute.xlu0 %348
      %v351 = vsel %vm166, %v347, 0
      %v354 = vsel %vm239, %v349, 0
      %356 = vmatprep.subr.bf16.mxu0 0
      %357 = vmatpush1.bf16.msra.mxu0 %v354
      %358 = vmatprep.subr.bf16.mxu0 0
      %359 = vmatpush1.bf16.msra.mxu0 0
      %360 = vmatprep.subr.bf16.mxu0 0
      %361 = vmatpush1.bf16.msra.mxu0 0
      %362 = vmatprep.subr.bf16.mxu0 0
      %363 = vmatpush1.bf16.msra.mxu0 0
      %364 = vmatprep.subr.bf16.mxu0 0
      %365 = vmatpush1.bf16.msra.mxu0 0
      %366 = vmatprep.subr.bf16.mxu0 0
      %367 = vmatpush1.bf16.msra.mxu0 0
      %368 = vmatprep.subr.bf16.mxu0 0
      %369 = vmatpush1.bf16.msra.mxu0 0
      %370 = vmatprep.subr.bf16.mxu0 0
      %371 = vmatpush1.bf16.msra.mxu0 0
      %372 = vmatprep.subr.bf16.mxu0 0
      %373 = vmatpush1.bf16.msra.mxu0 0
      %374 = vmatprep.subr.bf16.mxu0 0
      %375 = vmatpush1.bf16.msra.mxu0 0
      %376 = vmatprep.subr.bf16.mxu0 0
      %377 = vmatpush1.bf16.msra.mxu0 0
      %378 = vmatprep.subr.bf16.mxu0 0
      %379 = vmatpush1.bf16.msra.mxu0 0
      %380 = vmatprep.subr.bf16.mxu0 0
      %381 = vmatpush1.bf16.msra.mxu0 0
      %382 = vmatprep.subr.bf16.mxu0 0
      %383 = vmatpush1.bf16.msra.mxu0 0
      %384 = vmatprep.subr.bf16.mxu0 0
      %385 = vmatpush1.bf16.msra.mxu0 0
      %386 = vmatprep.subr.bf16.mxu0 0
      %387 = vmatpush1.bf16.msra.mxu0 0
      %388 = vmatprep.mubr.bf16.mxu0 0
      %389 = vmatmul.mubr.bf16.gmra.mrb[0].mxu0 %v351
      %v390 = vpop.f32.mrb[0].mxu0
      %v391 = vadd.f32 0.0, %v390
      %v392 = vpop.f32.mrb[0].mxu0
      %v393 = vpop.f32.mrb[0].mxu0
      %v394 = vpop.f32.mrb[0].mxu0
      %395 = vdwg.mxu0
      %396 = vrot.lane.b32.xlu0 %v162, 112
      %v397 = vpop.permute.xlu0 %396
      %398 = vrot.lane.b32.xlu0 %v162, 80
      %v399 = vpop.permute.xlu0 %398
      %v401 = vsel %vm166, %v397, 0
      %v404 = vsel %vm166, %v399, 0
      %406 = vmatprep.subr.bf16.mxu0 0
      %407 = vmatpush1.bf16.xpose.msra.mxu0 %v404
      %408 = vmatprep.subr.bf16.mxu0 0
      %409 = vmatpush1.bf16.xpose.msra.mxu0 0
      %410 = vmatprep.subr.bf16.mxu0 0
      %411 = vmatpush1.bf16.xpose.msra.mxu0 0
      %412 = vmatprep.subr.bf16.mxu0 0
      %413 = vmatpush1.bf16.xpose.msra.mxu0 0
      %414 = vmatprep.subr.bf16.mxu0 0
      %415 = vmatpush1.bf16.xpose.msra.mxu0 0
      %416 = vmatprep.subr.bf16.mxu0 0
      %417 = vmatpush1.bf16.xpose.msra.mxu0 0
      %418 = vmatprep.subr.bf16.mxu0 0
      %419 = vmatpush1.bf16.xpose.msra.mxu0 0
      %420 = vmatprep.subr.bf16.mxu0 0
      %421 = vmatpush1.bf16.xpose.msra.mxu0 0
      %422 = vmatprep.subr.bf16.mxu0 0
      %423 = vmatpush1.bf16.xpose.msra.mxu0 0
      %424 = vmatprep.subr.bf16.mxu0 0
      %425 = vmatpush1.bf16.xpose.msra.mxu0 0
      %426 = vmatprep.subr.bf16.mxu0 0
      %427 = vmatpush1.bf16.xpose.msra.mxu0 0
      %428 = vmatprep.subr.bf16.mxu0 0
      %429 = vmatpush1.bf16.xpose.msra.mxu0 0
      %430 = vmatprep.subr.bf16.mxu0 0
      %431 = vmatpush1.bf16.xpose.msra.mxu0 0
      %432 = vmatprep.subr.bf16.mxu0 0
      %433 = vmatpush1.bf16.xpose.msra.mxu0 0
      %434 = vmatprep.subr.bf16.mxu0 0
      %435 = vmatpush1.bf16.xpose.msra.mxu0 0
      %436 = vmatprep.subr.bf16.mxu0 0
      %437 = vmatpush1.bf16.xpose.msra.mxu0 0
      %438 = vmatprep.mubr.bf16.mxu0 0
      %439 = vmatmul.mubr.bf16.gmra.mrb[0].mxu0 %v401
      %v440 = vpop.f32.mrb[0].mxu0
      %v441 = vadd.f32 0.0, %v440
      %v442 = vpop.f32.mrb[0].mxu0
      %v443 = vpop.f32.mrb[0].mxu0
      %v444 = vpop.f32.mrb[0].mxu0
      %445 = vdwg.mxu0
      %v446 = vmul.f32 %v441, 0.35355338
      %v447 = vadd.f32 %v446, %v218
      %v448 = vadd.f32 %v447, %v161
      %v449 = vsel %vm166, %v448, -inf
      %450 = vmax.xlane.f32.xlu0 %v449
      %v451 = vpop.xlane.xlu0 %450
      %v452 = vsub.f32 %v448, %v451
      %v453 = vmul.f32 %v452, 1.442695
      %v454 = vpow.pop %v453
      %v455 = vsel %vm166, %v454, 0.0
      %456 = vadd.xlane.f32.xlu0 %v455
      %v457 = vpop.xlane.xlu0 %456
      %v458 = vrcp.pop %v457
      %v459 = vmul.f32 %v454, %v458
      %v460 = vpack.c.bf16 %v459, %v459
      %461 = vrot.lane.b32.xlu0 %v162, 48
      %v462 = vpop.permute.xlu0 %461
      %v464 = vsel %vm166, %v460, 0
      %v467 = vsel %vm239, %v462, 0
      %469 = vmatprep.subr.bf16.mxu0 0
      %470 = vmatpush1.bf16.msra.mxu0 %v467
      %471 = vmatprep.subr.bf16.mxu0 0
      %472 = vmatpush1.bf16.msra.mxu0 0
      %473 = vmatprep.subr.bf16.mxu0 0
      %474 = vmatpush1.bf16.msra.mxu0 0
      %475 = vmatprep.subr.bf16.mxu0 0
      %476 = vmatpush1.bf16.msra.mxu0 0
      %477 = vmatprep.subr.bf16.mxu0 0
      %478 = vmatpush1.bf16.msra.mxu0 0
      %479 = vmatprep.subr.bf16.mxu0 0
      %480 = vmatpush1.bf16.msra.mxu0 0
      %481 = vmatprep.subr.bf16.mxu0 0
      %482 = vmatpush1.bf16.msra.mxu0 0
      %483 = vmatprep.subr.bf16.mxu0 0
      %484 = vmatpush1.bf16.msra.mxu0 0
      %485 = vmatprep.subr.bf16.mxu0 0
      %486 = vmatpush1.bf16.msra.mxu0 0
      %487 = vmatprep.subr.bf16.mxu0 0
      %488 = vmatpush1.bf16.msra.mxu0 0
      %489 = vmatprep.subr.bf16.mxu0 0
      %490 = vmatpush1.bf16.msra.mxu0 0
      %491 = vmatprep.subr.bf16.mxu0 0
      %492 = vmatpush1.bf16.msra.mxu0 0
      %493 = vmatprep.subr.bf16.mxu0 0
      %494 = vmatpush1.bf16.msra.mxu0 0
      %495 = vmatprep.subr.bf16.mxu0 0
      %496 = vmatpush1.bf16.msra.mxu0 0
      %497 = vmatprep.subr.bf16.mxu0 0
      %498 = vmatpush1.bf16.msra.mxu0 0
      %499 = vmatprep.subr.bf16.mxu0 0
      %500 = vmatpush1.bf16.msra.mxu0 0
      %501 = vmatprep.mubr.bf16.mxu0 0
      %502 = vmatmul.mubr.bf16.gmra.mrb[0].mxu0 %v464
      %v503 = vpop.f32.mrb[0].mxu0
      %v504 = vadd.f32 0.0, %v503
      %v505 = vpop.f32.mrb[0].mxu0
      %v506 = vpop.f32.mrb[0].mxu0
      %v507 = vpop.f32.mrb[0].mxu0
      %508 = vdwg.mxu0
      %509 = vrot.lane.b32.xlu0 %v162, 104
      %v510 = vpop.permute.xlu0 %509
      %511 = vrot.lane.b32.xlu0 %v162, 72
      %v512 = vpop.permute.xlu0 %511
      %v514 = vsel %vm166, %v510, 0
      %v517 = vsel %vm166, %v512, 0
      %519 = vmatprep.subr.bf16.mxu0 0
      %520 = vmatpush1.bf16.xpose.msra.mxu0 %v517
      %521 = vmatprep.subr.bf16.mxu0 0
      %522 = vmatpush1.bf16.xpose.msra.mxu0 0
      %523 = vmatprep.subr.bf16.mxu0 0
      %524 = vmatpush1.bf16.xpose.msra.mxu0 0
      %525 = vmatprep.subr.bf16.mxu0 0
      %526 = vmatpush1.bf16.xpose.msra.mxu0 0
      %527 = vmatprep.subr.bf16.mxu0 0
      %528 = vmatpush1.bf16.xpose.msra.mxu0 0
      %529 = vmatprep.subr.bf16.mxu0 0
      %530 = vmatpush1.bf16.xpose.msra.mxu0 0
      %531 = vmatprep.subr.bf16.mxu0 0
      %532 = vmatpush1.bf16.xpose.msra.mxu0 0
      %533 = vmatprep.subr.bf16.mxu0 0
      %534 = vmatpush1.bf16.xpose.msra.mxu0 0
      %535 = vmatprep.subr.bf16.mxu0 0
      %536 = vmatpush1.bf16.xpose.msra.mxu0 0
      %537 = vmatprep.subr.bf16.mxu0 0
      %538 = vmatpush1.bf16.xpose.msra.mxu0 0
      %539 = vmatprep.subr.bf16.mxu0 0
      %540 = vmatpush1.bf16.xpose.msra.mxu0 0
      %541 = vmatprep.subr.bf16.mxu0 0
      %542 = vmatpush1.bf16.xpose.msra.mxu0 0
      %543 = vmatprep.subr.bf16.mxu0 0
      %544 = vmatpush1.bf16.xpose.msra.mxu0 0
      %545 = vmatprep.subr.bf16.mxu0 0
      %546 = vmatpush1.bf16.xpose.msra.mxu0 0
      %547 = vmatprep.subr.bf16.mxu0 0
      %548 = vmatpush1.bf16.xpose.msra.mxu0 0
      %549 = vmatprep.subr.bf16.mxu0 0
      %550 = vmatpush1.bf16.xpose.msra.mxu0 0
      %551 = vmatprep.mubr.bf16.mxu0 0
      %552 = vmatmul.mubr.bf16.gmra.mrb[0].mxu0 %v514
      %v553 = vpop.f32.mrb[0].mxu0
      %v554 = vadd.f32 0.0, %v553
      %v555 = vpop.f32.mrb[0].mxu0
      %v556 = vpop.f32.mrb[0].mxu0
      %v557 = vpop.f32.mrb[0].mxu0
      %558 = vdwg.mxu0
      %v559 = vmul.f32 %v554, 0.35355338
      %v560 = vadd.f32 %v559, %v218
      %v561 = vadd.f32 %v560, %v161
      %v562 = vsel %vm166, %v561, -inf
      %563 = vmax.xlane.f32.xlu0 %v562
      %v564 = vpop.xlane.xlu0 %563
      %v565 = vsub.f32 %v561, %v564
      %v566 = vmul.f32 %v565, 1.442695
      %v567 = vpow.pop %v566
      %v568 = vsel %vm166, %v567, 0.0
      %569 = vadd.xlane.f32.xlu0 %v568
      %v570 = vpop.xlane.xlu0 %569
      %v571 = vrcp.pop %v570
      %v572 = vmul.f32 %v567, %v571
      %v573 = vpack.c.bf16 %v572, %v572
      %574 = vrot.lane.b32.xlu0 %v162, 40
      %v575 = vpop.permute.xlu0 %574
      %v577 = vsel %vm166, %v573, 0
      %v580 = vsel %vm239, %v575, 0
      %582 = vmatprep.subr.bf16.mxu0 0
      %583 = vmatpush1.bf16.msra.mxu0 %v580
      %584 = vmatprep.subr.bf16.mxu0 0
      %585 = vmatpush1.bf16.msra.mxu0 0
      %586 = vmatprep.subr.bf16.mxu0 0
      %587 = vmatpush1.bf16.msra.mxu0 0
      %588 = vmatprep.subr.bf16.mxu0 0
      %589 = vmatpush1.bf16.msra.mxu0 0
      %590 = vmatprep.subr.bf16.mxu0 0
      %591 = vmatpush1.bf16.msra.mxu0 0
      %592 = vmatprep.subr.bf16.mxu0 0
      %593 = vmatpush1.bf16.msra.mxu0 0
      %594 = vmatprep.subr.bf16.mxu0 0
      %595 = vmatpush1.bf16.msra.mxu0 0
      %596 = vmatprep.subr.bf16.mxu0 0
      %597 = vmatpush1.bf16.msra.mxu0 0
      %598 = vmatprep.subr.bf16.mxu0 0
      %599 = vmatpush1.bf16.msra.mxu0 0
      %600 = vmatprep.subr.bf16.mxu0 0
      %601 = vmatpush1.bf16.msra.mxu0 0
      %602 = vmatprep.subr.bf16.mxu0 0
      %603 = vmatpush1.bf16.msra.mxu0 0
      %604 = vmatprep.subr.bf16.mxu0 0
      %605 = vmatpush1.bf16.msra.mxu0 0
      %606 = vmatprep.subr.bf16.mxu0 0
      %607 = vmatpush1.bf16.msra.mxu0 0
      %608 = vmatprep.subr.bf16.mxu0 0
      %609 = vmatpush1.bf16.msra.mxu0 0
      %610 = vmatprep.subr.bf16.mxu0 0
      %611 = vmatpush1.bf16.msra.mxu0 0
      %612 = vmatprep.subr.bf16.mxu0 0
      %613 = vmatpush1.bf16.msra.mxu0 0
      %614 = vmatprep.mubr.bf16.mxu0 0
      %615 = vmatmul.mubr.bf16.gmra.mrb[0].mxu0 %v577
      %v616 = vpop.f32.mrb[0].mxu0
      %v617 = vadd.f32 0.0, %v616
      %v618 = vpop.f32.mrb[0].mxu0
      %v619 = vpop.f32.mrb[0].mxu0
      %v620 = vpop.f32.mrb[0].mxu0
      %621 = vdwg.mxu0
      %623 = vrot.lane.b32.xlu0 %v391, 8
      %v624 = vpop.permute.xlu0 %623
      %627 = vrot.lane.b32.xlu0 %v504, 16
      %v628 = vpop.permute.xlu0 %627
      %631 = vrot.lane.b32.xlu0 %v617, 24
      %v632 = vpop.permute.xlu0 %631
      %v634 = vsel %vm166, %v278, %v624
      %vm635 = vcmask 130048
      %v636 = vsel %vm635, %v634, %v628
      %vm637 = vcmask 195584
      %v638 = vsel %vm637, %v636, %v632
      %vm639 = vcmask 261120
      %640 = vst.msk [vmem:[%s152] sm:$0xff] %vm639, %v638
      %p641 = scmp.lt.s32.totalorder %s13, 1
      %s642 = scalar_select %p641, %s13, 1
      %s643 = smul.addr %s642, 8
      %s644 = scalar_lea.vmem %s2, %s643
      // Predicated region
      $region29: #{_lambda_.48} parent=27 // pred_check
        %p645 = pneg %p83
      $region30: #{_lambda_.48} parent=27 // pred_check_branch
        %647 = sbr.rel (%p645) target = $region32
      $region31: #{_lambda_.48} parent=27 // pred_region
        _
      $region32: #{_lambda_.48} parent=27 // pred_fallthru
        _
    $region28: #{_lambda_.48} parent=5 // pred_fallthru
      _
    %p648 = scmp.le.s32.totalorder 2, %s8
    // Predicated region
    $region33: #{_lambda_.48} parent=5 // pred_check
      %p649 = pneg %p648
    $region34: #{_lambda_.48} parent=5 // pred_check_branch
      %651 = sbr.rel (%p649) target = $region36
    $region35: #{_lambda_.48} parent=5 // pred_region
      %s652 = ssub.s32 %s8, 2
      // Predicated region
      $region37: #{_lambda_.48} parent=35 // pred_check
        %p653 = pneg %p89
      $region38: #{_lambda_.48} parent=35 // pred_check_branch
        %655 = sbr.rel (%p653) target = $region40
      $region39: #{_lambda_.48} parent=35 // pred_region
        %p656 = scmp.lt.s32.totalorder %s14, 1
        %s657 = scalar_select %p656, %s14, 1
        %s658 = smul.addr %s657, 8
        %s659 = scalar_lea.vmem %s2, %s658
      $region40: #{_lambda_.48} parent=35 // pred_fallthru
        _
    $region36: #{_lambda_.48} parent=5 // pred_fallthru
      _
  $region6: #{_lambda_.48} parent=0 // loop_footer
    %s12 = sadd.s32 1, %s8
  $region7: #{_lambda_.48} parent=0 // loop_footer_branch
    %7 = sbr.rel target = $region3
  $region8: #{_lambda_.48} parent=0 // loop_exit
    _

</llo_original>
